<compile_context>
chip_gen: v7x
topology: tpu7x:2x2x1
jax: 0.10.0
libtpu: 0.0.40
codegen_flags: <defaults>
</compile_context>

<pallas_src>
import functools
import math

import jax
import jax.numpy as jnp
from jax.experimental import pallas as pl
from jax.experimental.pallas import tpu as pltpu


def _spatial_attn_kernel(x_ref, wqk_ref, bqk_ref, wvo_ref, bo_ref, o_ref,
                         *, nheads, head_dim, n, tb, d_model):
    """One grid step: tb batch elements. Fused in-proj -> per-head attention -> folded out-proj."""
    E, D = d_model, head_dim
    rows = tb * n

    x = x_ref[...]                                                     # (rows, f)

    # Fused lin_in + {Q (pre-scaled by 1/sqrt(D)), K}: single (rows, f) @ (f, 2E) matmul.
    qk = jnp.dot(x, wqk_ref[...], preferred_element_type=jnp.float32) + bqk_ref[...]
    qk3 = qk.reshape(tb, n, 2 * E)          # leading-dim split only; lanes untouched

    # Fused lin_in + V + out-projection: single (rows, f) @ (f, nheads*E) matmul.
    # Its bias is folded into bo_ref at trace time (softmax rows sum to 1).
    vo = jnp.dot(x, wvo_ref[...], preferred_element_type=jnp.float32)
    vo3 = vo.reshape(tb, n, nheads * E)

    y = jnp.zeros((tb, n, E), jnp.float32)
    for hd in range(nheads):                # static unroll over heads
        lo = hd * D
        qh = qk3[:, :, lo:lo + D]                                       # (tb, n, D), pre-scaled
        kh = qk3[:, :, E + lo:E + lo + D]                               # (tb, n, D)
        s = jnp.einsum('bqd,bkd->bqk', qh, kh,
                       preferred_element_type=jnp.float32)              # (tb, n, n)
        s = s - jnp.max(s, axis=-1, keepdims=True)
        p = jnp.exp(s)
        denom = jnp.sum(p, axis=-1, keepdims=True)
        r = pl.reciprocal(denom, approx=True)       # EUP vrcp (own bundle slot)
        r = r * (2.0 - denom * r)                   # one Newton step: f32-exact, negligible cost
        p = p * r
        # Wo is folded into the V columns: this einsum accumulates the full-E-lane
        # out-projection directly (no per-head K=8 matmul, no wo row slice, no reshape).
        y = y + jnp.einsum('bqk,bke->bqe', p, vo3[:, :, hd * E:(hd + 1) * E],
                           preferred_element_type=jnp.float32)          # (tb, n, E)

    o_ref[...] = (y.reshape(rows, E) + bo_ref[...]).astype(o_ref.dtype)


def _pick_tiling(B, n, *, target_rows=2048, min_grid=2):
    """Choose (tb, grid, B_pad).

    Guarantees: rows = tb*n is a multiple of 8 (sublane rule for the (rows, f) block);
    B is padded up to grid*tb (zero batch elements) instead of degrading to tb=1;
    the grid keeps >= min_grid steps when B allows it (DMA overlap; v7x has 2 TCs).
    """
    tb_unit = 8 // math.gcd(n, 8)                      # smallest tb with tb*n % 8 == 0
    b_ceil = -(-B // tb_unit) * tb_unit                # B rounded up to the sublane unit
    tb = max(tb_unit, min((target_rows // n) // tb_unit * tb_unit, b_ceil))
    if b_ceil >= min_grid * tb_unit:                   # keep >= min_grid steps when possible
        tb = min(tb, max(tb_unit, (b_ceil // min_grid) // tb_unit * tb_unit))
    grid = -(-B // tb)                                 # cdiv; remainder handled by zero-padding
    return tb, grid, grid * tb


def spatial_attention(x, params, *, nheads, target_rows=2048):
    """x: (b, s, n, f) float32. Returns (b, s, n, d_model)."""
    b, s, n, f = x.shape
    E = params["w_in"].shape[1]
    assert E % nheads == 0
    D = E // nheads
    B = b * s
    scale = 1.0 / math.sqrt(D)

    # ---- trace-time weight fusion (zero kernel cost) -----------------------------------
    w_in, b_in = params["w_in"], params["b_in"]
    # lin_in + {Q (pre-scaled), K} -> one (f, 2E) weight / (1, 2E) bias.
    wqk = jnp.concatenate([params["wq"] * scale, params["wk"]], axis=1)          # (E, 2E)
    bqk = jnp.concatenate([params["bq"] * scale, params["bk"]], axis=1)          # (1, 2E)
    wqk_f = w_in @ wqk                                                           # (f, 2E)
    bqk_f = b_in @ wqk + bqk                                                     # (1, 2E)
    # lin_in + V + out-projection folded per head -> one (f, nheads*E) weight.
    wv_f = w_in @ params["wv"]                                                   # (f, E)
    wo = params["wo"]
    wvo_f = jnp.concatenate(
        [wv_f[:, h * D:(h + 1) * D] @ wo[h * D:(h + 1) * D, :] for h in range(nheads)],
        axis=1)                                                                  # (f, nheads*E)
    # Softmax rows sum to 1 -> the lin_in/V biases collapse into a single output bias.
    bo_f = params["bo"] + (b_in @ params["wv"] + params["bv"]) @ wo              # (1, E)

    # ---- tiling: tb batch elements per grid step ----------------------------------------
    tb, grid, B_pad = _pick_tiling(B, n, target_rows=target_rows)
    rows = tb * n

    x2 = x.reshape(B, n, f)
    if B_pad != B:                                   # zero-pad whole batch elements
        x2 = jnp.concatenate([x2, jnp.zeros((B_pad - B, n, f), x.dtype)], axis=0)
    x2 = x2.reshape(B_pad * n, f)                    # row-major, identical layout

    full = lambda a: pl.BlockSpec(a.shape, lambda i: (0,) * a.ndim)
    kernel = functools.partial(_spatial_attn_kernel, nheads=nheads, head_dim=D,
                               n=n, tb=tb, d_model=E)

    out = pl.pallas_call(
        kernel,
        out_shape=jax.ShapeDtypeStruct((B_pad * n, E), jnp.float32),
        grid_spec=pltpu.PrefetchScalarGridSpec(
            num_scalar_prefetch=0,
            grid=(grid,),
            in_specs=[
                pl.BlockSpec((rows, f), lambda i: (i, 0)),   # tb*n rows of x per step
                full(wqk_f), full(bqk_f),                    # weights resident (const index)
                full(wvo_f), full(bo_f),
            ],
            out_specs=pl.BlockSpec((rows, E), lambda i: (i, 0)),
        ),
        compiler_params=pltpu.CompilerParams(dimension_semantics=("parallel",)),
    )(x2, wqk_f, bqk_f, wvo_f, bo_f)

    out = out[:B * n]                                # drop padded batch elements
    return out.reshape(b, s, n, E)


def _reference(x, params, *, nheads):
    """Pure-JAX reference mirroring PyTorch MultiheadAttention (dropout=0, no mask)."""
    b, s, n, f = x.shape
    E = params["w_in"].shape[1]
    D = E // nheads
    xb = x.reshape(b * s, n, f)
    h = xb @ params["w_in"] + params["b_in"][0]
    q = h @ params["wq"] + params["bq"][0]
    k = h @ params["wk"] + params["bk"][0]
    v = h @ params["wv"] + params["bv"][0]
    q = q.reshape(-1, n, nheads, D).transpose(0, 2, 1, 3) / math.sqrt(D)
    k = k.reshape(-1, n, nheads, D).transpose(0, 2, 1, 3)
    v = v.reshape(-1, n, nheads, D).transpose(0, 2, 1, 3)
    scores = jnp.einsum("bhqd,bhkd->bhqk", q, k)
    p = jax.nn.softmax(scores, axis=-1)
    o = jnp.einsum("bhqk,bhkd->bhqd", p, v).transpose(0, 2, 1, 3).reshape(-1, n, E)
    y = o @ params["wo"] + params["bo"][0]
    return y.reshape(b, s, n, E)


def make_params(key, d_in, d_model):
    """Deterministic synthetic parameters (PyTorch shapes, pre-transposed for matmul use)."""
    ks = jax.random.split(key, 6)
    scale = 0.1
    # nn.Linear(d_in, d_model): weight (d_model, d_in) -> store transposed (d_in, d_model)
    w_in_t = scale * jax.random.normal(ks[0], (d_in, d_model), jnp.float32)
    b_in = scale * jax.random.normal(ks[1], (1, d_model), jnp.float32)
    # nn.MultiheadAttention in_proj_weight (3E, E) -> split & transpose to (E, E) each
    in_proj = scale * jax.random.normal(ks[2], (3 * d_model, d_model), jnp.float32)
    in_bias = scale * jax.random.normal(ks[3], (1, 3 * d_model), jnp.float32)
    wq = in_proj[:d_model].T
    wk = in_proj[d_model:2 * d_model].T
    wv = in_proj[2 * d_model:].T
    bq = in_bias[:, :d_model]
    bk = in_bias[:, d_model:2 * d_model]
    bv = in_bias[:, 2 * d_model:]
    # out_proj: weight (E, E) -> transposed
    wo = scale * jax.random.normal(ks[4], (d_model, d_model), jnp.float32).T
    bo = scale * jax.random.normal(ks[5], (1, d_model), jnp.float32)
    return dict(w_in=w_in_t, b_in=b_in, wq=wq, wk=wk, wv=wv,
                bq=bq, bk=bk, bv=bv, wo=wo, bo=bo)


if __name__ == "__main__":
    key = jax.random.PRNGKey(0)
    kx, kp = jax.random.split(key)

    b, s, n, d_in = 2, 4, 8, 4
    d_model, nheads = 32, 4

    x = jax.random.normal(kx, (b, s, n, d_in), jnp.float32)
    params = make_params(kp, d_in, d_model)

    out = spatial_attention(x, params, nheads=nheads)
    out = jax.block_until_ready(out)

    ref = _reference(x, params, nheads=nheads)
    assert out.shape == (b, s, n, d_model)
    assert jnp.allclose(out, ref, atol=1e-4, rtol=1e-4), "mismatch vs reference"

    print("KERNEL_OK")
</pallas_src>

<mosaic_0001>
module attributes {stable_mosaic.version = 11 : i64} {
  func.func @_spatial_attn_kernel(%arg0: i32, %arg1: memref<32x4xf32, #tpu.memory_space<vmem>>, %arg2: memref<4x64xf32, #tpu.memory_space<vmem>>, %arg3: memref<1x64xf32, #tpu.memory_space<vmem>>, %arg4: memref<4x128xf32, #tpu.memory_space<vmem>>, %arg5: memref<1x32xf32, #tpu.memory_space<vmem>>, %arg6: memref<32x32xf32, #tpu.memory_space<vmem>>) attributes {dimension_semantics = [#tpu.dimension_semantics<parallel>], iteration_bounds = array<i64: 2>, scalar_prefetch = 0 : i64, scratch_operands = 0 : i64, tpu.core_type = #tpu.core_type<tc>, window_params = [{transform_indices = @transform_0, window_bounds = array<i64: 32, 4>}, {pipeline_mode = #tpu.pipeline_mode<synchronous>, transform_indices = @transform_1, window_bounds = array<i64: 4, 64>}, {pipeline_mode = #tpu.pipeline_mode<synchronous>, transform_indices = @transform_2, window_bounds = array<i64: 1, 64>}, {pipeline_mode = #tpu.pipeline_mode<synchronous>, transform_indices = @transform_3, window_bounds = array<i64: 4, 128>}, {pipeline_mode = #tpu.pipeline_mode<synchronous>, transform_indices = @transform_4, window_bounds = array<i64: 1, 32>}, {transform_indices = @transform_5, window_bounds = array<i64: 32, 32>}]} {
    %c0 = arith.constant 0 : index
    %c0_0 = arith.constant 0 : index
    %0 = vector.load %arg1[%c0, %c0_0] : memref<32x4xf32, #tpu.memory_space<vmem>>, vector<32x4xf32>
    %c0_1 = arith.constant 0 : index
    %c0_2 = arith.constant 0 : index
    %1 = vector.load %arg2[%c0_1, %c0_2] : memref<4x64xf32, #tpu.memory_space<vmem>>, vector<4x64xf32>
    %cst = arith.constant dense<0.000000e+00> : vector<32x64xf32>
    %2 = tpu.matmul %0, %1, %cst {dimension_numbers = #tpu.dot_dimension_numbers<[1], [0], [0], [1], [0, 0, 1, 1], [], []>} : vector<32x4xf32>, vector<4x64xf32>, vector<32x64xf32> -> vector<32x64xf32>
    %c0_3 = arith.constant 0 : index
    %c0_4 = arith.constant 0 : index
    %3 = vector.load %arg3[%c0_3, %c0_4] : memref<1x64xf32, #tpu.memory_space<vmem>>, vector<1x64xf32>
    %4 = vector.broadcast %3 : vector<1x64xf32> to vector<32x64xf32>
    %5 = arith.addf %2, %4 : vector<32x64xf32>
    %6 = vector.shape_cast %5 : vector<32x64xf32> to vector<4x8x64xf32>
    %c0_5 = arith.constant 0 : index
    %c0_6 = arith.constant 0 : index
    %7 = vector.load %arg4[%c0_5, %c0_6] : memref<4x128xf32, #tpu.memory_space<vmem>>, vector<4x128xf32>
    %cst_7 = arith.constant dense<0.000000e+00> : vector<32x128xf32>
    %8 = tpu.matmul %0, %7, %cst_7 {dimension_numbers = #tpu.dot_dimension_numbers<[1], [0], [0], [1], [0, 0, 1, 1], [], []>} : vector<32x4xf32>, vector<4x128xf32>, vector<32x128xf32> -> vector<32x128xf32>
    %9 = vector.shape_cast %8 : vector<32x128xf32> to vector<4x8x128xf32>
    %cst_8 = arith.constant 0.000000e+00 : f32
    %10 = vector.broadcast %cst_8 : f32 to vector<4x8x32xf32>
    %11 = vector.extract_strided_slice %6 {offsets = [0, 0, 0], sizes = [4, 8, 8], strides = [1, 1, 1]} : vector<4x8x64xf32> to vector<4x8x8xf32>
    %12 = vector.extract_strided_slice %6 {offsets = [0, 0, 32], sizes = [4, 8, 8], strides = [1, 1, 1]} : vector<4x8x64xf32> to vector<4x8x8xf32>
    "tpu.trace_start"() <{level = 10 : i32, message = "bqd,bkd->bqk"}> : () -> ()
    %cst_9 = arith.constant dense<0.000000e+00> : vector<4x8x8xf32>
    %13 = tpu.matmul %11, %12, %cst_9 {dimension_numbers = #tpu.dot_dimension_numbers<[2], [2], [1], [1], [0, 0, 0, 1, 1, 1], [0], [0]>} : vector<4x8x8xf32>, vector<4x8x8xf32>, vector<4x8x8xf32> -> vector<4x8x8xf32>
    "tpu.trace_stop"() : () -> ()
    %cst_10 = arith.constant dense<0xFF800000> : vector<4x8xf32>
    %14 = vector.multi_reduction <maximumf>, %13, %cst_10 [2] : vector<4x8x8xf32> to vector<4x8xf32>
    %15 = vector.shape_cast %14 : vector<4x8xf32> to vector<4x8x1xf32>
    %16 = vector.broadcast %15 : vector<4x8x1xf32> to vector<4x8x8xf32>
    %17 = arith.subf %13, %16 : vector<4x8x8xf32>
    %18 = math.exp %17 : vector<4x8x8xf32>
    %cst_11 = arith.constant dense<0.000000e+00> : vector<4x8xf32>
    %19 = vector.multi_reduction <add>, %18, %cst_11 [2] : vector<4x8x8xf32> to vector<4x8xf32>
    %20 = vector.shape_cast %19 : vector<4x8xf32> to vector<4x8x1xf32>
    %21 = tpu.reciprocal %20 {approx = true} : vector<4x8x1xf32> -> vector<4x8x1xf32>
    %22 = arith.mulf %20, %21 : vector<4x8x1xf32>
    %cst_12 = arith.constant 2.000000e+00 : f32
    %23 = vector.broadcast %cst_12 : f32 to vector<4x8x1xf32>
    %24 = arith.subf %23, %22 : vector<4x8x1xf32>
    %25 = arith.mulf %21, %24 : vector<4x8x1xf32>
    %26 = vector.broadcast %25 : vector<4x8x1xf32> to vector<4x8x8xf32>
    %27 = arith.mulf %18, %26 : vector<4x8x8xf32>
    %28 = vector.extract_strided_slice %9 {offsets = [0, 0, 0], sizes = [4, 8, 32], strides = [1, 1, 1]} : vector<4x8x128xf32> to vector<4x8x32xf32>
    "tpu.trace_start"() <{level = 10 : i32, message = "bqk,bke->bqe"}> : () -> ()
    %cst_13 = arith.constant dense<0.000000e+00> : vector<4x8x32xf32>
    %29 = tpu.matmul %27, %28, %cst_13 {dimension_numbers = #tpu.dot_dimension_numbers<[2], [1], [1], [2], [0, 0, 0, 1, 1, 2], [0], [0]>} : vector<4x8x8xf32>, vector<4x8x32xf32>, vector<4x8x32xf32> -> vector<4x8x32xf32>
    "tpu.trace_stop"() : () -> ()
    %30 = arith.addf %10, %29 : vector<4x8x32xf32>
    %31 = vector.extract_strided_slice %6 {offsets = [0, 0, 8], sizes = [4, 8, 8], strides = [1, 1, 1]} : vector<4x8x64xf32> to vector<4x8x8xf32>
    %32 = vector.extract_strided_slice %6 {offsets = [0, 0, 40], sizes = [4, 8, 8], strides = [1, 1, 1]} : vector<4x8x64xf32> to vector<4x8x8xf32>
    "tpu.trace_start"() <{level = 10 : i32, message = "bqd,bkd->bqk"}> : () -> ()
    %cst_14 = arith.constant dense<0.000000e+00> : vector<4x8x8xf32>
    %33 = tpu.matmul %31, %32, %cst_14 {dimension_numbers = #tpu.dot_dimension_numbers<[2], [2], [1], [1], [0, 0, 0, 1, 1, 1], [0], [0]>} : vector<4x8x8xf32>, vector<4x8x8xf32>, vector<4x8x8xf32> -> vector<4x8x8xf32>
    "tpu.trace_stop"() : () -> ()
    %cst_15 = arith.constant dense<0xFF800000> : vector<4x8xf32>
    %34 = vector.multi_reduction <maximumf>, %33, %cst_15 [2] : vector<4x8x8xf32> to vector<4x8xf32>
    %35 = vector.shape_cast %34 : vector<4x8xf32> to vector<4x8x1xf32>
    %36 = vector.broadcast %35 : vector<4x8x1xf32> to vector<4x8x8xf32>
    %37 = arith.subf %33, %36 : vector<4x8x8xf32>
    %38 = math.exp %37 : vector<4x8x8xf32>
    %cst_16 = arith.constant dense<0.000000e+00> : vector<4x8xf32>
    %39 = vector.multi_reduction <add>, %38, %cst_16 [2] : vector<4x8x8xf32> to vector<4x8xf32>
    %40 = vector.shape_cast %39 : vector<4x8xf32> to vector<4x8x1xf32>
    %41 = tpu.reciprocal %40 {approx = true} : vector<4x8x1xf32> -> vector<4x8x1xf32>
    %42 = arith.mulf %40, %41 : vector<4x8x1xf32>
    %cst_17 = arith.constant 2.000000e+00 : f32
    %43 = vector.broadcast %cst_17 : f32 to vector<4x8x1xf32>
    %44 = arith.subf %43, %42 : vector<4x8x1xf32>
    %45 = arith.mulf %41, %44 : vector<4x8x1xf32>
    %46 = vector.broadcast %45 : vector<4x8x1xf32> to vector<4x8x8xf32>
    %47 = arith.mulf %38, %46 : vector<4x8x8xf32>
    %48 = vector.extract_strided_slice %9 {offsets = [0, 0, 32], sizes = [4, 8, 32], strides = [1, 1, 1]} : vector<4x8x128xf32> to vector<4x8x32xf32>
    "tpu.trace_start"() <{level = 10 : i32, message = "bqk,bke->bqe"}> : () -> ()
    %cst_18 = arith.constant dense<0.000000e+00> : vector<4x8x32xf32>
    %49 = tpu.matmul %47, %48, %cst_18 {dimension_numbers = #tpu.dot_dimension_numbers<[2], [1], [1], [2], [0, 0, 0, 1, 1, 2], [0], [0]>} : vector<4x8x8xf32>, vector<4x8x32xf32>, vector<4x8x32xf32> -> vector<4x8x32xf32>
    "tpu.trace_stop"() : () -> ()
    %50 = arith.addf %30, %49 : vector<4x8x32xf32>
    %51 = vector.extract_strided_slice %6 {offsets = [0, 0, 16], sizes = [4, 8, 8], strides = [1, 1, 1]} : vector<4x8x64xf32> to vector<4x8x8xf32>
    %52 = vector.extract_strided_slice %6 {offsets = [0, 0, 48], sizes = [4, 8, 8], strides = [1, 1, 1]} : vector<4x8x64xf32> to vector<4x8x8xf32>
    "tpu.trace_start"() <{level = 10 : i32, message = "bqd,bkd->bqk"}> : () -> ()
    %cst_19 = arith.constant dense<0.000000e+00> : vector<4x8x8xf32>
    %53 = tpu.matmul %51, %52, %cst_19 {dimension_numbers = #tpu.dot_dimension_numbers<[2], [2], [1], [1], [0, 0, 0, 1, 1, 1], [0], [0]>} : vector<4x8x8xf32>, vector<4x8x8xf32>, vector<4x8x8xf32> -> vector<4x8x8xf32>
    "tpu.trace_stop"() : () -> ()
    %cst_20 = arith.constant dense<0xFF800000> : vector<4x8xf32>
    %54 = vector.multi_reduction <maximumf>, %53, %cst_20 [2] : vector<4x8x8xf32> to vector<4x8xf32>
    %55 = vector.shape_cast %54 : vector<4x8xf32> to vector<4x8x1xf32>
    %56 = vector.broadcast %55 : vector<4x8x1xf32> to vector<4x8x8xf32>
    %57 = arith.subf %53, %56 : vector<4x8x8xf32>
    %58 = math.exp %57 : vector<4x8x8xf32>
    %cst_21 = arith.constant dense<0.000000e+00> : vector<4x8xf32>
    %59 = vector.multi_reduction <add>, %58, %cst_21 [2] : vector<4x8x8xf32> to vector<4x8xf32>
    %60 = vector.shape_cast %59 : vector<4x8xf32> to vector<4x8x1xf32>
    %61 = tpu.reciprocal %60 {approx = true} : vector<4x8x1xf32> -> vector<4x8x1xf32>
    %62 = arith.mulf %60, %61 : vector<4x8x1xf32>
    %cst_22 = arith.constant 2.000000e+00 : f32
    %63 = vector.broadcast %cst_22 : f32 to vector<4x8x1xf32>
    %64 = arith.subf %63, %62 : vector<4x8x1xf32>
    %65 = arith.mulf %61, %64 : vector<4x8x1xf32>
    %66 = vector.broadcast %65 : vector<4x8x1xf32> to vector<4x8x8xf32>
    %67 = arith.mulf %58, %66 : vector<4x8x8xf32>
    %68 = vector.extract_strided_slice %9 {offsets = [0, 0, 64], sizes = [4, 8, 32], strides = [1, 1, 1]} : vector<4x8x128xf32> to vector<4x8x32xf32>
    "tpu.trace_start"() <{level = 10 : i32, message = "bqk,bke->bqe"}> : () -> ()
    %cst_23 = arith.constant dense<0.000000e+00> : vector<4x8x32xf32>
    %69 = tpu.matmul %67, %68, %cst_23 {dimension_numbers = #tpu.dot_dimension_numbers<[2], [1], [1], [2], [0, 0, 0, 1, 1, 2], [0], [0]>} : vector<4x8x8xf32>, vector<4x8x32xf32>, vector<4x8x32xf32> -> vector<4x8x32xf32>
    "tpu.trace_stop"() : () -> ()
    %70 = arith.addf %50, %69 : vector<4x8x32xf32>
    %71 = vector.extract_strided_slice %6 {offsets = [0, 0, 24], sizes = [4, 8, 8], strides = [1, 1, 1]} : vector<4x8x64xf32> to vector<4x8x8xf32>
    %72 = vector.extract_strided_slice %6 {offsets = [0, 0, 56], sizes = [4, 8, 8], strides = [1, 1, 1]} : vector<4x8x64xf32> to vector<4x8x8xf32>
    "tpu.trace_start"() <{level = 10 : i32, message = "bqd,bkd->bqk"}> : () -> ()
    %cst_24 = arith.constant dense<0.000000e+00> : vector<4x8x8xf32>
    %73 = tpu.matmul %71, %72, %cst_24 {dimension_numbers = #tpu.dot_dimension_numbers<[2], [2], [1], [1], [0, 0, 0, 1, 1, 1], [0], [0]>} : vector<4x8x8xf32>, vector<4x8x8xf32>, vector<4x8x8xf32> -> vector<4x8x8xf32>
    "tpu.trace_stop"() : () -> ()
    %cst_25 = arith.constant dense<0xFF800000> : vector<4x8xf32>
    %74 = vector.multi_reduction <maximumf>, %73, %cst_25 [2] : vector<4x8x8xf32> to vector<4x8xf32>
    %75 = vector.shape_cast %74 : vector<4x8xf32> to vector<4x8x1xf32>
    %76 = vector.broadcast %75 : vector<4x8x1xf32> to vector<4x8x8xf32>
    %77 = arith.subf %73, %76 : vector<4x8x8xf32>
    %78 = math.exp %77 : vector<4x8x8xf32>
    %cst_26 = arith.constant dense<0.000000e+00> : vector<4x8xf32>
    %79 = vector.multi_reduction <add>, %78, %cst_26 [2] : vector<4x8x8xf32> to vector<4x8xf32>
    %80 = vector.shape_cast %79 : vector<4x8xf32> to vector<4x8x1xf32>
    %81 = tpu.reciprocal %80 {approx = true} : vector<4x8x1xf32> -> vector<4x8x1xf32>
    %82 = arith.mulf %80, %81 : vector<4x8x1xf32>
    %cst_27 = arith.constant 2.000000e+00 : f32
    %83 = vector.broadcast %cst_27 : f32 to vector<4x8x1xf32>
    %84 = arith.subf %83, %82 : vector<4x8x1xf32>
    %85 = arith.mulf %81, %84 : vector<4x8x1xf32>
    %86 = vector.broadcast %85 : vector<4x8x1xf32> to vector<4x8x8xf32>
    %87 = arith.mulf %78, %86 : vector<4x8x8xf32>
    %88 = vector.extract_strided_slice %9 {offsets = [0, 0, 96], sizes = [4, 8, 32], strides = [1, 1, 1]} : vector<4x8x128xf32> to vector<4x8x32xf32>
    "tpu.trace_start"() <{level = 10 : i32, message = "bqk,bke->bqe"}> : () -> ()
    %cst_28 = arith.constant dense<0.000000e+00> : vector<4x8x32xf32>
    %89 = tpu.matmul %87, %88, %cst_28 {dimension_numbers = #tpu.dot_dimension_numbers<[2], [1], [1], [2], [0, 0, 0, 1, 1, 2], [0], [0]>} : vector<4x8x8xf32>, vector<4x8x32xf32>, vector<4x8x32xf32> -> vector<4x8x32xf32>
    "tpu.trace_stop"() : () -> ()
    %90 = arith.addf %70, %89 : vector<4x8x32xf32>
    %91 = vector.shape_cast %90 : vector<4x8x32xf32> to vector<32x32xf32>
    %c0_29 = arith.constant 0 : index
    %c0_30 = arith.constant 0 : index
    %92 = vector.load %arg5[%c0_29, %c0_30] : memref<1x32xf32, #tpu.memory_space<vmem>>, vector<1x32xf32>
    %93 = vector.broadcast %92 : vector<1x32xf32> to vector<32x32xf32>
    %94 = arith.addf %91, %93 : vector<32x32xf32>
    %c0_31 = arith.constant 0 : index
    %c0_32 = arith.constant 0 : index
    %95 = vector.load %arg6[%c0_31, %c0_32] : memref<32x32xf32, #tpu.memory_space<vmem>>, vector<32x32xf32>
    tpu.vector_store %arg6[%c0_31, %c0_32], %94 {strides = array<i32>} : memref<32x32xf32, #tpu.memory_space<vmem>>, vector<32x32xf32>,
    return
  }
  func.func @transform_0(%arg0: i32) -> (i32, i32) {
    %c0_i32 = arith.constant 0 : i32
    %c0_i32_0 = arith.constant 0 : i32
    return %arg0, %c0_i32 : i32, i32
  }
  func.func @transform_1(%arg0: i32) -> (i32, i32) {
    %c0_i32 = arith.constant 0 : i32
    %c0_i32_0 = arith.constant 0 : i32
    %c0_i32_1 = arith.constant 0 : i32
    return %c0_i32, %c0_i32_0 : i32, i32
  }
  func.func @transform_2(%arg0: i32) -> (i32, i32) {
    %c0_i32 = arith.constant 0 : i32
    %c0_i32_0 = arith.constant 0 : i32
    %c0_i32_1 = arith.constant 0 : i32
    return %c0_i32, %c0_i32_0 : i32, i32
  }
  func.func @transform_3(%arg0: i32) -> (i32, i32) {
    %c0_i32 = arith.constant 0 : i32
    %c0_i32_0 = arith.constant 0 : i32
    %c0_i32_1 = arith.constant 0 : i32
    return %c0_i32, %c0_i32_0 : i32, i32
  }
  func.func @transform_4(%arg0: i32) -> (i32, i32) {
    %c0_i32 = arith.constant 0 : i32
    %c0_i32_0 = arith.constant 0 : i32
    %c0_i32_1 = arith.constant 0 : i32
    return %c0_i32, %c0_i32_0 : i32, i32
  }
  func.func @transform_5(%arg0: i32) -> (i32, i32) {
    %c0_i32 = arith.constant 0 : i32
    %c0_i32_0 = arith.constant 0 : i32
    return %arg0, %c0_i32 : i32, i32
  }
}

</mosaic_0001>

<llo_original>
// kernel: tpu_custom_call.1
$region0: #{tpu_custom_call.1}
  #allocation0 [shape = 'u32[]', space=smem, size = 0x4, offset = 0x4, fixed_abs, tag = 'smem constant byte address 0x4 - core index']
  #allocation1 [shape = 'u32[144,128]{1,0:T(1,128)}', space=vmem, size = 0x12000, scoped, tag = 'internal scratch']
  %s0 = inlined_call_operand.vmem [shape: f32[64,4], index: 0, kind: input, shape index: {}]
  %s1 = inlined_call_operand.vmem [shape: f32[4,64], index: 1, kind: input, shape index: {}]
  %s2 = inlined_call_operand.vmem [shape: f32[1,64], index: 2, kind: input, shape index: {}]
  %s3 = inlined_call_operand.vmem [shape: f32[4,128], index: 3, kind: input, shape index: {}]
  %s4 = inlined_call_operand.vmem [shape: f32[1,32], index: 4, kind: input, shape index: {}]
  %s5 = inlined_call_operand.vmem [shape: f32[64,32], index: 5, kind: output, shape index: {}]
  %s6 = sld [smem:[#allocation0]]
  $region53: #{tpu_custom_call.1} parent=0
    _
  %s8 = ssub.s32 1, %s6
  %s9 = scalar_select 0, %s8, %s6
  loop: start=0, step=1, limit=4
  $region2: #{tpu_custom_call.1} parent=0 // loop_pre_header
    _
  $region3: #{tpu_custom_call.1} parent=0 // loop_header
    %s11 = sphi 0, %s15
    %p12 = scmp.ge.s32.totalorder %s11, 4
    %s21 = sphi 0, %s23
    %s24 = sphi 0, %s21
    %s25 = sphi 0, %s24
    %s41 = sphi 0, %s25
    %s45 = sphi 0, %s45
    %s47 = sphi 0, %s45
    %s48 = sphi 0, %s47
    %s62 = sphi 0, %s48
    %s66 = sphi 0, %s66
    %s68 = sphi 0, %s66
    %s69 = sphi 0, %s68
    %s83 = sphi 0, %s69
    %s87 = sphi 0, %s87
    %s89 = sphi 0, %s87
    %s90 = sphi 0, %s89
    %s104 = sphi 0, %s90
    %s108 = sphi 0, %s108
    %s110 = sphi 0, %s108
    %s111 = sphi 0, %s110
    %s125 = sphi 0, %s111
    %s131 = sphi 0, %s133
    %s134 = sphi 0, %s131
    %s135 = sphi 0, %s134
    %s151 = sphi 0, %s135
  $region4: #{tpu_custom_call.1} parent=0 // loop_header_branch
    %14 = sbr.rel (%p12) target = $region8
  $region5: #{tpu_custom_call.1} parent=0 // loop_body
    %s16 = ssub.s32 %s11, 1
    %s17 = ssub.s32 %s11, 2
    %s18 = sadd.s32 %s11, 1
    %s19 = ssub.s32 %s11, %s18
    %p20 = scmp.eq.s32.totalorder %s19, 0
    %s22 = sadd.s32 %s21, 1
    %s23 = scalar_select %p20, %s21, %s22
    %p26 = pneg %p20
    %p27 = scmp.eq.s32.totalorder %s11, 1
    %p28 = por %p26, %p27
    %p29 = scmp.ne.s32.totalorder %s21, %s24
    %p30 = scmp.eq.s32.totalorder %s11, 0
    %p31 = por %p29, %p30
    %p32 = scmp.ne.s32.totalorder %s21, %s24
    %p33 = scmp.eq.s32.totalorder %s16, 1
    %p34 = por %p32, %p33
    %p35 = scmp.ne.s32.totalorder %s24, %s25
    %p36 = scmp.eq.s32.totalorder %s16, 0
    %p37 = por %p35, %p36
    %p38 = scmp.ne.s32.totalorder %s24, %s25
    %p39 = scmp.eq.s32.totalorder %s17, 1
    %p40 = por %p38, %p39
    %p42 = scmp.ne.s32.totalorder %s25, %s41
    %p43 = scmp.eq.s32.totalorder %s17, 0
    %p44 = por %p42, %p43
    %s46 = sadd.s32 %s45, 1
    %p49 = scmp.eq.s32.totalorder %s11, 1
    %p50 = scmp.ne.s32.totalorder %s45, %s47
    %p51 = scmp.eq.s32.totalorder %s11, 0
    %p52 = por %p50, %p51
    %p53 = scmp.ne.s32.totalorder %s45, %s47
    %p54 = scmp.eq.s32.totalorder %s16, 1
    %p55 = por %p53, %p54
    %p56 = scmp.ne.s32.totalorder %s47, %s48
    %p57 = scmp.eq.s32.totalorder %s16, 0
    %p58 = por %p56, %p57
    %p59 = scmp.ne.s32.totalorder %s47, %s48
    %p60 = scmp.eq.s32.totalorder %s17, 1
    %p61 = por %p59, %p60
    %p63 = scmp.ne.s32.totalorder %s48, %s62
    %p64 = scmp.eq.s32.totalorder %s17, 0
    %p65 = por %p63, %p64
    %s67 = sadd.s32 %s66, 1
    %p70 = scmp.eq.s32.totalorder %s11, 1
    %p71 = scmp.ne.s32.totalorder %s66, %s68
    %p72 = scmp.eq.s32.totalorder %s11, 0
    %p73 = por %p71, %p72
    %p74 = scmp.ne.s32.totalorder %s66, %s68
    %p75 = scmp.eq.s32.totalorder %s16, 1
    %p76 = por %p74, %p75
    %p77 = scmp.ne.s32.totalorder %s68, %s69
    %p78 = scmp.eq.s32.totalorder %s16, 0
    %p79 = por %p77, %p78
    %p80 = scmp.ne.s32.totalorder %s68, %s69
    %p81 = scmp.eq.s32.totalorder %s17, 1
    %p82 = por %p80, %p81
    %p84 = scmp.ne.s32.totalorder %s69, %s83
    %p85 = scmp.eq.s32.totalorder %s17, 0
    %p86 = por %p84, %p85
    %s88 = sadd.s32 %s87, 1
    %p91 = scmp.eq.s32.totalorder %s11, 1
    %p92 = scmp.ne.s32.totalorder %s87, %s89
    %p93 = scmp.eq.s32.totalorder %s11, 0
    %p94 = por %p92, %p93
    %p95 = scmp.ne.s32.totalorder %s87, %s89
    %p96 = scmp.eq.s32.totalorder %s16, 1
    %p97 = por %p95, %p96
    %p98 = scmp.ne.s32.totalorder %s89, %s90
    %p99 = scmp.eq.s32.totalorder %s16, 0
    %p100 = por %p98, %p99
    %p101 = scmp.ne.s32.totalorder %s89, %s90
    %p102 = scmp.eq.s32.totalorder %s17, 1
    %p103 = por %p101, %p102
    %p105 = scmp.ne.s32.totalorder %s90, %s104
    %p106 = scmp.eq.s32.totalorder %s17, 0
    %p107 = por %p105, %p106
    %s109 = sadd.s32 %s108, 1
    %p112 = scmp.eq.s32.totalorder %s11, 1
    %p113 = scmp.ne.s32.totalorder %s108, %s110
    %p114 = scmp.eq.s32.totalorder %s11, 0
    %p115 = por %p113, %p114
    %p116 = scmp.ne.s32.totalorder %s108, %s110
    %p117 = scmp.eq.s32.totalorder %s16, 1
    %p118 = por %p116, %p117
    %p119 = scmp.ne.s32.totalorder %s110, %s111
    %p120 = scmp.eq.s32.totalorder %s16, 0
    %p121 = por %p119, %p120
    %p122 = scmp.ne.s32.totalorder %s110, %s111
    %p123 = scmp.eq.s32.totalorder %s17, 1
    %p124 = por %p122, %p123
    %p126 = scmp.ne.s32.totalorder %s111, %s125
    %p127 = scmp.eq.s32.totalorder %s17, 0
    %p128 = por %p126, %p127
    %s129 = ssub.s32 %s11, %s18
    %p130 = scmp.eq.s32.totalorder %s129, 0
    %s132 = sadd.s32 %s131, 1
    %s133 = scalar_select %p130, %s131, %s132
    %p136 = pneg %p130
    %p137 = scmp.eq.s32.totalorder %s11, 1
    %p138 = por %p136, %p137
    %p139 = scmp.ne.s32.totalorder %s131, %s134
    %p140 = scmp.eq.s32.totalorder %s11, 0
    %p141 = por %p139, %p140
    %p142 = scmp.ne.s32.totalorder %s131, %s134
    %p143 = scmp.eq.s32.totalorder %s16, 1
    %p144 = por %p142, %p143
    %p145 = scmp.ne.s32.totalorder %s134, %s135
    %p146 = scmp.eq.s32.totalorder %s16, 0
    %p147 = por %p145, %p146
    %p148 = scmp.ne.s32.totalorder %s134, %s135
    %p149 = scmp.eq.s32.totalorder %s17, 1
    %p150 = por %p148, %p149
    %p152 = scmp.ne.s32.totalorder %s135, %s151
    %p153 = scmp.eq.s32.totalorder %s17, 0
    %p154 = por %p152, %p153
    %p155 = scmp.le.s32.totalorder 1, %s11
    %p156 = scmp.lt.s32.totalorder %s11, 3
    %p157 = pnand %p155, %p156
    %p158 = pneg %p157
    // Predicated region
    $region9: #{tpu_custom_call.1} parent=5 // pred_check
      _
    $region10: #{tpu_custom_call.1} parent=5 // pred_check_branch
      %160 = sbr.rel (%p157) target = $region12
    $region11: #{tpu_custom_call.1} parent=5 // pred_region
      %s161 = ssub.s32 %s11, 1
      // Predicated region
      $region13: #{tpu_custom_call.1} parent=11 // pred_check
        %p162 = pneg %p58
      $region14: #{tpu_custom_call.1} parent=11 // pred_check_branch
        %164 = sbr.rel (%p162) target = $region16
      $region15: #{tpu_custom_call.1} parent=11 // pred_region
        _
      $region16: #{tpu_custom_call.1} parent=11 // pred_fallthru
        _
      // Predicated region
      $region17: #{tpu_custom_call.1} parent=11 // pred_check
        %p165 = pneg %p79
      $region18: #{tpu_custom_call.1} parent=11 // pred_check_branch
        %167 = sbr.rel (%p165) target = $region20
      $region19: #{tpu_custom_call.1} parent=11 // pred_region
        _
      $region20: #{tpu_custom_call.1} parent=11 // pred_fallthru
        _
      // Predicated region
      $region21: #{tpu_custom_call.1} parent=11 // pred_check
        %p168 = pneg %p100
      $region22: #{tpu_custom_call.1} parent=11 // pred_check_branch
        %170 = sbr.rel (%p168) target = $region24
      $region23: #{tpu_custom_call.1} parent=11 // pred_region
        _
      $region24: #{tpu_custom_call.1} parent=11 // pred_fallthru
        _
      // Predicated region
      $region25: #{tpu_custom_call.1} parent=11 // pred_check
        %p171 = pneg %p121
      $region26: #{tpu_custom_call.1} parent=11 // pred_check_branch
        %173 = sbr.rel (%p171) target = $region28
      $region27: #{tpu_custom_call.1} parent=11 // pred_region
        _
      $region28: #{tpu_custom_call.1} parent=11 // pred_fallthru
        _
    $region12: #{tpu_custom_call.1} parent=5 // pred_fallthru
      _
    %p174 = scmp.lt.s32.totalorder %s11, 2
    // Predicated region
    $region29: #{tpu_custom_call.1} parent=5 // pred_check
      %p175 = pneg %p174
    $region30: #{tpu_custom_call.1} parent=5 // pred_check_branch
      %177 = sbr.rel (%p175) target = $region32
    $region31: #{tpu_custom_call.1} parent=5 // pred_region
      // Predicated region
      $region33: #{tpu_custom_call.1} parent=31 // pred_check
        %p178 = pneg %p31
      $region34: #{tpu_custom_call.1} parent=31 // pred_check_branch
        %180 = sbr.rel (%p178) target = $region36
      $region35: #{tpu_custom_call.1} parent=31 // pred_region
        %s181 = smul.u32 4, %s11
        %p182 = scmp.lt.s32.totalorder %s181, 7
        %s183 = scalar_select %p182, %s181, 7
        %s184 = smul.addr %s183, 8
        %s185 = scalar_lea.vmem %s0, %s184
        %s186 = smul.u32 4, %s11
      $region36: #{tpu_custom_call.1} parent=31 // pred_fallthru
        _
    $region32: #{tpu_custom_call.1} parent=5 // pred_fallthru
      _
    %p187 = scmp.le.s32.totalorder 1, %s11
    %p188 = scmp.lt.s32.totalorder %s11, 3
    %p189 = pnand %p187, %p188
    %p190 = pneg %p189
    // Predicated region
    $region37: #{tpu_custom_call.1} parent=5 // pred_check
      _
    $region38: #{tpu_custom_call.1} parent=5 // pred_check_branch
      %192 = sbr.rel (%p189) target = $region40
    $region39: #{tpu_custom_call.1} parent=5 // pred_region
      %s193 = ssub.s32 %s11, 1
      %s194 = smul.u32 4, %s16
      %p195 = scmp.lt.s32.totalorder %s194, 7
      %s196 = scalar_select %p195, %s194, 7
      %s197 = smul.addr %s196, 8
      %s198 = scalar_lea.vmem %s0, %s197
      %p199 = pneg %p37
      %p200 = pneg %p34
      %p201 = pneg %p58
      %p202 = pneg %p55
      %p203 = pneg %p79
      %p204 = pneg %p76
      %p205 = pneg %p100
      %p206 = pneg %p97
      %p207 = pneg %p121
      %p208 = pneg %p118
      %p209 = pneg %p147
      %p210 = pneg %p144
      %s211 = smul.u32 4, %s16
      %p212 = scmp.lt.s32.totalorder %s211, 7
      %s213 = scalar_select %p212, %s211, 7
      %s214 = smul.addr %s213, 8
      %s215 = scalar_lea.vmem %s5, %s214
      %s216 = smul.u32 4, %s16
      %p217 = scmp.lt.s32.totalorder %s216, 7
      %s218 = scalar_select %p217, %s216, 7
      %s219 = smul.addr %s218, 8
      %s220 = scalar_lea.vmem %s0, %s219
      %s221 = smul.u32 4, %s16
      %s222 = smul.u32 4, %s16
      %p223 = scmp.lt.s32.totalorder %s222, 7
      %s224 = scalar_select %p223, %s222, 7
      %s225 = smul.addr %s224, 8
      %s226 = scalar_lea.vmem %s5, %s225
      %s227 = smul.u32 4, %s16
      %v228 = vld [vmem:[%s220] sm:$0xff]
      %v229 = vld [vmem:[%s220 + $0x8] sm:$0xff]
      %v230 = vld [vmem:[%s220 + $0x10] sm:$0xff]
      %v231 = vld [vmem:[%s220 + $0x18] sm:$0xff]
      %v232 = vld [vmem:[%s1] sm:$0xf]
      %v233 = vld [vmem:[%s2] sm:$0x1]
      %v235 = vlaneseq
      %v236 = vshrl.u32 %v235, 7
      %v237 = vsub.s32 0, %v236
      %v238 = vrot.slane %v233, %v237
      %vm240 = vcmask 31744
      %v242 = vsel %vm240, %v228, 0
      %v245 = vsel %vm240, %v229, 0
      %v248 = vsel %vm240, %v230, 0
      %v251 = vsel %vm240, %v231, 0
      %vm253 = vcmask 1043456
      %v255 = vsel %vm253, %v232, 0
      %257 = vmatprep.subr.mxu0 0.0
      %258 = vmatpush1.msra.mxu0 %v255
      %259 = vmatprep.subr.mxu0 0.0
      %260 = vmatpush1.msra.mxu0 0.0
      %261 = vmatprep.subr.mxu0 0.0
      %262 = vmatpush1.msra.mxu0 0.0
      %263 = vmatprep.subr.mxu0 0.0
      %264 = vmatpush1.msra.mxu0 0.0
      %265 = vmatprep.subr.mxu0 0.0
      %266 = vmatpush1.msra.mxu0 0.0
      %267 = vmatprep.subr.mxu0 0.0
      %268 = vmatpush1.msra.mxu0 0.0
      %269 = vmatprep.subr.mxu0 0.0
      %270 = vmatpush1.msra.mxu0 0.0
      %271 = vmatprep.subr.mxu0 0.0
      %272 = vmatpush1.msra.mxu0 0.0
      %273 = vmatprep.subr.mxu0 0.0
      %274 = vmatpush1.msra.mxu0 0.0
      %275 = vmatprep.subr.mxu0 0.0
      %276 = vmatpush1.msra.mxu0 0.0
      %277 = vmatprep.subr.mxu0 0.0
      %278 = vmatpush1.msra.mxu0 0.0
      %279 = vmatprep.subr.mxu0 0.0
      %280 = vmatpush1.msra.mxu0 0.0
      %281 = vmatprep.subr.mxu0 0.0
      %282 = vmatpush1.msra.mxu0 0.0
      %283 = vmatprep.subr.mxu0 0.0
      %284 = vmatpush1.msra.mxu0 0.0
      %285 = vmatprep.subr.mxu0 0.0
      %286 = vmatpush1.msra.mxu0 0.0
      %287 = vmatprep.subr.mxu0 0.0
      %288 = vmatpush1.msra.mxu0 0.0
      %289 = vmatprep.subr.mxu0 0.0
      %290 = vmatpush1.msra.mxu0 0.0
      %291 = vmatprep.subr.mxu0 0.0
      %292 = vmatpush1.msra.mxu0 0.0
      %293 = vmatprep.subr.mxu0 0.0
      %294 = vmatpush1.msra.mxu0 0.0
      %295 = vmatprep.subr.mxu0 0.0
      %296 = vmatpush1.msra.mxu0 0.0
      %297 = vmatprep.subr.mxu0 0.0
      %298 = vmatpush1.msra.mxu0 0.0
      %299 = vmatprep.subr.mxu0 0.0
      %300 = vmatpush1.msra.mxu0 0.0
      %301 = vmatprep.subr.mxu0 0.0
      %302 = vmatpush1.msra.mxu0 0.0
      %303 = vmatprep.subr.mxu0 0.0
      %304 = vmatpush1.msra.mxu0 0.0
      %305 = vmatprep.subr.mxu0 0.0
      %306 = vmatpush1.msra.mxu0 0.0
      %307 = vmatprep.subr.mxu0 0.0
      %308 = vmatpush1.msra.mxu0 0.0
      %309 = vmatprep.subr.mxu0 0.0
      %310 = vmatpush1.msra.mxu0 0.0
      %311 = vmatprep.subr.mxu0 0.0
      %312 = vmatpush1.msra.mxu0 0.0
      %313 = vmatprep.subr.mxu0 0.0
      %314 = vmatpush1.msra.mxu0 0.0
      %315 = vmatprep.subr.mxu0 0.0
      %316 = vmatpush1.msra.mxu0 0.0
      %317 = vmatprep.subr.mxu0 0.0
      %318 = vmatpush1.msra.mxu0 0.0
      %319 = vmatprep.subr.mxu0 0.0
      %320 = vmatpush1.msra.mxu0 0.0
      %321 = vmatprep.mubr.f32.mxu0 0.0
      %322 = vmatmul.mubr.f32.gmra.mrb[0].mxu0 %v242
      %v323 = vpop.f32.mrb[0].mxu0
      %v324 = vadd.f32 %v238, %v323
      %v325 = vpop.f32.mrb[0].mxu0
      %326 = vmatprep.mubr.f32.mxu0 0.0
      %327 = vmatmul.mubr.f32.gmra.mrb[0].mxu0 %v245
      %v328 = vpop.f32.mrb[0].mxu0
      %v329 = vadd.f32 %v238, %v328
      %v330 = vpop.f32.mrb[0].mxu0
      %331 = vmatprep.mubr.f32.mxu0 0.0
      %332 = vmatmul.mubr.f32.gmra.mrb[0].mxu0 %v248
      %v333 = vpop.f32.mrb[0].mxu0
      %v334 = vadd.f32 %v238, %v333
      %v335 = vpop.f32.mrb[0].mxu0
      %336 = vmatprep.mubr.f32.mxu0 0.0
      %337 = vmatmul.mubr.f32.gmra.mrb[0].mxu0 %v251
      %v338 = vpop.f32.mrb[0].mxu0
      %v339 = vadd.f32 %v238, %v338
      %v340 = vpop.f32.mrb[0].mxu0
      %341 = vdwg.mxu0
      %v342 = vld [vmem:[%s3] sm:$0xf]
      %v344 = vsel %vm253, %v342, 0
      %346 = vmatprep.subr.mxu0 0.0
      %347 = vmatpush1.msra.mxu0 %v344
      %348 = vmatprep.subr.mxu0 0.0
      %349 = vmatpush1.msra.mxu0 0.0
      %350 = vmatprep.subr.mxu0 0.0
      %351 = vmatpush1.msra.mxu0 0.0
      %352 = vmatprep.subr.mxu0 0.0
      %353 = vmatpush1.msra.mxu0 0.0
      %354 = vmatprep.subr.mxu0 0.0
      %355 = vmatpush1.msra.mxu0 0.0
      %356 = vmatprep.subr.mxu0 0.0
      %357 = vmatpush1.msra.mxu0 0.0
      %358 = vmatprep.subr.mxu0 0.0
      %359 = vmatpush1.msra.mxu0 0.0
      %360 = vmatprep.subr.mxu0 0.0
      %361 = vmatpush1.msra.mxu0 0.0
      %362 = vmatprep.subr.mxu0 0.0
      %363 = vmatpush1.msra.mxu0 0.0
      %364 = vmatprep.subr.mxu0 0.0
      %365 = vmatpush1.msra.mxu0 0.0
      %366 = vmatprep.subr.mxu0 0.0
      %367 = vmatpush1.msra.mxu0 0.0
      %368 = vmatprep.subr.mxu0 0.0
      %369 = vmatpush1.msra.mxu0 0.0
      %370 = vmatprep.subr.mxu0 0.0
      %371 = vmatpush1.msra.mxu0 0.0
      %372 = vmatprep.subr.mxu0 0.0
      %373 = vmatpush1.msra.mxu0 0.0
      %374 = vmatprep.subr.mxu0 0.0
      %375 = vmatpush1.msra.mxu0 0.0
      %376 = vmatprep.subr.mxu0 0.0
      %377 = vmatpush1.msra.mxu0 0.0
      %378 = vmatprep.subr.mxu0 0.0
      %379 = vmatpush1.msra.mxu0 0.0
      %380 = vmatprep.subr.mxu0 0.0
      %381 = vmatpush1.msra.mxu0 0.0
      %382 = vmatprep.subr.mxu0 0.0
      %383 = vmatpush1.msra.mxu0 0.0
      %384 = vmatprep.subr.mxu0 0.0
      %385 = vmatpush1.msra.mxu0 0.0
      %386 = vmatprep.subr.mxu0 0.0
      %387 = vmatpush1.msra.mxu0 0.0
      %388 = vmatprep.subr.mxu0 0.0
      %389 = vmatpush1.msra.mxu0 0.0
      %390 = vmatprep.subr.mxu0 0.0
      %391 = vmatpush1.msra.mxu0 0.0
      %392 = vmatprep.subr.mxu0 0.0
      %393 = vmatpush1.msra.mxu0 0.0
      %394 = vmatprep.subr.mxu0 0.0
      %395 = vmatpush1.msra.mxu0 0.0
      %396 = vmatprep.subr.mxu0 0.0
      %397 = vmatpush1.msra.mxu0 0.0
      %398 = vmatprep.subr.mxu0 0.0
      %399 = vmatpush1.msra.mxu0 0.0
      %400 = vmatprep.subr.mxu0 0.0
      %401 = vmatpush1.msra.mxu0 0.0
      %402 = vmatprep.subr.mxu0 0.0
      %403 = vmatpush1.msra.mxu0 0.0
      %404 = vmatprep.subr.mxu0 0.0
      %405 = vmatpush1.msra.mxu0 0.0
      %406 = vmatprep.subr.mxu0 0.0
      %407 = vmatpush1.msra.mxu0 0.0
      %408 = vmatprep.subr.mxu0 0.0
      %409 = vmatpush1.msra.mxu0 0.0
      %410 = vmatprep.mubr.f32.mxu0 0.0
      %411 = vmatmul.mubr.f32.gmra.mrb[0].mxu0 %v242
      %v412 = vpop.f32.mrb[0].mxu0
      %v413 = vadd.f32 0.0, %v412
      %v414 = vpop.f32.mrb[0].mxu0
      %415 = vmatprep.mubr.f32.mxu0 0.0
      %416 = vmatmul.mubr.f32.gmra.mrb[0].mxu0 %v245
      %v417 = vpop.f32.mrb[0].mxu0
      %v418 = vadd.f32 0.0, %v417
      %v419 = vpop.f32.mrb[0].mxu0
      %420 = vmatprep.mubr.f32.mxu0 0.0
      %421 = vmatmul.mubr.f32.gmra.mrb[0].mxu0 %v248
      %v422 = vpop.f32.mrb[0].mxu0
      %v423 = vadd.f32 0.0, %v422
      %v424 = vpop.f32.mrb[0].mxu0
      %425 = vmatprep.mubr.f32.mxu0 0.0
      %426 = vmatmul.mubr.f32.gmra.mrb[0].mxu0 %v251
      %v427 = vpop.f32.mrb[0].mxu0
      %v428 = vadd.f32 0.0, %v427
      %v429 = vpop.f32.mrb[0].mxu0
      %430 = vdwg.mxu0
      %432 = vrot.lane.b32.xlu0 %v324, 96
      %v433 = vpop.permute.xlu0 %432
      %vm434 = vcmask 64512
      %v435 = vsel %vm434, %v324, 0
      %v437 = vsel %vm434, %v433, 0
      %439 = vmatprep.subr.mxu0 0.0
      %440 = vmatpush1.xpose.msra.mxu0 %v437
      %441 = vmatprep.subr.mxu0 0.0
      %442 = vmatpush1.xpose.msra.mxu0 0.0
      %443 = vmatprep.subr.mxu0 0.0
      %444 = vmatpush1.xpose.msra.mxu0 0.0
      %445 = vmatprep.subr.mxu0 0.0
      %446 = vmatpush1.xpose.msra.mxu0 0.0
      %447 = vmatprep.subr.mxu0 0.0
      %448 = vmatpush1.xpose.msra.mxu0 0.0
      %449 = vmatprep.subr.mxu0 0.0
      %450 = vmatpush1.xpose.msra.mxu0 0.0
      %451 = vmatprep.subr.mxu0 0.0
      %452 = vmatpush1.xpose.msra.mxu0 0.0
      %453 = vmatprep.subr.mxu0 0.0
      %454 = vmatpush1.xpose.msra.mxu0 0.0
      %455 = vmatprep.subr.mxu0 0.0
      %456 = vmatpush1.xpose.msra.mxu0 0.0
      %457 = vmatprep.subr.mxu0 0.0
      %458 = vmatpush1.xpose.msra.mxu0 0.0
      %459 = vmatprep.subr.mxu0 0.0
      %460 = vmatpush1.xpose.msra.mxu0 0.0
      %461 = vmatprep.subr.mxu0 0.0
      %462 = vmatpush1.xpose.msra.mxu0 0.0
      %463 = vmatprep.subr.mxu0 0.0
      %464 = vmatpush1.xpose.msra.mxu0 0.0
      %465 = vmatprep.subr.mxu0 0.0
      %466 = vmatpush1.xpose.msra.mxu0 0.0
      %467 = vmatprep.subr.mxu0 0.0
      %468 = vmatpush1.xpose.msra.mxu0 0.0
      %469 = vmatprep.subr.mxu0 0.0
      %470 = vmatpush1.xpose.msra.mxu0 0.0
      %471 = vmatprep.subr.mxu0 0.0
      %472 = vmatpush1.xpose.msra.mxu0 0.0
      %473 = vmatprep.subr.mxu0 0.0
      %474 = vmatpush1.xpose.msra.mxu0 0.0
      %475 = vmatprep.subr.mxu0 0.0
      %476 = vmatpush1.xpose.msra.mxu0 0.0
      %477 = vmatprep.subr.mxu0 0.0
      %478 = vmatpush1.xpose.msra.mxu0 0.0
      %479 = vmatprep.subr.mxu0 0.0
      %480 = vmatpush1.xpose.msra.mxu0 0.0
      %481 = vmatprep.subr.mxu0 0.0
      %482 = vmatpush1.xpose.msra.mxu0 0.0
      %483 = vmatprep.subr.mxu0 0.0
      %484 = vmatpush1.xpose.msra.mxu0 0.0
      %485 = vmatprep.subr.mxu0 0.0
      %486 = vmatpush1.xpose.msra.mxu0 0.0
      %487 = vmatprep.subr.mxu0 0.0
      %488 = vmatpush1.xpose.msra.mxu0 0.0
      %489 = vmatprep.subr.mxu0 0.0
      %490 = vmatpush1.xpose.msra.mxu0 0.0
      %491 = vmatprep.subr.mxu0 0.0
      %492 = vmatpush1.xpose.msra.mxu0 0.0
      %493 = vmatprep.subr.mxu0 0.0
      %494 = vmatpush1.xpose.msra.mxu0 0.0
      %495 = vmatprep.subr.mxu0 0.0
      %496 = vmatpush1.xpose.msra.mxu0 0.0
      %497 = vmatprep.subr.mxu0 0.0
      %498 = vmatpush1.xpose.msra.mxu0 0.0
      %499 = vmatprep.subr.mxu0 0.0
      %500 = vmatpush1.xpose.msra.mxu0 0.0
      %501 = vmatprep.subr.mxu0 0.0
      %502 = vmatpush1.xpose.msra.mxu0 0.0
      %503 = vmatprep.mubr.f32.mxu0 0.0
      %504 = vmatmul.mubr.f32.gmra.mrb[0].mxu0 %v435
      %v505 = vpop.f32.mrb[0].mxu0
      %v506 = vadd.f32 0.0, %v505
      %v507 = vpop.f32.mrb[0].mxu0
      %508 = vdwg.mxu0
      %510 = vrot.lane.b32.xlu0 %v329, 96
      %v511 = vpop.permute.xlu0 %510
      %v512 = vsel %vm434, %v329, 0
      %v514 = vsel %vm434, %v511, 0
      %516 = vmatprep.subr.mxu0 0.0
      %517 = vmatpush1.xpose.msra.mxu0 %v514
      %518 = vmatprep.subr.mxu0 0.0
      %519 = vmatpush1.xpose.msra.mxu0 0.0
      %520 = vmatprep.subr.mxu0 0.0
      %521 = vmatpush1.xpose.msra.mxu0 0.0
      %522 = vmatprep.subr.mxu0 0.0
      %523 = vmatpush1.xpose.msra.mxu0 0.0
      %524 = vmatprep.subr.mxu0 0.0
      %525 = vmatpush1.xpose.msra.mxu0 0.0
      %526 = vmatprep.subr.mxu0 0.0
      %527 = vmatpush1.xpose.msra.mxu0 0.0
      %528 = vmatprep.subr.mxu0 0.0
      %529 = vmatpush1.xpose.msra.mxu0 0.0
      %530 = vmatprep.subr.mxu0 0.0
      %531 = vmatpush1.xpose.msra.mxu0 0.0
      %532 = vmatprep.subr.mxu0 0.0
      %533 = vmatpush1.xpose.msra.mxu0 0.0
      %534 = vmatprep.subr.mxu0 0.0
      %535 = vmatpush1.xpose.msra.mxu0 0.0
      %536 = vmatprep.subr.mxu0 0.0
      %537 = vmatpush1.xpose.msra.mxu0 0.0
      %538 = vmatprep.subr.mxu0 0.0
      %539 = vmatpush1.xpose.msra.mxu0 0.0
      %540 = vmatprep.subr.mxu0 0.0
      %541 = vmatpush1.xpose.msra.mxu0 0.0
      %542 = vmatprep.subr.mxu0 0.0
      %543 = vmatpush1.xpose.msra.mxu0 0.0
      %544 = vmatprep.subr.mxu0 0.0
      %545 = vmatpush1.xpose.msra.mxu0 0.0
      %546 = vmatprep.subr.mxu0 0.0
      %547 = vmatpush1.xpose.msra.mxu0 0.0
      %548 = vmatprep.subr.mxu0 0.0
      %549 = vmatpush1.xpose.msra.mxu0 0.0
      %550 = vmatprep.subr.mxu0 0.0
      %551 = vmatpush1.xpose.msra.mxu0 0.0
      %552 = vmatprep.subr.mxu0 0.0
      %553 = vmatpush1.xpose.msra.mxu0 0.0
      %554 = vmatprep.subr.mxu0 0.0
      %555 = vmatpush1.xpose.msra.mxu0 0.0
      %556 = vmatprep.subr.mxu0 0.0
      %557 = vmatpush1.xpose.msra.mxu0 0.0
      %558 = vmatprep.subr.mxu0 0.0
      %559 = vmatpush1.xpose.msra.mxu0 0.0
      %560 = vmatprep.subr.mxu0 0.0
      %561 = vmatpush1.xpose.msra.mxu0 0.0
      %562 = vmatprep.subr.mxu0 0.0
      %563 = vmatpush1.xpose.msra.mxu0 0.0
      %564 = vmatprep.subr.mxu0 0.0
      %565 = vmatpush1.xpose.msra.mxu0 0.0
      %566 = vmatprep.subr.mxu0 0.0
      %567 = vmatpush1.xpose.msra.mxu0 0.0
      %568 = vmatprep.subr.mxu0 0.0
      %569 = vmatpush1.xpose.msra.mxu0 0.0
      %570 = vmatprep.subr.mxu0 0.0
      %571 = vmatpush1.xpose.msra.mxu0 0.0
      %572 = vmatprep.subr.mxu0 0.0
      %573 = vmatpush1.xpose.msra.mxu0 0.0
      %574 = vmatprep.subr.mxu0 0.0
      %575 = vmatpush1.xpose.msra.mxu0 0.0
      %576 = vmatprep.subr.mxu0 0.0
      %577 = vmatpush1.xpose.msra.mxu0 0.0
      %578 = vmatprep.subr.mxu0 0.0
      %579 = vmatpush1.xpose.msra.mxu0 0.0
      %580 = vmatprep.mubr.f32.mxu0 0.0
      %581 = vmatmul.mubr.f32.gmra.mrb[0].mxu0 %v512
      %v582 = vpop.f32.mrb[0].mxu0
      %v583 = vadd.f32 0.0, %v582
      %v584 = vpop.f32.mrb[0].mxu0
      %585 = vdwg.mxu0
      %587 = vrot.lane.b32.xlu0 %v334, 96
      %v588 = vpop.permute.xlu0 %587
      %v589 = vsel %vm434, %v334, 0
      %v591 = vsel %vm434, %v588, 0
      %593 = vmatprep.subr.mxu0 0.0
      %594 = vmatpush1.xpose.msra.mxu0 %v591
      %595 = vmatprep.subr.mxu0 0.0
      %596 = vmatpush1.xpose.msra.mxu0 0.0
      %597 = vmatprep.subr.mxu0 0.0
      %598 = vmatpush1.xpose.msra.mxu0 0.0
      %599 = vmatprep.subr.mxu0 0.0
      %600 = vmatpush1.xpose.msra.mxu0 0.0
      %601 = vmatprep.subr.mxu0 0.0
      %602 = vmatpush1.xpose.msra.mxu0 0.0
      %603 = vmatprep.subr.mxu0 0.0
      %604 = vmatpush1.xpose.msra.mxu0 0.0
      %605 = vmatprep.subr.mxu0 0.0
      %606 = vmatpush1.xpose.msra.mxu0 0.0
      %607 = vmatprep.subr.mxu0 0.0
      %608 = vmatpush1.xpose.msra.mxu0 0.0
      %609 = vmatprep.subr.mxu0 0.0
      %610 = vmatpush1.xpose.msra.mxu0 0.0
      %611 = vmatprep.subr.mxu0 0.0
      %612 = vmatpush1.xpose.msra.mxu0 0.0
      %613 = vmatprep.subr.mxu0 0.0
      %614 = vmatpush1.xpose.msra.mxu0 0.0
      %615 = vmatprep.subr.mxu0 0.0
      %616 = vmatpush1.xpose.msra.mxu0 0.0
      %617 = vmatprep.subr.mxu0 0.0
      %618 = vmatpush1.xpose.msra.mxu0 0.0
      %619 = vmatprep.subr.mxu0 0.0
      %620 = vmatpush1.xpose.msra.mxu0 0.0
      %621 = vmatprep.subr.mxu0 0.0
      %622 = vmatpush1.xpose.msra.mxu0 0.0
      %623 = vmatprep.subr.mxu0 0.0
      %624 = vmatpush1.xpose.msra.mxu0 0.0
      %625 = vmatprep.subr.mxu0 0.0
      %626 = vmatpush1.xpose.msra.mxu0 0.0
      %627 = vmatprep.subr.mxu0 0.0
      %628 = vmatpush1.xpose.msra.mxu0 0.0
      %629 = vmatprep.subr.mxu0 0.0
      %630 = vmatpush1.xpose.msra.mxu0 0.0
      %631 = vmatprep.subr.mxu0 0.0
      %632 = vmatpush1.xpose.msra.mxu0 0.0
      %633 = vmatprep.subr.mxu0 0.0
      %634 = vmatpush1.xpose.msra.mxu0 0.0
      %635 = vmatprep.subr.mxu0 0.0
      %636 = vmatpush1.xpose.msra.mxu0 0.0
      %637 = vmatprep.subr.mxu0 0.0
      %638 = vmatpush1.xpose.msra.mxu0 0.0
      %639 = vmatprep.subr.mxu0 0.0
      %640 = vmatpush1.xpose.msra.mxu0 0.0
      %641 = vmatprep.subr.mxu0 0.0
      %642 = vmatpush1.xpose.msra.mxu0 0.0
      %643 = vmatprep.subr.mxu0 0.0
      %644 = vmatpush1.xpose.msra.mxu0 0.0
      %645 = vmatprep.subr.mxu0 0.0
      %646 = vmatpush1.xpose.msra.mxu0 0.0
      %647 = vmatprep.subr.mxu0 0.0
      %648 = vmatpush1.xpose.msra.mxu0 0.0
      %649 = vmatprep.subr.mxu0 0.0
      %650 = vmatpush1.xpose.msra.mxu0 0.0
      %651 = vmatprep.subr.mxu0 0.0
      %652 = vmatpush1.xpose.msra.mxu0 0.0
      %653 = vmatprep.subr.mxu0 0.0
      %654 = vmatpush1.xpose.msra.mxu0 0.0
      %655 = vmatprep.subr.mxu0 0.0
      %656 = vmatpush1.xpose.msra.mxu0 0.0
      %657 = vmatprep.mubr.f32.mxu0 0.0
      %658 = vmatmul.mubr.f32.gmra.mrb[0].mxu0 %v589
      %v659 = vpop.f32.mrb[0].mxu0
      %v660 = vadd.f32 0.0, %v659
      %v661 = vpop.f32.mrb[0].mxu0
      %662 = vdwg.mxu0
      %664 = vrot.lane.b32.xlu0 %v339, 96
      %v665 = vpop.permute.xlu0 %664
      %v666 = vsel %vm434, %v339, 0
      %v668 = vsel %vm434, %v665, 0
      %670 = vmatprep.subr.mxu0 0.0
      %671 = vmatpush1.xpose.msra.mxu0 %v668
      %672 = vmatprep.subr.mxu0 0.0
      %673 = vmatpush1.xpose.msra.mxu0 0.0
      %674 = vmatprep.subr.mxu0 0.0
      %675 = vmatpush1.xpose.msra.mxu0 0.0
      %676 = vmatprep.subr.mxu0 0.0
      %677 = vmatpush1.xpose.msra.mxu0 0.0
      %678 = vmatprep.subr.mxu0 0.0
      %679 = vmatpush1.xpose.msra.mxu0 0.0
      %680 = vmatprep.subr.mxu0 0.0
      %681 = vmatpush1.xpose.msra.mxu0 0.0
      %682 = vmatprep.subr.mxu0 0.0
      %683 = vmatpush1.xpose.msra.mxu0 0.0
      %684 = vmatprep.subr.mxu0 0.0
      %685 = vmatpush1.xpose.msra.mxu0 0.0
      %686 = vmatprep.subr.mxu0 0.0
      %687 = vmatpush1.xpose.msra.mxu0 0.0
      %688 = vmatprep.subr.mxu0 0.0
      %689 = vmatpush1.xpose.msra.mxu0 0.0
      %690 = vmatprep.subr.mxu0 0.0
      %691 = vmatpush1.xpose.msra.mxu0 0.0
      %692 = vmatprep.subr.mxu0 0.0
      %693 = vmatpush1.xpose.msra.mxu0 0.0
      %694 = vmatprep.subr.mxu0 0.0
      %695 = vmatpush1.xpose.msra.mxu0 0.0
      %696 = vmatprep.subr.mxu0 0.0
      %697 = vmatpush1.xpose.msra.mxu0 0.0
      %698 = vmatprep.subr.mxu0 0.0
      %699 = vmatpush1.xpose.msra.mxu0 0.0
      %700 = vmatprep.subr.mxu0 0.0
      %701 = vmatpush1.xpose.msra.mxu0 0.0
      %702 = vmatprep.subr.mxu0 0.0
      %703 = vmatpush1.xpose.msra.mxu0 0.0
      %704 = vmatprep.subr.mxu0 0.0
      %705 = vmatpush1.xpose.msra.mxu0 0.0
      %706 = vmatprep.subr.mxu0 0.0
      %707 = vmatpush1.xpose.msra.mxu0 0.0
      %708 = vmatprep.subr.mxu0 0.0
      %709 = vmatpush1.xpose.msra.mxu0 0.0
      %710 = vmatprep.subr.mxu0 0.0
      %711 = vmatpush1.xpose.msra.mxu0 0.0
      %712 = vmatprep.subr.mxu0 0.0
      %713 = vmatpush1.xpose.msra.mxu0 0.0
      %714 = vmatprep.subr.mxu0 0.0
      %715 = vmatpush1.xpose.msra.mxu0 0.0
      %716 = vmatprep.subr.mxu0 0.0
      %717 = vmatpush1.xpose.msra.mxu0 0.0
      %718 = vmatprep.subr.mxu0 0.0
      %719 = vmatpush1.xpose.msra.mxu0 0.0
      %720 = vmatprep.subr.mxu0 0.0
      %721 = vmatpush1.xpose.msra.mxu0 0.0
      %722 = vmatprep.subr.mxu0 0.0
      %723 = vmatpush1.xpose.msra.mxu0 0.0
      %724 = vmatprep.subr.mxu0 0.0
      %725 = vmatpush1.xpose.msra.mxu0 0.0
      %726 = vmatprep.subr.mxu0 0.0
      %727 = vmatpush1.xpose.msra.mxu0 0.0
      %728 = vmatprep.subr.mxu0 0.0
      %729 = vmatpush1.xpose.msra.mxu0 0.0
      %730 = vmatprep.subr.mxu0 0.0
      %731 = vmatpush1.xpose.msra.mxu0 0.0
      %732 = vmatprep.subr.mxu0 0.0
      %733 = vmatpush1.xpose.msra.mxu0 0.0
      %734 = vmatprep.mubr.f32.mxu0 0.0
      %735 = vmatmul.mubr.f32.gmra.mrb[0].mxu0 %v666
      %v736 = vpop.f32.mrb[0].mxu0
      %v737 = vadd.f32 0.0, %v736
      %v738 = vpop.f32.mrb[0].mxu0
      %739 = vdwg.mxu0
      %v740 = vsel %vm434, %v506, -inf
      %741 = vmax.xlane.f32.xlu0 %v740
      %v742 = vpop.xlane.xlu0 %741
      %v743 = vsel %vm434, %v583, -inf
      %744 = vmax.xlane.f32.xlu0 %v743
      %v745 = vpop.xlane.xlu0 %744
      %v746 = vsel %vm434, %v660, -inf
      %747 = vmax.xlane.f32.xlu0 %v746
      %v748 = vpop.xlane.xlu0 %747
      %v749 = vsel %vm434, %v737, -inf
      %750 = vmax.xlane.f32.xlu0 %v749
      %v751 = vpop.xlane.xlu0 %750
      %v752 = vsub.f32 %v506, %v742
      %v753 = vsub.f32 %v583, %v745
      %v754 = vsub.f32 %v660, %v748
      %v755 = vsub.f32 %v737, %v751
      %v756 = vmul.f32 %v752, 1.442695
      %v757 = vpow.pop %v756
      %v758 = vmul.f32 %v753, 1.442695
      %v759 = vpow.pop %v758
      %v760 = vmul.f32 %v754, 1.442695
      %v761 = vpow.pop %v760
      %v762 = vmul.f32 %v755, 1.442695
      %v763 = vpow.pop %v762
      %v764 = vsel %vm434, %v757, 0.0
      %765 = vadd.xlane.f32.xlu0 %v764
      %v766 = vpop.xlane.xlu0 %765
      %v767 = vsel %vm434, %v759, 0.0
      %768 = vadd.xlane.f32.xlu0 %v767
      %v769 = vpop.xlane.xlu0 %768
      %v770 = vsel %vm434, %v761, 0.0
      %771 = vadd.xlane.f32.xlu0 %v770
      %v772 = vpop.xlane.xlu0 %771
      %v773 = vsel %vm434, %v763, 0.0
      %774 = vadd.xlane.f32.xlu0 %v773
      %v775 = vpop.xlane.xlu0 %774
      %v776 = vrcp.pop %v766
      %v777 = vrcp.pop %v769
      %v778 = vrcp.pop %v772
      %v779 = vrcp.pop %v775
      %v780 = vmul.f32 %v766, %v776
      %v781 = vmul.f32 %v769, %v777
      %v782 = vmul.f32 %v772, %v778
      %v783 = vmul.f32 %v775, %v779
      %v784 = vsub.f32 2.0, %v780
      %v785 = vsub.f32 2.0, %v781
      %v786 = vsub.f32 2.0, %v782
      %v787 = vsub.f32 2.0, %v783
      %v788 = vmul.f32 %v776, %v784
      %v789 = vmul.f32 %v777, %v785
      %v790 = vmul.f32 %v778, %v786
      %v791 = vmul.f32 %v779, %v787
      %v792 = vmul.f32 %v757, %v788
      %v793 = vmul.f32 %v759, %v789
      %v794 = vmul.f32 %v761, %v790
      %v795 = vmul.f32 %v763, %v791
      %796 = vrot.lane.b32.xlu0 %v324, 120
      %v797 = vpop.permute.xlu0 %796
      %798 = vrot.lane.b32.xlu0 %v324, 88
      %v799 = vpop.permute.xlu0 %798
      %v800 = vsel %vm434, %v797, 0
      %v802 = vsel %vm434, %v799, 0
      %804 = vmatprep.subr.mxu0 0.0
      %805 = vmatpush1.xpose.msra.mxu0 %v802
      %806 = vmatprep.subr.mxu0 0.0
      %807 = vmatpush1.xpose.msra.mxu0 0.0
      %808 = vmatprep.subr.mxu0 0.0
      %809 = vmatpush1.xpose.msra.mxu0 0.0
      %810 = vmatprep.subr.mxu0 0.0
      %811 = vmatpush1.xpose.msra.mxu0 0.0
      %812 = vmatprep.subr.mxu0 0.0
      %813 = vmatpush1.xpose.msra.mxu0 0.0
      %814 = vmatprep.subr.mxu0 0.0
      %815 = vmatpush1.xpose.msra.mxu0 0.0
      %816 = vmatprep.subr.mxu0 0.0
      %817 = vmatpush1.xpose.msra.mxu0 0.0
      %818 = vmatprep.subr.mxu0 0.0
      %819 = vmatpush1.xpose.msra.mxu0 0.0
      %820 = vmatprep.subr.mxu0 0.0
      %821 = vmatpush1.xpose.msra.mxu0 0.0
      %822 = vmatprep.subr.mxu0 0.0
      %823 = vmatpush1.xpose.msra.mxu0 0.0
      %824 = vmatprep.subr.mxu0 0.0
      %825 = vmatpush1.xpose.msra.mxu0 0.0
      %826 = vmatprep.subr.mxu0 0.0
      %827 = vmatpush1.xpose.msra.mxu0 0.0
      %828 = vmatprep.subr.mxu0 0.0
      %829 = vmatpush1.xpose.msra.mxu0 0.0
      %830 = vmatprep.subr.mxu0 0.0
      %831 = vmatpush1.xpose.msra.mxu0 0.0
      %832 = vmatprep.subr.mxu0 0.0
      %833 = vmatpush1.xpose.msra.mxu0 0.0
      %834 = vmatprep.subr.mxu0 0.0
      %835 = vmatpush1.xpose.msra.mxu0 0.0
      %836 = vmatprep.subr.mxu0 0.0
      %837 = vmatpush1.xpose.msra.mxu0 0.0
      %838 = vmatprep.subr.mxu0 0.0
      %839 = vmatpush1.xpose.msra.mxu0 0.0
      %840 = vmatprep.subr.mxu0 0.0
      %841 = vmatpush1.xpose.msra.mxu0 0.0
      %842 = vmatprep.subr.mxu0 0.0
      %843 = vmatpush1.xpose.msra.mxu0 0.0
      %844 = vmatprep.subr.mxu0 0.0
      %845 = vmatpush1.xpose.msra.mxu0 0.0
      %846 = vmatprep.subr.mxu0 0.0
      %847 = vmatpush1.xpose.msra.mxu0 0.0
      %848 = vmatprep.subr.mxu0 0.0
      %849 = vmatpush1.xpose.msra.mxu0 0.0
      %850 = vmatprep.subr.mxu0 0.0
      %851 = vmatpush1.xpose.msra.mxu0 0.0
      %852 = vmatprep.subr.mxu0 0.0
      %853 = vmatpush1.xpose.msra.mxu0 0.0
      %854 = vmatprep.subr.mxu0 0.0
      %855 = vmatpush1.xpose.msra.mxu0 0.0
      %856 = vmatprep.subr.mxu0 0.0
      %857 = vmatpush1.xpose.msra.mxu0 0.0
      %858 = vmatprep.subr.mxu0 0.0
      %859 = vmatpush1.xpose.msra.mxu0 0.0
      %860 = vmatprep.subr.mxu0 0.0
      %861 = vmatpush1.xpose.msra.mxu0 0.0
      %862 = vmatprep.subr.mxu0 0.0
      %863 = vmatpush1.xpose.msra.mxu0 0.0
      %864 = vmatprep.subr.mxu0 0.0
      %865 = vmatpush1.xpose.msra.mxu0 0.0
      %866 = vmatprep.subr.mxu0 0.0
      %867 = vmatpush1.xpose.msra.mxu0 0.0
      %868 = vmatprep.mubr.f32.mxu0 0.0
      %869 = vmatmul.mubr.f32.gmra.mrb[0].mxu0 %v800
      %v870 = vpop.f32.mrb[0].mxu0
      %v871 = vadd.f32 0.0, %v870
      %v872 = vpop.f32.mrb[0].mxu0
      %873 = vdwg.mxu0
      %874 = vrot.lane.b32.xlu0 %v329, 120
      %v875 = vpop.permute.xlu0 %874
      %876 = vrot.lane.b32.xlu0 %v329, 88
      %v877 = vpop.permute.xlu0 %876
      %v878 = vsel %vm434, %v875, 0
      %v880 = vsel %vm434, %v877, 0
      %882 = vmatprep.subr.mxu0 0.0
      %883 = vmatpush1.xpose.msra.mxu0 %v880
      %884 = vmatprep.subr.mxu0 0.0
      %885 = vmatpush1.xpose.msra.mxu0 0.0
      %886 = vmatprep.subr.mxu0 0.0
      %887 = vmatpush1.xpose.msra.mxu0 0.0
      %888 = vmatprep.subr.mxu0 0.0
      %889 = vmatpush1.xpose.msra.mxu0 0.0
      %890 = vmatprep.subr.mxu0 0.0
      %891 = vmatpush1.xpose.msra.mxu0 0.0
      %892 = vmatprep.subr.mxu0 0.0
      %893 = vmatpush1.xpose.msra.mxu0 0.0
      %894 = vmatprep.subr.mxu0 0.0
      %895 = vmatpush1.xpose.msra.mxu0 0.0
      %896 = vmatprep.subr.mxu0 0.0
      %897 = vmatpush1.xpose.msra.mxu0 0.0
      %898 = vmatprep.subr.mxu0 0.0
      %899 = vmatpush1.xpose.msra.mxu0 0.0
      %900 = vmatprep.subr.mxu0 0.0
      %901 = vmatpush1.xpose.msra.mxu0 0.0
      %902 = vmatprep.subr.mxu0 0.0
      %903 = vmatpush1.xpose.msra.mxu0 0.0
      %904 = vmatprep.subr.mxu0 0.0
      %905 = vmatpush1.xpose.msra.mxu0 0.0
      %906 = vmatprep.subr.mxu0 0.0
      %907 = vmatpush1.xpose.msra.mxu0 0.0
      %908 = vmatprep.subr.mxu0 0.0
      %909 = vmatpush1.xpose.msra.mxu0 0.0
      %910 = vmatprep.subr.mxu0 0.0
      %911 = vmatpush1.xpose.msra.mxu0 0.0
      %912 = vmatprep.subr.mxu0 0.0
      %913 = vmatpush1.xpose.msra.mxu0 0.0
      %914 = vmatprep.subr.mxu0 0.0
      %915 = vmatpush1.xpose.msra.mxu0 0.0
      %916 = vmatprep.subr.mxu0 0.0
      %917 = vmatpush1.xpose.msra.mxu0 0.0
      %918 = vmatprep.subr.mxu0 0.0
      %919 = vmatpush1.xpose.msra.mxu0 0.0
      %920 = vmatprep.subr.mxu0 0.0
      %921 = vmatpush1.xpose.msra.mxu0 0.0
      %922 = vmatprep.subr.mxu0 0.0
      %923 = vmatpush1.xpose.msra.mxu0 0.0
      %924 = vmatprep.subr.mxu0 0.0
      %925 = vmatpush1.xpose.msra.mxu0 0.0
      %926 = vmatprep.subr.mxu0 0.0
      %927 = vmatpush1.xpose.msra.mxu0 0.0
      %928 = vmatprep.subr.mxu0 0.0
      %929 = vmatpush1.xpose.msra.mxu0 0.0
      %930 = vmatprep.subr.mxu0 0.0
      %931 = vmatpush1.xpose.msra.mxu0 0.0
      %932 = vmatprep.subr.mxu0 0.0
      %933 = vmatpush1.xpose.msra.mxu0 0.0
      %934 = vmatprep.subr.mxu0 0.0
      %935 = vmatpush1.xpose.msra.mxu0 0.0
      %936 = vmatprep.subr.mxu0 0.0
      %937 = vmatpush1.xpose.msra.mxu0 0.0
      %938 = vmatprep.subr.mxu0 0.0
      %939 = vmatpush1.xpose.msra.mxu0 0.0
      %940 = vmatprep.subr.mxu0 0.0
      %941 = vmatpush1.xpose.msra.mxu0 0.0
      %942 = vmatprep.subr.mxu0 0.0
      %943 = vmatpush1.xpose.msra.mxu0 0.0
      %944 = vmatprep.subr.mxu0 0.0
      %945 = vmatpush1.xpose.msra.mxu0 0.0
      %946 = vmatprep.mubr.f32.mxu0 0.0
      %947 = vmatmul.mubr.f32.gmra.mrb[0].mxu0 %v878
      %v948 = vpop.f32.mrb[0].mxu0
      %v949 = vadd.f32 0.0, %v948
      %v950 = vpop.f32.mrb[0].mxu0
      %951 = vdwg.mxu0
      %952 = vrot.lane.b32.xlu0 %v334, 120
      %v953 = vpop.permute.xlu0 %952
      %954 = vrot.lane.b32.xlu0 %v334, 88
      %v955 = vpop.permute.xlu0 %954
      %v956 = vsel %vm434, %v953, 0
      %v958 = vsel %vm434, %v955, 0
      %960 = vmatprep.subr.mxu0 0.0
      %961 = vmatpush1.xpose.msra.mxu0 %v958
      %962 = vmatprep.subr.mxu0 0.0
      %963 = vmatpush1.xpose.msra.mxu0 0.0
      %964 = vmatprep.subr.mxu0 0.0
      %965 = vmatpush1.xpose.msra.mxu0 0.0
      %966 = vmatprep.subr.mxu0 0.0
      %967 = vmatpush1.xpose.msra.mxu0 0.0
      %968 = vmatprep.subr.mxu0 0.0
      %969 = vmatpush1.xpose.msra.mxu0 0.0
      %970 = vmatprep.subr.mxu0 0.0
      %971 = vmatpush1.xpose.msra.mxu0 0.0
      %972 = vmatprep.subr.mxu0 0.0
      %973 = vmatpush1.xpose.msra.mxu0 0.0
      %974 = vmatprep.subr.mxu0 0.0
      %975 = vmatpush1.xpose.msra.mxu0 0.0
      %976 = vmatprep.subr.mxu0 0.0
      %977 = vmatpush1.xpose.msra.mxu0 0.0
      %978 = vmatprep.subr.mxu0 0.0
      %979 = vmatpush1.xpose.msra.mxu0 0.0
      %980 = vmatprep.subr.mxu0 0.0
      %981 = vmatpush1.xpose.msra.mxu0 0.0
      %982 = vmatprep.subr.mxu0 0.0
      %983 = vmatpush1.xpose.msra.mxu0 0.0
      %984 = vmatprep.subr.mxu0 0.0
      %985 = vmatpush1.xpose.msra.mxu0 0.0
      %986 = vmatprep.subr.mxu0 0.0
      %987 = vmatpush1.xpose.msra.mxu0 0.0
      %988 = vmatprep.subr.mxu0 0.0
      %989 = vmatpush1.xpose.msra.mxu0 0.0
      %990 = vmatprep.subr.mxu0 0.0
      %991 = vmatpush1.xpose.msra.mxu0 0.0
      %992 = vmatprep.subr.mxu0 0.0
      %993 = vmatpush1.xpose.msra.mxu0 0.0
      %994 = vmatprep.subr.mxu0 0.0
      %995 = vmatpush1.xpose.msra.mxu0 0.0
      %996 = vmatprep.subr.mxu0 0.0
      %997 = vmatpush1.xpose.msra.mxu0 0.0
      %998 = vmatprep.subr.mxu0 0.0
      %999 = vmatpush1.xpose.msra.mxu0 0.0
      %1000 = vmatprep.subr.mxu0 0.0
      %1001 = vmatpush1.xpose.msra.mxu0 0.0
      %1002 = vmatprep.subr.mxu0 0.0
      %1003 = vmatpush1.xpose.msra.mxu0 0.0
      %1004 = vmatprep.subr.mxu0 0.0
      %1005 = vmatpush1.xpose.msra.mxu0 0.0
      %1006 = vmatprep.subr.mxu0 0.0
      %1007 = vmatpush1.xpose.msra.mxu0 0.0
      %1008 = vmatprep.subr.mxu0 0.0
      %1009 = vmatpush1.xpose.msra.mxu0 0.0
      %1010 = vmatprep.subr.mxu0 0.0
      %1011 = vmatpush1.xpose.msra.mxu0 0.0
      %1012 = vmatprep.subr.mxu0 0.0
      %1013 = vmatpush1.xpose.msra.mxu0 0.0
      %1014 = vmatprep.subr.mxu0 0.0
      %1015 = vmatpush1.xpose.msra.mxu0 0.0
      %1016 = vmatprep.subr.mxu0 0.0
      %1017 = vmatpush1.xpose.msra.mxu0 0.0
      %1018 = vmatprep.subr.mxu0 0.0
      %1019 = vmatpush1.xpose.msra.mxu0 0.0
      %1020 = vmatprep.subr.mxu0 0.0
      %1021 = vmatpush1.xpose.msra.mxu0 0.0
      %1022 = vmatprep.subr.mxu0 0.0
      %1023 = vmatpush1.xpose.msra.mxu0 0.0
      %1024 = vmatprep.mubr.f32.mxu0 0.0
      %1025 = vmatmul.mubr.f32.gmra.mrb[0].mxu0 %v956
      %v1026 = vpop.f32.mrb[0].mxu0
      %v1027 = vadd.f32 0.0, %v1026
      %v1028 = vpop.f32.mrb[0].mxu0
      %1029 = vdwg.mxu0
      %1030 = vrot.lane.b32.xlu0 %v339, 120
      %v1031 = vpop.permute.xlu0 %1030
      %1032 = vrot.lane.b32.xlu0 %v339, 88
      %v1033 = vpop.permute.xlu0 %1032
      %v1034 = vsel %vm434, %v1031, 0
      %v1036 = vsel %vm434, %v1033, 0
      %1038 = vmatprep.subr.mxu0 0.0
      %1039 = vmatpush1.xpose.msra.mxu0 %v1036
      %1040 = vmatprep.subr.mxu0 0.0
      %1041 = vmatpush1.xpose.msra.mxu0 0.0
      %1042 = vmatprep.subr.mxu0 0.0
      %1043 = vmatpush1.xpose.msra.mxu0 0.0
      %1044 = vmatprep.subr.mxu0 0.0
      %1045 = vmatpush1.xpose.msra.mxu0 0.0
      %1046 = vmatprep.subr.mxu0 0.0
      %1047 = vmatpush1.xpose.msra.mxu0 0.0
      %1048 = vmatprep.subr.mxu0 0.0
      %1049 = vmatpush1.xpose.msra.mxu0 0.0
      %1050 = vmatprep.subr.mxu0 0.0
      %1051 = vmatpush1.xpose.msra.mxu0 0.0
      %1052 = vmatprep.subr.mxu0 0.0
      %1053 = vmatpush1.xpose.msra.mxu0 0.0
      %1054 = vmatprep.subr.mxu0 0.0
      %1055 = vmatpush1.xpose.msra.mxu0 0.0
      %1056 = vmatprep.subr.mxu0 0.0
      %1057 = vmatpush1.xpose.msra.mxu0 0.0
      %1058 = vmatprep.subr.mxu0 0.0
      %1059 = vmatpush1.xpose.msra.mxu0 0.0
      %1060 = vmatprep.subr.mxu0 0.0
      %1061 = vmatpush1.xpose.msra.mxu0 0.0
      %1062 = vmatprep.subr.mxu0 0.0
      %1063 = vmatpush1.xpose.msra.mxu0 0.0
      %1064 = vmatprep.subr.mxu0 0.0
      %1065 = vmatpush1.xpose.msra.mxu0 0.0
      %1066 = vmatprep.subr.mxu0 0.0
      %1067 = vmatpush1.xpose.msra.mxu0 0.0
      %1068 = vmatprep.subr.mxu0 0.0
      %1069 = vmatpush1.xpose.msra.mxu0 0.0
      %1070 = vmatprep.subr.mxu0 0.0
      %1071 = vmatpush1.xpose.msra.mxu0 0.0
      %1072 = vmatprep.subr.mxu0 0.0
      %1073 = vmatpush1.xpose.msra.mxu0 0.0
      %1074 = vmatprep.subr.mxu0 0.0
      %1075 = vmatpush1.xpose.msra.mxu0 0.0
      %1076 = vmatprep.subr.mxu0 0.0
      %1077 = vmatpush1.xpose.msra.mxu0 0.0
      %1078 = vmatprep.subr.mxu0 0.0
      %1079 = vmatpush1.xpose.msra.mxu0 0.0
      %1080 = vmatprep.subr.mxu0 0.0
      %1081 = vmatpush1.xpose.msra.mxu0 0.0
      %1082 = vmatprep.subr.mxu0 0.0
      %1083 = vmatpush1.xpose.msra.mxu0 0.0
      %1084 = vmatprep.subr.mxu0 0.0
      %1085 = vmatpush1.xpose.msra.mxu0 0.0
      %1086 = vmatprep.subr.mxu0 0.0
      %1087 = vmatpush1.xpose.msra.mxu0 0.0
      %1088 = vmatprep.subr.mxu0 0.0
      %1089 = vmatpush1.xpose.msra.mxu0 0.0
      %1090 = vmatprep.subr.mxu0 0.0
      %1091 = vmatpush1.xpose.msra.mxu0 0.0
      %1092 = vmatprep.subr.mxu0 0.0
      %1093 = vmatpush1.xpose.msra.mxu0 0.0
      %1094 = vmatprep.subr.mxu0 0.0
      %1095 = vmatpush1.xpose.msra.mxu0 0.0
      %1096 = vmatprep.subr.mxu0 0.0
      %1097 = vmatpush1.xpose.msra.mxu0 0.0
      %1098 = vmatprep.subr.mxu0 0.0
      %1099 = vmatpush1.xpose.msra.mxu0 0.0
      %1100 = vmatprep.subr.mxu0 0.0
      %1101 = vmatpush1.xpose.msra.mxu0 0.0
      %1102 = vmatprep.mubr.f32.mxu0 0.0
      %1103 = vmatmul.mubr.f32.gmra.mrb[0].mxu0 %v1034
      %v1104 = vpop.f32.mrb[0].mxu0
      %v1105 = vadd.f32 0.0, %v1104
      %v1106 = vpop.f32.mrb[0].mxu0
      %1107 = vdwg.mxu0
      %v1108 = vsel %vm434, %v871, -inf
      %1109 = vmax.xlane.f32.xlu0 %v1108
      %v1110 = vpop.xlane.xlu0 %1109
      %v1111 = vsel %vm434, %v949, -inf
      %1112 = vmax.xlane.f32.xlu0 %v1111
      %v1113 = vpop.xlane.xlu0 %1112
      %v1114 = vsel %vm434, %v1027, -inf
      %1115 = vmax.xlane.f32.xlu0 %v1114
      %v1116 = vpop.xlane.xlu0 %1115
      %v1117 = vsel %vm434, %v1105, -inf
      %1118 = vmax.xlane.f32.xlu0 %v1117
      %v1119 = vpop.xlane.xlu0 %1118
      %v1120 = vsub.f32 %v871, %v1110
      %v1121 = vsub.f32 %v949, %v1113
      %v1122 = vsub.f32 %v1027, %v1116
      %v1123 = vsub.f32 %v1105, %v1119
      %v1124 = vmul.f32 %v1120, 1.442695
      %v1125 = vpow.pop %v1124
      %v1126 = vmul.f32 %v1121, 1.442695
      %v1127 = vpow.pop %v1126
      %v1128 = vmul.f32 %v1122, 1.442695
      %v1129 = vpow.pop %v1128
      %v1130 = vmul.f32 %v1123, 1.442695
      %v1131 = vpow.pop %v1130
      %v1132 = vsel %vm434, %v1125, 0.0
      %1133 = vadd.xlane.f32.xlu0 %v1132
      %v1134 = vpop.xlane.xlu0 %1133
      %v1135 = vsel %vm434, %v1127, 0.0
      %1136 = vadd.xlane.f32.xlu0 %v1135
      %v1137 = vpop.xlane.xlu0 %1136
      %v1138 = vsel %vm434, %v1129, 0.0
      %1139 = vadd.xlane.f32.xlu0 %v1138
      %v1140 = vpop.xlane.xlu0 %1139
      %v1141 = vsel %vm434, %v1131, 0.0
      %1142 = vadd.xlane.f32.xlu0 %v1141
      %v1143 = vpop.xlane.xlu0 %1142
      %v1144 = vrcp.pop %v1134
      %v1145 = vrcp.pop %v1137
      %v1146 = vrcp.pop %v1140
      %v1147 = vrcp.pop %v1143
      %v1148 = vmul.f32 %v1134, %v1144
      %v1149 = vmul.f32 %v1137, %v1145
      %v1150 = vmul.f32 %v1140, %v1146
      %v1151 = vmul.f32 %v1143, %v1147
      %v1152 = vsub.f32 2.0, %v1148
      %v1153 = vsub.f32 2.0, %v1149
      %v1154 = vsub.f32 2.0, %v1150
      %v1155 = vsub.f32 2.0, %v1151
      %v1156 = vmul.f32 %v1144, %v1152
      %v1157 = vmul.f32 %v1145, %v1153
      %v1158 = vmul.f32 %v1146, %v1154
      %v1159 = vmul.f32 %v1147, %v1155
      %v1160 = vmul.f32 %v1125, %v1156
      %v1161 = vmul.f32 %v1127, %v1157
      %v1162 = vmul.f32 %v1129, %v1158
      %v1163 = vmul.f32 %v1131, %v1159
      %1165 = vrot.lane.b32.xlu0 %v413, 96
      %v1166 = vpop.permute.xlu0 %1165
      %v1169 = vsel %vm434, %v1160, 0
      %1171 = vmatprep.subr.mxu0 0.0
      %1172 = vmatpush1.msra.mxu0 %v1166
      %1173 = vmatprep.subr.mxu0 0.0
      %1174 = vmatpush1.msra.mxu0 0.0
      %1175 = vmatprep.subr.mxu0 0.0
      %1176 = vmatpush1.msra.mxu0 0.0
      %1177 = vmatprep.subr.mxu0 0.0
      %1178 = vmatpush1.msra.mxu0 0.0
      %1179 = vmatprep.subr.mxu0 0.0
      %1180 = vmatpush1.msra.mxu0 0.0
      %1181 = vmatprep.subr.mxu0 0.0
      %1182 = vmatpush1.msra.mxu0 0.0
      %1183 = vmatprep.subr.mxu0 0.0
      %1184 = vmatpush1.msra.mxu0 0.0
      %1185 = vmatprep.subr.mxu0 0.0
      %1186 = vmatpush1.msra.mxu0 0.0
      %1187 = vmatprep.subr.mxu0 0.0
      %1188 = vmatpush1.msra.mxu0 0.0
      %1189 = vmatprep.subr.mxu0 0.0
      %1190 = vmatpush1.msra.mxu0 0.0
      %1191 = vmatprep.subr.mxu0 0.0
      %1192 = vmatpush1.msra.mxu0 0.0
      %1193 = vmatprep.subr.mxu0 0.0
      %1194 = vmatpush1.msra.mxu0 0.0
      %1195 = vmatprep.subr.mxu0 0.0
      %1196 = vmatpush1.msra.mxu0 0.0
      %1197 = vmatprep.subr.mxu0 0.0
      %1198 = vmatpush1.msra.mxu0 0.0
      %1199 = vmatprep.subr.mxu0 0.0
      %1200 = vmatpush1.msra.mxu0 0.0
      %1201 = vmatprep.subr.mxu0 0.0
      %1202 = vmatpush1.msra.mxu0 0.0
      %1203 = vmatprep.subr.mxu0 0.0
      %1204 = vmatpush1.msra.mxu0 0.0
      %1205 = vmatprep.subr.mxu0 0.0
      %1206 = vmatpush1.msra.mxu0 0.0
      %1207 = vmatprep.subr.mxu0 0.0
      %1208 = vmatpush1.msra.mxu0 0.0
      %1209 = vmatprep.subr.mxu0 0.0
      %1210 = vmatpush1.msra.mxu0 0.0
      %1211 = vmatprep.subr.mxu0 0.0
      %1212 = vmatpush1.msra.mxu0 0.0
      %1213 = vmatprep.subr.mxu0 0.0
      %1214 = vmatpush1.msra.mxu0 0.0
      %1215 = vmatprep.subr.mxu0 0.0
      %1216 = vmatpush1.msra.mxu0 0.0
      %1217 = vmatprep.subr.mxu0 0.0
      %1218 = vmatpush1.msra.mxu0 0.0
      %1219 = vmatprep.subr.mxu0 0.0
      %1220 = vmatpush1.msra.mxu0 0.0
      %1221 = vmatprep.subr.mxu0 0.0
      %1222 = vmatpush1.msra.mxu0 0.0
      %1223 = vmatprep.subr.mxu0 0.0
      %1224 = vmatpush1.msra.mxu0 0.0
      %1225 = vmatprep.subr.mxu0 0.0
      %1226 = vmatpush1.msra.mxu0 0.0
      %1227 = vmatprep.subr.mxu0 0.0
      %1228 = vmatpush1.msra.mxu0 0.0
      %1229 = vmatprep.subr.mxu0 0.0
      %1230 = vmatpush1.msra.mxu0 0.0
      %1231 = vmatprep.subr.mxu0 0.0
      %1232 = vmatpush1.msra.mxu0 0.0
      %1233 = vmatprep.subr.mxu0 0.0
      %1234 = vmatpush1.msra.mxu0 0.0
      %1235 = vmatprep.mubr.f32.mxu0 0.0
      %1236 = vmatmul.mubr.f32.gmra.mrb[0].mxu0 %v1169
      %v1237 = vpop.f32.mrb[0].mxu0
      %v1238 = vadd.f32 0.0, %v1237
      %v1239 = vpop.f32.mrb[0].mxu0
      %1240 = vdwg.mxu0
      %1242 = vrot.lane.b32.xlu0 %v418, 96
      %v1243 = vpop.permute.xlu0 %1242
      %v1246 = vsel %vm434, %v1161, 0
      %1248 = vmatprep.subr.mxu0 0.0
      %1249 = vmatpush1.msra.mxu0 %v1243
      %1250 = vmatprep.subr.mxu0 0.0
      %1251 = vmatpush1.msra.mxu0 0.0
      %1252 = vmatprep.subr.mxu0 0.0
      %1253 = vmatpush1.msra.mxu0 0.0
      %1254 = vmatprep.subr.mxu0 0.0
      %1255 = vmatpush1.msra.mxu0 0.0
      %1256 = vmatprep.subr.mxu0 0.0
      %1257 = vmatpush1.msra.mxu0 0.0
      %1258 = vmatprep.subr.mxu0 0.0
      %1259 = vmatpush1.msra.mxu0 0.0
      %1260 = vmatprep.subr.mxu0 0.0
      %1261 = vmatpush1.msra.mxu0 0.0
      %1262 = vmatprep.subr.mxu0 0.0
      %1263 = vmatpush1.msra.mxu0 0.0
      %1264 = vmatprep.subr.mxu0 0.0
      %1265 = vmatpush1.msra.mxu0 0.0
      %1266 = vmatprep.subr.mxu0 0.0
      %1267 = vmatpush1.msra.mxu0 0.0
      %1268 = vmatprep.subr.mxu0 0.0
      %1269 = vmatpush1.msra.mxu0 0.0
      %1270 = vmatprep.subr.mxu0 0.0
      %1271 = vmatpush1.msra.mxu0 0.0
      %1272 = vmatprep.subr.mxu0 0.0
      %1273 = vmatpush1.msra.mxu0 0.0
      %1274 = vmatprep.subr.mxu0 0.0
      %1275 = vmatpush1.msra.mxu0 0.0
      %1276 = vmatprep.subr.mxu0 0.0
      %1277 = vmatpush1.msra.mxu0 0.0
      %1278 = vmatprep.subr.mxu0 0.0
      %1279 = vmatpush1.msra.mxu0 0.0
      %1280 = vmatprep.subr.mxu0 0.0
      %1281 = vmatpush1.msra.mxu0 0.0
      %1282 = vmatprep.subr.mxu0 0.0
      %1283 = vmatpush1.msra.mxu0 0.0
      %1284 = vmatprep.subr.mxu0 0.0
      %1285 = vmatpush1.msra.mxu0 0.0
      %1286 = vmatprep.subr.mxu0 0.0
      %1287 = vmatpush1.msra.mxu0 0.0
      %1288 = vmatprep.subr.mxu0 0.0
      %1289 = vmatpush1.msra.mxu0 0.0
      %1290 = vmatprep.subr.mxu0 0.0
      %1291 = vmatpush1.msra.mxu0 0.0
      %1292 = vmatprep.subr.mxu0 0.0
      %1293 = vmatpush1.msra.mxu0 0.0
      %1294 = vmatprep.subr.mxu0 0.0
      %1295 = vmatpush1.msra.mxu0 0.0
      %1296 = vmatprep.subr.mxu0 0.0
      %1297 = vmatpush1.msra.mxu0 0.0
      %1298 = vmatprep.subr.mxu0 0.0
      %1299 = vmatpush1.msra.mxu0 0.0
      %1300 = vmatprep.subr.mxu0 0.0
      %1301 = vmatpush1.msra.mxu0 0.0
      %1302 = vmatprep.subr.mxu0 0.0
      %1303 = vmatpush1.msra.mxu0 0.0
      %1304 = vmatprep.subr.mxu0 0.0
      %1305 = vmatpush1.msra.mxu0 0.0
      %1306 = vmatprep.subr.mxu0 0.0
      %1307 = vmatpush1.msra.mxu0 0.0
      %1308 = vmatprep.subr.mxu0 0.0
      %1309 = vmatpush1.msra.mxu0 0.0
      %1310 = vmatprep.subr.mxu0 0.0
      %1311 = vmatpush1.msra.mxu0 0.0
      %1312 = vmatprep.mubr.f32.mxu0 0.0
      %1313 = vmatmul.mubr.f32.gmra.mrb[0].mxu0 %v1246
      %v1314 = vpop.f32.mrb[0].mxu0
      %v1315 = vadd.f32 0.0, %v1314
      %v1316 = vpop.f32.mrb[0].mxu0
      %1317 = vdwg.mxu0
      %1319 = vrot.lane.b32.xlu0 %v423, 96
      %v1320 = vpop.permute.xlu0 %1319
      %v1323 = vsel %vm434, %v1162, 0
      %1325 = vmatprep.subr.mxu0 0.0
      %1326 = vmatpush1.msra.mxu0 %v1320
      %1327 = vmatprep.subr.mxu0 0.0
      %1328 = vmatpush1.msra.mxu0 0.0
      %1329 = vmatprep.subr.mxu0 0.0
      %1330 = vmatpush1.msra.mxu0 0.0
      %1331 = vmatprep.subr.mxu0 0.0
      %1332 = vmatpush1.msra.mxu0 0.0
      %1333 = vmatprep.subr.mxu0 0.0
      %1334 = vmatpush1.msra.mxu0 0.0
      %1335 = vmatprep.subr.mxu0 0.0
      %1336 = vmatpush1.msra.mxu0 0.0
      %1337 = vmatprep.subr.mxu0 0.0
      %1338 = vmatpush1.msra.mxu0 0.0
      %1339 = vmatprep.subr.mxu0 0.0
      %1340 = vmatpush1.msra.mxu0 0.0
      %1341 = vmatprep.subr.mxu0 0.0
      %1342 = vmatpush1.msra.mxu0 0.0
      %1343 = vmatprep.subr.mxu0 0.0
      %1344 = vmatpush1.msra.mxu0 0.0
      %1345 = vmatprep.subr.mxu0 0.0
      %1346 = vmatpush1.msra.mxu0 0.0
      %1347 = vmatprep.subr.mxu0 0.0
      %1348 = vmatpush1.msra.mxu0 0.0
      %1349 = vmatprep.subr.mxu0 0.0
      %1350 = vmatpush1.msra.mxu0 0.0
      %1351 = vmatprep.subr.mxu0 0.0
      %1352 = vmatpush1.msra.mxu0 0.0
      %1353 = vmatprep.subr.mxu0 0.0
      %1354 = vmatpush1.msra.mxu0 0.0
      %1355 = vmatprep.subr.mxu0 0.0
      %1356 = vmatpush1.msra.mxu0 0.0
      %1357 = vmatprep.subr.mxu0 0.0
      %1358 = vmatpush1.msra.mxu0 0.0
      %1359 = vmatprep.subr.mxu0 0.0
      %1360 = vmatpush1.msra.mxu0 0.0
      %1361 = vmatprep.subr.mxu0 0.0
      %1362 = vmatpush1.msra.mxu0 0.0
      %1363 = vmatprep.subr.mxu0 0.0
      %1364 = vmatpush1.msra.mxu0 0.0
      %1365 = vmatprep.subr.mxu0 0.0
      %1366 = vmatpush1.msra.mxu0 0.0
      %1367 = vmatprep.subr.mxu0 0.0
      %1368 = vmatpush1.msra.mxu0 0.0
      %1369 = vmatprep.subr.mxu0 0.0
      %1370 = vmatpush1.msra.mxu0 0.0
      %1371 = vmatprep.subr.mxu0 0.0
      %1372 = vmatpush1.msra.mxu0 0.0
      %1373 = vmatprep.subr.mxu0 0.0
      %1374 = vmatpush1.msra.mxu0 0.0
      %1375 = vmatprep.subr.mxu0 0.0
      %1376 = vmatpush1.msra.mxu0 0.0
      %1377 = vmatprep.subr.mxu0 0.0
      %1378 = vmatpush1.msra.mxu0 0.0
      %1379 = vmatprep.subr.mxu0 0.0
      %1380 = vmatpush1.msra.mxu0 0.0
      %1381 = vmatprep.subr.mxu0 0.0
      %1382 = vmatpush1.msra.mxu0 0.0
      %1383 = vmatprep.subr.mxu0 0.0
      %1384 = vmatpush1.msra.mxu0 0.0
      %1385 = vmatprep.subr.mxu0 0.0
      %1386 = vmatpush1.msra.mxu0 0.0
      %1387 = vmatprep.subr.mxu0 0.0
      %1388 = vmatpush1.msra.mxu0 0.0
      %1389 = vmatprep.mubr.f32.mxu0 0.0
      %1390 = vmatmul.mubr.f32.gmra.mrb[0].mxu0 %v1323
      %v1391 = vpop.f32.mrb[0].mxu0
      %v1392 = vadd.f32 0.0, %v1391
      %v1393 = vpop.f32.mrb[0].mxu0
      %1394 = vdwg.mxu0
      %1396 = vrot.lane.b32.xlu0 %v428, 96
      %v1397 = vpop.permute.xlu0 %1396
      %v1400 = vsel %vm434, %v1163, 0
      %1402 = vmatprep.subr.mxu0 0.0
      %1403 = vmatpush1.msra.mxu0 %v1397
      %1404 = vmatprep.subr.mxu0 0.0
      %1405 = vmatpush1.msra.mxu0 0.0
      %1406 = vmatprep.subr.mxu0 0.0
      %1407 = vmatpush1.msra.mxu0 0.0
      %1408 = vmatprep.subr.mxu0 0.0
      %1409 = vmatpush1.msra.mxu0 0.0
      %1410 = vmatprep.subr.mxu0 0.0
      %1411 = vmatpush1.msra.mxu0 0.0
      %1412 = vmatprep.subr.mxu0 0.0
      %1413 = vmatpush1.msra.mxu0 0.0
      %1414 = vmatprep.subr.mxu0 0.0
      %1415 = vmatpush1.msra.mxu0 0.0
      %1416 = vmatprep.subr.mxu0 0.0
      %1417 = vmatpush1.msra.mxu0 0.0
      %1418 = vmatprep.subr.mxu0 0.0
      %1419 = vmatpush1.msra.mxu0 0.0
      %1420 = vmatprep.subr.mxu0 0.0
      %1421 = vmatpush1.msra.mxu0 0.0
      %1422 = vmatprep.subr.mxu0 0.0
      %1423 = vmatpush1.msra.mxu0 0.0
      %1424 = vmatprep.subr.mxu0 0.0
      %1425 = vmatpush1.msra.mxu0 0.0
      %1426 = vmatprep.subr.mxu0 0.0
      %1427 = vmatpush1.msra.mxu0 0.0
      %1428 = vmatprep.subr.mxu0 0.0
      %1429 = vmatpush1.msra.mxu0 0.0
      %1430 = vmatprep.subr.mxu0 0.0
      %1431 = vmatpush1.msra.mxu0 0.0
      %1432 = vmatprep.subr.mxu0 0.0
      %1433 = vmatpush1.msra.mxu0 0.0
      %1434 = vmatprep.subr.mxu0 0.0
      %1435 = vmatpush1.msra.mxu0 0.0
      %1436 = vmatprep.subr.mxu0 0.0
      %1437 = vmatpush1.msra.mxu0 0.0
      %1438 = vmatprep.subr.mxu0 0.0
      %1439 = vmatpush1.msra.mxu0 0.0
      %1440 = vmatprep.subr.mxu0 0.0
      %1441 = vmatpush1.msra.mxu0 0.0
      %1442 = vmatprep.subr.mxu0 0.0
      %1443 = vmatpush1.msra.mxu0 0.0
      %1444 = vmatprep.subr.mxu0 0.0
      %1445 = vmatpush1.msra.mxu0 0.0
      %1446 = vmatprep.subr.mxu0 0.0
      %1447 = vmatpush1.msra.mxu0 0.0
      %1448 = vmatprep.subr.mxu0 0.0
      %1449 = vmatpush1.msra.mxu0 0.0
      %1450 = vmatprep.subr.mxu0 0.0
      %1451 = vmatpush1.msra.mxu0 0.0
      %1452 = vmatprep.subr.mxu0 0.0
      %1453 = vmatpush1.msra.mxu0 0.0
      %1454 = vmatprep.subr.mxu0 0.0
      %1455 = vmatpush1.msra.mxu0 0.0
      %1456 = vmatprep.subr.mxu0 0.0
      %1457 = vmatpush1.msra.mxu0 0.0
      %1458 = vmatprep.subr.mxu0 0.0
      %1459 = vmatpush1.msra.mxu0 0.0
      %1460 = vmatprep.subr.mxu0 0.0
      %1461 = vmatpush1.msra.mxu0 0.0
      %1462 = vmatprep.subr.mxu0 0.0
      %1463 = vmatpush1.msra.mxu0 0.0
      %1464 = vmatprep.subr.mxu0 0.0
      %1465 = vmatpush1.msra.mxu0 0.0
      %1466 = vmatprep.mubr.f32.mxu0 0.0
      %1467 = vmatmul.mubr.f32.gmra.mrb[0].mxu0 %v1400
      %v1468 = vpop.f32.mrb[0].mxu0
      %v1469 = vadd.f32 0.0, %v1468
      %v1470 = vpop.f32.mrb[0].mxu0
      %1471 = vdwg.mxu0
      %v1473 = vsel %vm434, %v792, 0
      %1475 = vmatprep.subr.mxu0 0.0
      %1476 = vmatpush1.msra.mxu0 %v413
      %1477 = vmatprep.subr.mxu0 0.0
      %1478 = vmatpush1.msra.mxu0 0.0
      %1479 = vmatprep.subr.mxu0 0.0
      %1480 = vmatpush1.msra.mxu0 0.0
      %1481 = vmatprep.subr.mxu0 0.0
      %1482 = vmatpush1.msra.mxu0 0.0
      %1483 = vmatprep.subr.mxu0 0.0
      %1484 = vmatpush1.msra.mxu0 0.0
      %1485 = vmatprep.subr.mxu0 0.0
      %1486 = vmatpush1.msra.mxu0 0.0
      %1487 = vmatprep.subr.mxu0 0.0
      %1488 = vmatpush1.msra.mxu0 0.0
      %1489 = vmatprep.subr.mxu0 0.0
      %1490 = vmatpush1.msra.mxu0 0.0
      %1491 = vmatprep.subr.mxu0 0.0
      %1492 = vmatpush1.msra.mxu0 0.0
      %1493 = vmatprep.subr.mxu0 0.0
      %1494 = vmatpush1.msra.mxu0 0.0
      %1495 = vmatprep.subr.mxu0 0.0
      %1496 = vmatpush1.msra.mxu0 0.0
      %1497 = vmatprep.subr.mxu0 0.0
      %1498 = vmatpush1.msra.mxu0 0.0
      %1499 = vmatprep.subr.mxu0 0.0
      %1500 = vmatpush1.msra.mxu0 0.0
      %1501 = vmatprep.subr.mxu0 0.0
      %1502 = vmatpush1.msra.mxu0 0.0
      %1503 = vmatprep.subr.mxu0 0.0
      %1504 = vmatpush1.msra.mxu0 0.0
      %1505 = vmatprep.subr.mxu0 0.0
      %1506 = vmatpush1.msra.mxu0 0.0
      %1507 = vmatprep.subr.mxu0 0.0
      %1508 = vmatpush1.msra.mxu0 0.0
      %1509 = vmatprep.subr.mxu0 0.0
      %1510 = vmatpush1.msra.mxu0 0.0
      %1511 = vmatprep.subr.mxu0 0.0
      %1512 = vmatpush1.msra.mxu0 0.0
      %1513 = vmatprep.subr.mxu0 0.0
      %1514 = vmatpush1.msra.mxu0 0.0
      %1515 = vmatprep.subr.mxu0 0.0
      %1516 = vmatpush1.msra.mxu0 0.0
      %1517 = vmatprep.subr.mxu0 0.0
      %1518 = vmatpush1.msra.mxu0 0.0
      %1519 = vmatprep.subr.mxu0 0.0
      %1520 = vmatpush1.msra.mxu0 0.0
      %1521 = vmatprep.subr.mxu0 0.0
      %1522 = vmatpush1.msra.mxu0 0.0
      %1523 = vmatprep.subr.mxu0 0.0
      %1524 = vmatpush1.msra.mxu0 0.0
      %1525 = vmatprep.subr.mxu0 0.0
      %1526 = vmatpush1.msra.mxu0 0.0
      %1527 = vmatprep.subr.mxu0 0.0
      %1528 = vmatpush1.msra.mxu0 0.0
      %1529 = vmatprep.subr.mxu0 0.0
      %1530 = vmatpush1.msra.mxu0 0.0
      %1531 = vmatprep.subr.mxu0 0.0
      %1532 = vmatpush1.msra.mxu0 0.0
      %1533 = vmatprep.subr.mxu0 0.0
      %1534 = vmatpush1.msra.mxu0 0.0
      %1535 = vmatprep.subr.mxu0 0.0
      %1536 = vmatpush1.msra.mxu0 0.0
      %1537 = vmatprep.subr.mxu0 0.0
      %1538 = vmatpush1.msra.mxu0 0.0
      %1539 = vmatprep.mubr.f32.mxu0 0.0
      %1540 = vmatmul.mubr.f32.gmra.mrb[0].mxu0 %v1473
      %v1541 = vpop.f32.mrb[0].mxu0
      %v1542 = vadd.f32 %v1238, %v1541
      %v1543 = vpop.f32.mrb[0].mxu0
      %1544 = vdwg.mxu0
      %v1546 = vsel %vm434, %v793, 0
      %1548 = vmatprep.subr.mxu0 0.0
      %1549 = vmatpush1.msra.mxu0 %v418
      %1550 = vmatprep.subr.mxu0 0.0
      %1551 = vmatpush1.msra.mxu0 0.0
      %1552 = vmatprep.subr.mxu0 0.0
      %1553 = vmatpush1.msra.mxu0 0.0
      %1554 = vmatprep.subr.mxu0 0.0
      %1555 = vmatpush1.msra.mxu0 0.0
      %1556 = vmatprep.subr.mxu0 0.0
      %1557 = vmatpush1.msra.mxu0 0.0
      %1558 = vmatprep.subr.mxu0 0.0
      %1559 = vmatpush1.msra.mxu0 0.0
      %1560 = vmatprep.subr.mxu0 0.0
      %1561 = vmatpush1.msra.mxu0 0.0
      %1562 = vmatprep.subr.mxu0 0.0
      %1563 = vmatpush1.msra.mxu0 0.0
      %1564 = vmatprep.subr.mxu0 0.0
      %1565 = vmatpush1.msra.mxu0 0.0
      %1566 = vmatprep.subr.mxu0 0.0
      %1567 = vmatpush1.msra.mxu0 0.0
      %1568 = vmatprep.subr.mxu0 0.0
      %1569 = vmatpush1.msra.mxu0 0.0
      %1570 = vmatprep.subr.mxu0 0.0
      %1571 = vmatpush1.msra.mxu0 0.0
      %1572 = vmatprep.subr.mxu0 0.0
      %1573 = vmatpush1.msra.mxu0 0.0
      %1574 = vmatprep.subr.mxu0 0.0
      %1575 = vmatpush1.msra.mxu0 0.0
      %1576 = vmatprep.subr.mxu0 0.0
      %1577 = vmatpush1.msra.mxu0 0.0
      %1578 = vmatprep.subr.mxu0 0.0
      %1579 = vmatpush1.msra.mxu0 0.0
      %1580 = vmatprep.subr.mxu0 0.0
      %1581 = vmatpush1.msra.mxu0 0.0
      %1582 = vmatprep.subr.mxu0 0.0
      %1583 = vmatpush1.msra.mxu0 0.0
      %1584 = vmatprep.subr.mxu0 0.0
      %1585 = vmatpush1.msra.mxu0 0.0
      %1586 = vmatprep.subr.mxu0 0.0
      %1587 = vmatpush1.msra.mxu0 0.0
      %1588 = vmatprep.subr.mxu0 0.0
      %1589 = vmatpush1.msra.mxu0 0.0
      %1590 = vmatprep.subr.mxu0 0.0
      %1591 = vmatpush1.msra.mxu0 0.0
      %1592 = vmatprep.subr.mxu0 0.0
      %1593 = vmatpush1.msra.mxu0 0.0
      %1594 = vmatprep.subr.mxu0 0.0
      %1595 = vmatpush1.msra.mxu0 0.0
      %1596 = vmatprep.subr.mxu0 0.0
      %1597 = vmatpush1.msra.mxu0 0.0
      %1598 = vmatprep.subr.mxu0 0.0
      %1599 = vmatpush1.msra.mxu0 0.0
      %1600 = vmatprep.subr.mxu0 0.0
      %1601 = vmatpush1.msra.mxu0 0.0
      %1602 = vmatprep.subr.mxu0 0.0
      %1603 = vmatpush1.msra.mxu0 0.0
      %1604 = vmatprep.subr.mxu0 0.0
      %1605 = vmatpush1.msra.mxu0 0.0
      %1606 = vmatprep.subr.mxu0 0.0
      %1607 = vmatpush1.msra.mxu0 0.0
      %1608 = vmatprep.subr.mxu0 0.0
      %1609 = vmatpush1.msra.mxu0 0.0
      %1610 = vmatprep.subr.mxu0 0.0
      %1611 = vmatpush1.msra.mxu0 0.0
      %1612 = vmatprep.mubr.f32.mxu0 0.0
      %1613 = vmatmul.mubr.f32.gmra.mrb[0].mxu0 %v1546
      %v1614 = vpop.f32.mrb[0].mxu0
      %v1615 = vadd.f32 %v1315, %v1614
      %v1616 = vpop.f32.mrb[0].mxu0
      %1617 = vdwg.mxu0
      %v1619 = vsel %vm434, %v794, 0
      %1621 = vmatprep.subr.mxu0 0.0
      %1622 = vmatpush1.msra.mxu0 %v423
      %1623 = vmatprep.subr.mxu0 0.0
      %1624 = vmatpush1.msra.mxu0 0.0
      %1625 = vmatprep.subr.mxu0 0.0
      %1626 = vmatpush1.msra.mxu0 0.0
      %1627 = vmatprep.subr.mxu0 0.0
      %1628 = vmatpush1.msra.mxu0 0.0
      %1629 = vmatprep.subr.mxu0 0.0
      %1630 = vmatpush1.msra.mxu0 0.0
      %1631 = vmatprep.subr.mxu0 0.0
      %1632 = vmatpush1.msra.mxu0 0.0
      %1633 = vmatprep.subr.mxu0 0.0
      %1634 = vmatpush1.msra.mxu0 0.0
      %1635 = vmatprep.subr.mxu0 0.0
      %1636 = vmatpush1.msra.mxu0 0.0
      %1637 = vmatprep.subr.mxu0 0.0
      %1638 = vmatpush1.msra.mxu0 0.0
      %1639 = vmatprep.subr.mxu0 0.0
      %1640 = vmatpush1.msra.mxu0 0.0
      %1641 = vmatprep.subr.mxu0 0.0
      %1642 = vmatpush1.msra.mxu0 0.0
      %1643 = vmatprep.subr.mxu0 0.0
      %1644 = vmatpush1.msra.mxu0 0.0
      %1645 = vmatprep.subr.mxu0 0.0
      %1646 = vmatpush1.msra.mxu0 0.0
      %1647 = vmatprep.subr.mxu0 0.0
      %1648 = vmatpush1.msra.mxu0 0.0
      %1649 = vmatprep.subr.mxu0 0.0
      %1650 = vmatpush1.msra.mxu0 0.0
      %1651 = vmatprep.subr.mxu0 0.0
      %1652 = vmatpush1.msra.mxu0 0.0
      %1653 = vmatprep.subr.mxu0 0.0
      %1654 = vmatpush1.msra.mxu0 0.0
      %1655 = vmatprep.subr.mxu0 0.0
      %1656 = vmatpush1.msra.mxu0 0.0
      %1657 = vmatprep.subr.mxu0 0.0
      %1658 = vmatpush1.msra.mxu0 0.0
      %1659 = vmatprep.subr.mxu0 0.0
      %1660 = vmatpush1.msra.mxu0 0.0
      %1661 = vmatprep.subr.mxu0 0.0
      %1662 = vmatpush1.msra.mxu0 0.0
      %1663 = vmatprep.subr.mxu0 0.0
      %1664 = vmatpush1.msra.mxu0 0.0
      %1665 = vmatprep.subr.mxu0 0.0
      %1666 = vmatpush1.msra.mxu0 0.0
      %1667 = vmatprep.subr.mxu0 0.0
      %1668 = vmatpush1.msra.mxu0 0.0
      %1669 = vmatprep.subr.mxu0 0.0
      %1670 = vmatpush1.msra.mxu0 0.0
      %1671 = vmatprep.subr.mxu0 0.0
      %1672 = vmatpush1.msra.mxu0 0.0
      %1673 = vmatprep.subr.mxu0 0.0
      %1674 = vmatpush1.msra.mxu0 0.0
      %1675 = vmatprep.subr.mxu0 0.0
      %1676 = vmatpush1.msra.mxu0 0.0
      %1677 = vmatprep.subr.mxu0 0.0
      %1678 = vmatpush1.msra.mxu0 0.0
      %1679 = vmatprep.subr.mxu0 0.0
      %1680 = vmatpush1.msra.mxu0 0.0
      %1681 = vmatprep.subr.mxu0 0.0
      %1682 = vmatpush1.msra.mxu0 0.0
      %1683 = vmatprep.subr.mxu0 0.0
      %1684 = vmatpush1.msra.mxu0 0.0
      %1685 = vmatprep.mubr.f32.mxu0 0.0
      %1686 = vmatmul.mubr.f32.gmra.mrb[0].mxu0 %v1619
      %v1687 = vpop.f32.mrb[0].mxu0
      %v1688 = vadd.f32 %v1392, %v1687
      %v1689 = vpop.f32.mrb[0].mxu0
      %1690 = vdwg.mxu0
      %v1692 = vsel %vm434, %v795, 0
      %1694 = vmatprep.subr.mxu0 0.0
      %1695 = vmatpush1.msra.mxu0 %v428
      %1696 = vmatprep.subr.mxu0 0.0
      %1697 = vmatpush1.msra.mxu0 0.0
      %1698 = vmatprep.subr.mxu0 0.0
      %1699 = vmatpush1.msra.mxu0 0.0
      %1700 = vmatprep.subr.mxu0 0.0
      %1701 = vmatpush1.msra.mxu0 0.0
      %1702 = vmatprep.subr.mxu0 0.0
      %1703 = vmatpush1.msra.mxu0 0.0
      %1704 = vmatprep.subr.mxu0 0.0
      %1705 = vmatpush1.msra.mxu0 0.0
      %1706 = vmatprep.subr.mxu0 0.0
      %1707 = vmatpush1.msra.mxu0 0.0
      %1708 = vmatprep.subr.mxu0 0.0
      %1709 = vmatpush1.msra.mxu0 0.0
      %1710 = vmatprep.subr.mxu0 0.0
      %1711 = vmatpush1.msra.mxu0 0.0
      %1712 = vmatprep.subr.mxu0 0.0
      %1713 = vmatpush1.msra.mxu0 0.0
      %1714 = vmatprep.subr.mxu0 0.0
      %1715 = vmatpush1.msra.mxu0 0.0
      %1716 = vmatprep.subr.mxu0 0.0
      %1717 = vmatpush1.msra.mxu0 0.0
      %1718 = vmatprep.subr.mxu0 0.0
      %1719 = vmatpush1.msra.mxu0 0.0
      %1720 = vmatprep.subr.mxu0 0.0
      %1721 = vmatpush1.msra.mxu0 0.0
      %1722 = vmatprep.subr.mxu0 0.0
      %1723 = vmatpush1.msra.mxu0 0.0
      %1724 = vmatprep.subr.mxu0 0.0
      %1725 = vmatpush1.msra.mxu0 0.0
      %1726 = vmatprep.subr.mxu0 0.0
      %1727 = vmatpush1.msra.mxu0 0.0
      %1728 = vmatprep.subr.mxu0 0.0
      %1729 = vmatpush1.msra.mxu0 0.0
      %1730 = vmatprep.subr.mxu0 0.0
      %1731 = vmatpush1.msra.mxu0 0.0
      %1732 = vmatprep.subr.mxu0 0.0
      %1733 = vmatpush1.msra.mxu0 0.0
      %1734 = vmatprep.subr.mxu0 0.0
      %1735 = vmatpush1.msra.mxu0 0.0
      %1736 = vmatprep.subr.mxu0 0.0
      %1737 = vmatpush1.msra.mxu0 0.0
      %1738 = vmatprep.subr.mxu0 0.0
      %1739 = vmatpush1.msra.mxu0 0.0
      %1740 = vmatprep.subr.mxu0 0.0
      %1741 = vmatpush1.msra.mxu0 0.0
      %1742 = vmatprep.subr.mxu0 0.0
      %1743 = vmatpush1.msra.mxu0 0.0
      %1744 = vmatprep.subr.mxu0 0.0
      %1745 = vmatpush1.msra.mxu0 0.0
      %1746 = vmatprep.subr.mxu0 0.0
      %1747 = vmatpush1.msra.mxu0 0.0
      %1748 = vmatprep.subr.mxu0 0.0
      %1749 = vmatpush1.msra.mxu0 0.0
      %1750 = vmatprep.subr.mxu0 0.0
      %1751 = vmatpush1.msra.mxu0 0.0
      %1752 = vmatprep.subr.mxu0 0.0
      %1753 = vmatpush1.msra.mxu0 0.0
      %1754 = vmatprep.subr.mxu0 0.0
      %1755 = vmatpush1.msra.mxu0 0.0
      %1756 = vmatprep.subr.mxu0 0.0
      %1757 = vmatpush1.msra.mxu0 0.0
      %1758 = vmatprep.mubr.f32.mxu0 0.0
      %1759 = vmatmul.mubr.f32.gmra.mrb[0].mxu0 %v1692
      %v1760 = vpop.f32.mrb[0].mxu0
      %v1761 = vadd.f32 %v1469, %v1760
      %v1762 = vpop.f32.mrb[0].mxu0
      %1763 = vdwg.mxu0
      %1764 = vrot.lane.b32.xlu0 %v324, 112
      %v1765 = vpop.permute.xlu0 %1764
      %1766 = vrot.lane.b32.xlu0 %v324, 80
      %v1767 = vpop.permute.xlu0 %1766
      %v1768 = vsel %vm434, %v1765, 0
      %v1770 = vsel %vm434, %v1767, 0
      %1772 = vmatprep.subr.mxu0 0.0
      %1773 = vmatpush1.xpose.msra.mxu0 %v1770
      %1774 = vmatprep.subr.mxu0 0.0
      %1775 = vmatpush1.xpose.msra.mxu0 0.0
      %1776 = vmatprep.subr.mxu0 0.0
      %1777 = vmatpush1.xpose.msra.mxu0 0.0
      %1778 = vmatprep.subr.mxu0 0.0
      %1779 = vmatpush1.xpose.msra.mxu0 0.0
      %1780 = vmatprep.subr.mxu0 0.0
      %1781 = vmatpush1.xpose.msra.mxu0 0.0
      %1782 = vmatprep.subr.mxu0 0.0
      %1783 = vmatpush1.xpose.msra.mxu0 0.0
      %1784 = vmatprep.subr.mxu0 0.0
      %1785 = vmatpush1.xpose.msra.mxu0 0.0
      %1786 = vmatprep.subr.mxu0 0.0
      %1787 = vmatpush1.xpose.msra.mxu0 0.0
      %1788 = vmatprep.subr.mxu0 0.0
      %1789 = vmatpush1.xpose.msra.mxu0 0.0
      %1790 = vmatprep.subr.mxu0 0.0
      %1791 = vmatpush1.xpose.msra.mxu0 0.0
      %1792 = vmatprep.subr.mxu0 0.0
      %1793 = vmatpush1.xpose.msra.mxu0 0.0
      %1794 = vmatprep.subr.mxu0 0.0
      %1795 = vmatpush1.xpose.msra.mxu0 0.0
      %1796 = vmatprep.subr.mxu0 0.0
      %1797 = vmatpush1.xpose.msra.mxu0 0.0
      %1798 = vmatprep.subr.mxu0 0.0
      %1799 = vmatpush1.xpose.msra.mxu0 0.0
      %1800 = vmatprep.subr.mxu0 0.0
      %1801 = vmatpush1.xpose.msra.mxu0 0.0
      %1802 = vmatprep.subr.mxu0 0.0
      %1803 = vmatpush1.xpose.msra.mxu0 0.0
      %1804 = vmatprep.subr.mxu0 0.0
      %1805 = vmatpush1.xpose.msra.mxu0 0.0
      %1806 = vmatprep.subr.mxu0 0.0
      %1807 = vmatpush1.xpose.msra.mxu0 0.0
      %1808 = vmatprep.subr.mxu0 0.0
      %1809 = vmatpush1.xpose.msra.mxu0 0.0
      %1810 = vmatprep.subr.mxu0 0.0
      %1811 = vmatpush1.xpose.msra.mxu0 0.0
      %1812 = vmatprep.subr.mxu0 0.0
      %1813 = vmatpush1.xpose.msra.mxu0 0.0
      %1814 = vmatprep.subr.mxu0 0.0
      %1815 = vmatpush1.xpose.msra.mxu0 0.0
      %1816 = vmatprep.subr.mxu0 0.0
      %1817 = vmatpush1.xpose.msra.mxu0 0.0
      %1818 = vmatprep.subr.mxu0 0.0
      %1819 = vmatpush1.xpose.msra.mxu0 0.0
      %1820 = vmatprep.subr.mxu0 0.0
      %1821 = vmatpush1.xpose.msra.mxu0 0.0
      %1822 = vmatprep.subr.mxu0 0.0
      %1823 = vmatpush1.xpose.msra.mxu0 0.0
      %1824 = vmatprep.subr.mxu0 0.0
      %1825 = vmatpush1.xpose.msra.mxu0 0.0
      %1826 = vmatprep.subr.mxu0 0.0
      %1827 = vmatpush1.xpose.msra.mxu0 0.0
      %1828 = vmatprep.subr.mxu0 0.0
      %1829 = vmatpush1.xpose.msra.mxu0 0.0
      %1830 = vmatprep.subr.mxu0 0.0
      %1831 = vmatpush1.xpose.msra.mxu0 0.0
      %1832 = vmatprep.subr.mxu0 0.0
      %1833 = vmatpush1.xpose.msra.mxu0 0.0
      %1834 = vmatprep.subr.mxu0 0.0
      %1835 = vmatpush1.xpose.msra.mxu0 0.0
      %1836 = vmatprep.mubr.f32.mxu0 0.0
      %1837 = vmatmul.mubr.f32.gmra.mrb[0].mxu0 %v1768
      %v1838 = vpop.f32.mrb[0].mxu0
      %v1839 = vadd.f32 0.0, %v1838
      %v1840 = vpop.f32.mrb[0].mxu0
      %1841 = vdwg.mxu0
      %1842 = vrot.lane.b32.xlu0 %v329, 112
      %v1843 = vpop.permute.xlu0 %1842
      %1844 = vrot.lane.b32.xlu0 %v329, 80
      %v1845 = vpop.permute.xlu0 %1844
      %v1846 = vsel %vm434, %v1843, 0
      %v1848 = vsel %vm434, %v1845, 0
      %1850 = vmatprep.subr.mxu0 0.0
      %1851 = vmatpush1.xpose.msra.mxu0 %v1848
      %1852 = vmatprep.subr.mxu0 0.0
      %1853 = vmatpush1.xpose.msra.mxu0 0.0
      %1854 = vmatprep.subr.mxu0 0.0
      %1855 = vmatpush1.xpose.msra.mxu0 0.0
      %1856 = vmatprep.subr.mxu0 0.0
      %1857 = vmatpush1.xpose.msra.mxu0 0.0
      %1858 = vmatprep.subr.mxu0 0.0
      %1859 = vmatpush1.xpose.msra.mxu0 0.0
      %1860 = vmatprep.subr.mxu0 0.0
      %1861 = vmatpush1.xpose.msra.mxu0 0.0
      %1862 = vmatprep.subr.mxu0 0.0
      %1863 = vmatpush1.xpose.msra.mxu0 0.0
      %1864 = vmatprep.subr.mxu0 0.0
      %1865 = vmatpush1.xpose.msra.mxu0 0.0
      %1866 = vmatprep.subr.mxu0 0.0
      %1867 = vmatpush1.xpose.msra.mxu0 0.0
      %1868 = vmatprep.subr.mxu0 0.0
      %1869 = vmatpush1.xpose.msra.mxu0 0.0
      %1870 = vmatprep.subr.mxu0 0.0
      %1871 = vmatpush1.xpose.msra.mxu0 0.0
      %1872 = vmatprep.subr.mxu0 0.0
      %1873 = vmatpush1.xpose.msra.mxu0 0.0
      %1874 = vmatprep.subr.mxu0 0.0
      %1875 = vmatpush1.xpose.msra.mxu0 0.0
      %1876 = vmatprep.subr.mxu0 0.0
      %1877 = vmatpush1.xpose.msra.mxu0 0.0
      %1878 = vmatprep.subr.mxu0 0.0
      %1879 = vmatpush1.xpose.msra.mxu0 0.0
      %1880 = vmatprep.subr.mxu0 0.0
      %1881 = vmatpush1.xpose.msra.mxu0 0.0
      %1882 = vmatprep.subr.mxu0 0.0
      %1883 = vmatpush1.xpose.msra.mxu0 0.0
      %1884 = vmatprep.subr.mxu0 0.0
      %1885 = vmatpush1.xpose.msra.mxu0 0.0
      %1886 = vmatprep.subr.mxu0 0.0
      %1887 = vmatpush1.xpose.msra.mxu0 0.0
      %1888 = vmatprep.subr.mxu0 0.0
      %1889 = vmatpush1.xpose.msra.mxu0 0.0
      %1890 = vmatprep.subr.mxu0 0.0
      %1891 = vmatpush1.xpose.msra.mxu0 0.0
      %1892 = vmatprep.subr.mxu0 0.0
      %1893 = vmatpush1.xpose.msra.mxu0 0.0
      %1894 = vmatprep.subr.mxu0 0.0
      %1895 = vmatpush1.xpose.msra.mxu0 0.0
      %1896 = vmatprep.subr.mxu0 0.0
      %1897 = vmatpush1.xpose.msra.mxu0 0.0
      %1898 = vmatprep.subr.mxu0 0.0
      %1899 = vmatpush1.xpose.msra.mxu0 0.0
      %1900 = vmatprep.subr.mxu0 0.0
      %1901 = vmatpush1.xpose.msra.mxu0 0.0
      %1902 = vmatprep.subr.mxu0 0.0
      %1903 = vmatpush1.xpose.msra.mxu0 0.0
      %1904 = vmatprep.subr.mxu0 0.0
      %1905 = vmatpush1.xpose.msra.mxu0 0.0
      %1906 = vmatprep.subr.mxu0 0.0
      %1907 = vmatpush1.xpose.msra.mxu0 0.0
      %1908 = vmatprep.subr.mxu0 0.0
      %1909 = vmatpush1.xpose.msra.mxu0 0.0
      %1910 = vmatprep.subr.mxu0 0.0
      %1911 = vmatpush1.xpose.msra.mxu0 0.0
      %1912 = vmatprep.subr.mxu0 0.0
      %1913 = vmatpush1.xpose.msra.mxu0 0.0
      %1914 = vmatprep.mubr.f32.mxu0 0.0
      %1915 = vmatmul.mubr.f32.gmra.mrb[0].mxu0 %v1846
      %v1916 = vpop.f32.mrb[0].mxu0
      %v1917 = vadd.f32 0.0, %v1916
      %v1918 = vpop.f32.mrb[0].mxu0
      %1919 = vdwg.mxu0
      %1920 = vrot.lane.b32.xlu0 %v334, 112
      %v1921 = vpop.permute.xlu0 %1920
      %1922 = vrot.lane.b32.xlu0 %v334, 80
      %v1923 = vpop.permute.xlu0 %1922
      %v1924 = vsel %vm434, %v1921, 0
      %v1926 = vsel %vm434, %v1923, 0
      %1928 = vmatprep.subr.mxu0 0.0
      %1929 = vmatpush1.xpose.msra.mxu0 %v1926
      %1930 = vmatprep.subr.mxu0 0.0
      %1931 = vmatpush1.xpose.msra.mxu0 0.0
      %1932 = vmatprep.subr.mxu0 0.0
      %1933 = vmatpush1.xpose.msra.mxu0 0.0
      %1934 = vmatprep.subr.mxu0 0.0
      %1935 = vmatpush1.xpose.msra.mxu0 0.0
      %1936 = vmatprep.subr.mxu0 0.0
      %1937 = vmatpush1.xpose.msra.mxu0 0.0
      %1938 = vmatprep.subr.mxu0 0.0
      %1939 = vmatpush1.xpose.msra.mxu0 0.0
      %1940 = vmatprep.subr.mxu0 0.0
      %1941 = vmatpush1.xpose.msra.mxu0 0.0
      %1942 = vmatprep.subr.mxu0 0.0
      %1943 = vmatpush1.xpose.msra.mxu0 0.0
      %1944 = vmatprep.subr.mxu0 0.0
      %1945 = vmatpush1.xpose.msra.mxu0 0.0
      %1946 = vmatprep.subr.mxu0 0.0
      %1947 = vmatpush1.xpose.msra.mxu0 0.0
      %1948 = vmatprep.subr.mxu0 0.0
      %1949 = vmatpush1.xpose.msra.mxu0 0.0
      %1950 = vmatprep.subr.mxu0 0.0
      %1951 = vmatpush1.xpose.msra.mxu0 0.0
      %1952 = vmatprep.subr.mxu0 0.0
      %1953 = vmatpush1.xpose.msra.mxu0 0.0
      %1954 = vmatprep.subr.mxu0 0.0
      %1955 = vmatpush1.xpose.msra.mxu0 0.0
      %1956 = vmatprep.subr.mxu0 0.0
      %1957 = vmatpush1.xpose.msra.mxu0 0.0
      %1958 = vmatprep.subr.mxu0 0.0
      %1959 = vmatpush1.xpose.msra.mxu0 0.0
      %1960 = vmatprep.subr.mxu0 0.0
      %1961 = vmatpush1.xpose.msra.mxu0 0.0
      %1962 = vmatprep.subr.mxu0 0.0
      %1963 = vmatpush1.xpose.msra.mxu0 0.0
      %1964 = vmatprep.subr.mxu0 0.0
      %1965 = vmatpush1.xpose.msra.mxu0 0.0
      %1966 = vmatprep.subr.mxu0 0.0
      %1967 = vmatpush1.xpose.msra.mxu0 0.0
      %1968 = vmatprep.subr.mxu0 0.0
      %1969 = vmatpush1.xpose.msra.mxu0 0.0
      %1970 = vmatprep.subr.mxu0 0.0
      %1971 = vmatpush1.xpose.msra.mxu0 0.0
      %1972 = vmatprep.subr.mxu0 0.0
      %1973 = vmatpush1.xpose.msra.mxu0 0.0
      %1974 = vmatprep.subr.mxu0 0.0
      %1975 = vmatpush1.xpose.msra.mxu0 0.0
      %1976 = vmatprep.subr.mxu0 0.0
      %1977 = vmatpush1.xpose.msra.mxu0 0.0
      %1978 = vmatprep.subr.mxu0 0.0
      %1979 = vmatpush1.xpose.msra.mxu0 0.0
      %1980 = vmatprep.subr.mxu0 0.0
      %1981 = vmatpush1.xpose.msra.mxu0 0.0
      %1982 = vmatprep.subr.mxu0 0.0
      %1983 = vmatpush1.xpose.msra.mxu0 0.0
      %1984 = vmatprep.subr.mxu0 0.0
      %1985 = vmatpush1.xpose.msra.mxu0 0.0
      %1986 = vmatprep.subr.mxu0 0.0
      %1987 = vmatpush1.xpose.msra.mxu0 0.0
      %1988 = vmatprep.subr.mxu0 0.0
      %1989 = vmatpush1.xpose.msra.mxu0 0.0
      %1990 = vmatprep.subr.mxu0 0.0
      %1991 = vmatpush1.xpose.msra.mxu0 0.0
      %1992 = vmatprep.mubr.f32.mxu0 0.0
      %1993 = vmatmul.mubr.f32.gmra.mrb[0].mxu0 %v1924
      %v1994 = vpop.f32.mrb[0].mxu0
      %v1995 = vadd.f32 0.0, %v1994
      %v1996 = vpop.f32.mrb[0].mxu0
      %1997 = vdwg.mxu0
      %1998 = vrot.lane.b32.xlu0 %v339, 112
      %v1999 = vpop.permute.xlu0 %1998
      %2000 = vrot.lane.b32.xlu0 %v339, 80
      %v2001 = vpop.permute.xlu0 %2000
      %v2002 = vsel %vm434, %v1999, 0
      %v2004 = vsel %vm434, %v2001, 0
      %2006 = vmatprep.subr.mxu0 0.0
      %2007 = vmatpush1.xpose.msra.mxu0 %v2004
      %2008 = vmatprep.subr.mxu0 0.0
      %2009 = vmatpush1.xpose.msra.mxu0 0.0
      %2010 = vmatprep.subr.mxu0 0.0
      %2011 = vmatpush1.xpose.msra.mxu0 0.0
      %2012 = vmatprep.subr.mxu0 0.0
      %2013 = vmatpush1.xpose.msra.mxu0 0.0
      %2014 = vmatprep.subr.mxu0 0.0
      %2015 = vmatpush1.xpose.msra.mxu0 0.0
      %2016 = vmatprep.subr.mxu0 0.0
      %2017 = vmatpush1.xpose.msra.mxu0 0.0
      %2018 = vmatprep.subr.mxu0 0.0
      %2019 = vmatpush1.xpose.msra.mxu0 0.0
      %2020 = vmatprep.subr.mxu0 0.0
      %2021 = vmatpush1.xpose.msra.mxu0 0.0
      %2022 = vmatprep.subr.mxu0 0.0
      %2023 = vmatpush1.xpose.msra.mxu0 0.0
      %2024 = vmatprep.subr.mxu0 0.0
      %2025 = vmatpush1.xpose.msra.mxu0 0.0
      %2026 = vmatprep.subr.mxu0 0.0
      %2027 = vmatpush1.xpose.msra.mxu0 0.0
      %2028 = vmatprep.subr.mxu0 0.0
      %2029 = vmatpush1.xpose.msra.mxu0 0.0
      %2030 = vmatprep.subr.mxu0 0.0
      %2031 = vmatpush1.xpose.msra.mxu0 0.0
      %2032 = vmatprep.subr.mxu0 0.0
      %2033 = vmatpush1.xpose.msra.mxu0 0.0
      %2034 = vmatprep.subr.mxu0 0.0
      %2035 = vmatpush1.xpose.msra.mxu0 0.0
      %2036 = vmatprep.subr.mxu0 0.0
      %2037 = vmatpush1.xpose.msra.mxu0 0.0
      %2038 = vmatprep.subr.mxu0 0.0
      %2039 = vmatpush1.xpose.msra.mxu0 0.0
      %2040 = vmatprep.subr.mxu0 0.0
      %2041 = vmatpush1.xpose.msra.mxu0 0.0
      %2042 = vmatprep.subr.mxu0 0.0
      %2043 = vmatpush1.xpose.msra.mxu0 0.0
      %2044 = vmatprep.subr.mxu0 0.0
      %2045 = vmatpush1.xpose.msra.mxu0 0.0
      %2046 = vmatprep.subr.mxu0 0.0
      %2047 = vmatpush1.xpose.msra.mxu0 0.0
      %2048 = vmatprep.subr.mxu0 0.0
      %2049 = vmatpush1.xpose.msra.mxu0 0.0
      %2050 = vmatprep.subr.mxu0 0.0
      %2051 = vmatpush1.xpose.msra.mxu0 0.0
      %2052 = vmatprep.subr.mxu0 0.0
      %2053 = vmatpush1.xpose.msra.mxu0 0.0
      %2054 = vmatprep.subr.mxu0 0.0
      %2055 = vmatpush1.xpose.msra.mxu0 0.0
      %2056 = vmatprep.subr.mxu0 0.0
      %2057 = vmatpush1.xpose.msra.mxu0 0.0
      %2058 = vmatprep.subr.mxu0 0.0
      %2059 = vmatpush1.xpose.msra.mxu0 0.0
      %2060 = vmatprep.subr.mxu0 0.0
      %2061 = vmatpush1.xpose.msra.mxu0 0.0
      %2062 = vmatprep.subr.mxu0 0.0
      %2063 = vmatpush1.xpose.msra.mxu0 0.0
      %2064 = vmatprep.subr.mxu0 0.0
      %2065 = vmatpush1.xpose.msra.mxu0 0.0
      %2066 = vmatprep.subr.mxu0 0.0
      %2067 = vmatpush1.xpose.msra.mxu0 0.0
      %2068 = vmatprep.subr.mxu0 0.0
      %2069 = vmatpush1.xpose.msra.mxu0 0.0
      %2070 = vmatprep.mubr.f32.mxu0 0.0
      %2071 = vmatmul.mubr.f32.gmra.mrb[0].mxu0 %v2002
      %v2072 = vpop.f32.mrb[0].mxu0
      %v2073 = vadd.f32 0.0, %v2072
      %v2074 = vpop.f32.mrb[0].mxu0
      %2075 = vdwg.mxu0
      %v2076 = vsel %vm434, %v1839, -inf
      %2077 = vmax.xlane.f32.xlu0 %v2076
      %v2078 = vpop.xlane.xlu0 %2077
      %v2079 = vsel %vm434, %v1917, -inf
      %2080 = vmax.xlane.f32.xlu0 %v2079
      %v2081 = vpop.xlane.xlu0 %2080
      %v2082 = vsel %vm434, %v1995, -inf
      %2083 = vmax.xlane.f32.xlu0 %v2082
      %v2084 = vpop.xlane.xlu0 %2083
      %v2085 = vsel %vm434, %v2073, -inf
      %2086 = vmax.xlane.f32.xlu0 %v2085
      %v2087 = vpop.xlane.xlu0 %2086
      %v2088 = vsub.f32 %v1839, %v2078
      %v2089 = vsub.f32 %v1917, %v2081
      %v2090 = vsub.f32 %v1995, %v2084
      %v2091 = vsub.f32 %v2073, %v2087
      %v2092 = vmul.f32 %v2088, 1.442695
      %v2093 = vpow.pop %v2092
      %v2094 = vmul.f32 %v2089, 1.442695
      %v2095 = vpow.pop %v2094
      %v2096 = vmul.f32 %v2090, 1.442695
      %v2097 = vpow.pop %v2096
      %v2098 = vmul.f32 %v2091, 1.442695
      %v2099 = vpow.pop %v2098
      %v2100 = vsel %vm434, %v2093, 0.0
      %2101 = vadd.xlane.f32.xlu0 %v2100
      %v2102 = vpop.xlane.xlu0 %2101
      %v2103 = vsel %vm434, %v2095, 0.0
      %2104 = vadd.xlane.f32.xlu0 %v2103
      %v2105 = vpop.xlane.xlu0 %2104
      %v2106 = vsel %vm434, %v2097, 0.0
      %2107 = vadd.xlane.f32.xlu0 %v2106
      %v2108 = vpop.xlane.xlu0 %2107
      %v2109 = vsel %vm434, %v2099, 0.0
      %2110 = vadd.xlane.f32.xlu0 %v2109
      %v2111 = vpop.xlane.xlu0 %2110
      %v2112 = vrcp.pop %v2102
      %v2113 = vrcp.pop %v2105
      %v2114 = vrcp.pop %v2108
      %v2115 = vrcp.pop %v2111
      %v2116 = vmul.f32 %v2102, %v2112
      %v2117 = vmul.f32 %v2105, %v2113
      %v2118 = vmul.f32 %v2108, %v2114
      %v2119 = vmul.f32 %v2111, %v2115
      %v2120 = vsub.f32 2.0, %v2116
      %v2121 = vsub.f32 2.0, %v2117
      %v2122 = vsub.f32 2.0, %v2118
      %v2123 = vsub.f32 2.0, %v2119
      %v2124 = vmul.f32 %v2112, %v2120
      %v2125 = vmul.f32 %v2113, %v2121
      %v2126 = vmul.f32 %v2114, %v2122
      %v2127 = vmul.f32 %v2115, %v2123
      %v2128 = vmul.f32 %v2093, %v2124
      %v2129 = vmul.f32 %v2095, %v2125
      %v2130 = vmul.f32 %v2097, %v2126
      %v2131 = vmul.f32 %v2099, %v2127
      %2132 = vrot.lane.b32.xlu0 %v413, 64
      %v2133 = vpop.permute.xlu0 %2132
      %v2136 = vsel %vm434, %v2128, 0
      %2138 = vmatprep.subr.mxu0 0.0
      %2139 = vmatpush1.msra.mxu0 %v2133
      %2140 = vmatprep.subr.mxu0 0.0
      %2141 = vmatpush1.msra.mxu0 0.0
      %2142 = vmatprep.subr.mxu0 0.0
      %2143 = vmatpush1.msra.mxu0 0.0
      %2144 = vmatprep.subr.mxu0 0.0
      %2145 = vmatpush1.msra.mxu0 0.0
      %2146 = vmatprep.subr.mxu0 0.0
      %2147 = vmatpush1.msra.mxu0 0.0
      %2148 = vmatprep.subr.mxu0 0.0
      %2149 = vmatpush1.msra.mxu0 0.0
      %2150 = vmatprep.subr.mxu0 0.0
      %2151 = vmatpush1.msra.mxu0 0.0
      %2152 = vmatprep.subr.mxu0 0.0
      %2153 = vmatpush1.msra.mxu0 0.0
      %2154 = vmatprep.subr.mxu0 0.0
      %2155 = vmatpush1.msra.mxu0 0.0
      %2156 = vmatprep.subr.mxu0 0.0
      %2157 = vmatpush1.msra.mxu0 0.0
      %2158 = vmatprep.subr.mxu0 0.0
      %2159 = vmatpush1.msra.mxu0 0.0
      %2160 = vmatprep.subr.mxu0 0.0
      %2161 = vmatpush1.msra.mxu0 0.0
      %2162 = vmatprep.subr.mxu0 0.0
      %2163 = vmatpush1.msra.mxu0 0.0
      %2164 = vmatprep.subr.mxu0 0.0
      %2165 = vmatpush1.msra.mxu0 0.0
      %2166 = vmatprep.subr.mxu0 0.0
      %2167 = vmatpush1.msra.mxu0 0.0
      %2168 = vmatprep.subr.mxu0 0.0
      %2169 = vmatpush1.msra.mxu0 0.0
      %2170 = vmatprep.subr.mxu0 0.0
      %2171 = vmatpush1.msra.mxu0 0.0
      %2172 = vmatprep.subr.mxu0 0.0
      %2173 = vmatpush1.msra.mxu0 0.0
      %2174 = vmatprep.subr.mxu0 0.0
      %2175 = vmatpush1.msra.mxu0 0.0
      %2176 = vmatprep.subr.mxu0 0.0
      %2177 = vmatpush1.msra.mxu0 0.0
      %2178 = vmatprep.subr.mxu0 0.0
      %2179 = vmatpush1.msra.mxu0 0.0
      %2180 = vmatprep.subr.mxu0 0.0
      %2181 = vmatpush1.msra.mxu0 0.0
      %2182 = vmatprep.subr.mxu0 0.0
      %2183 = vmatpush1.msra.mxu0 0.0
      %2184 = vmatprep.subr.mxu0 0.0
      %2185 = vmatpush1.msra.mxu0 0.0
      %2186 = vmatprep.subr.mxu0 0.0
      %2187 = vmatpush1.msra.mxu0 0.0
      %2188 = vmatprep.subr.mxu0 0.0
      %2189 = vmatpush1.msra.mxu0 0.0
      %2190 = vmatprep.subr.mxu0 0.0
      %2191 = vmatpush1.msra.mxu0 0.0
      %2192 = vmatprep.subr.mxu0 0.0
      %2193 = vmatpush1.msra.mxu0 0.0
      %2194 = vmatprep.subr.mxu0 0.0
      %2195 = vmatpush1.msra.mxu0 0.0
      %2196 = vmatprep.subr.mxu0 0.0
      %2197 = vmatpush1.msra.mxu0 0.0
      %2198 = vmatprep.subr.mxu0 0.0
      %2199 = vmatpush1.msra.mxu0 0.0
      %2200 = vmatprep.subr.mxu0 0.0
      %2201 = vmatpush1.msra.mxu0 0.0
      %2202 = vmatprep.mubr.f32.mxu0 0.0
      %2203 = vmatmul.mubr.f32.gmra.mrb[0].mxu0 %v2136
      %v2204 = vpop.f32.mrb[0].mxu0
      %v2205 = vadd.f32 0.0, %v2204
      %v2206 = vpop.f32.mrb[0].mxu0
      %2207 = vdwg.mxu0
      %2208 = vrot.lane.b32.xlu0 %v418, 64
      %v2209 = vpop.permute.xlu0 %2208
      %v2212 = vsel %vm434, %v2129, 0
      %2214 = vmatprep.subr.mxu0 0.0
      %2215 = vmatpush1.msra.mxu0 %v2209
      %2216 = vmatprep.subr.mxu0 0.0
      %2217 = vmatpush1.msra.mxu0 0.0
      %2218 = vmatprep.subr.mxu0 0.0
      %2219 = vmatpush1.msra.mxu0 0.0
      %2220 = vmatprep.subr.mxu0 0.0
      %2221 = vmatpush1.msra.mxu0 0.0
      %2222 = vmatprep.subr.mxu0 0.0
      %2223 = vmatpush1.msra.mxu0 0.0
      %2224 = vmatprep.subr.mxu0 0.0
      %2225 = vmatpush1.msra.mxu0 0.0
      %2226 = vmatprep.subr.mxu0 0.0
      %2227 = vmatpush1.msra.mxu0 0.0
      %2228 = vmatprep.subr.mxu0 0.0
      %2229 = vmatpush1.msra.mxu0 0.0
      %2230 = vmatprep.subr.mxu0 0.0
      %2231 = vmatpush1.msra.mxu0 0.0
      %2232 = vmatprep.subr.mxu0 0.0
      %2233 = vmatpush1.msra.mxu0 0.0
      %2234 = vmatprep.subr.mxu0 0.0
      %2235 = vmatpush1.msra.mxu0 0.0
      %2236 = vmatprep.subr.mxu0 0.0
      %2237 = vmatpush1.msra.mxu0 0.0
      %2238 = vmatprep.subr.mxu0 0.0
      %2239 = vmatpush1.msra.mxu0 0.0
      %2240 = vmatprep.subr.mxu0 0.0
      %2241 = vmatpush1.msra.mxu0 0.0
      %2242 = vmatprep.subr.mxu0 0.0
      %2243 = vmatpush1.msra.mxu0 0.0
      %2244 = vmatprep.subr.mxu0 0.0
      %2245 = vmatpush1.msra.mxu0 0.0
      %2246 = vmatprep.subr.mxu0 0.0
      %2247 = vmatpush1.msra.mxu0 0.0
      %2248 = vmatprep.subr.mxu0 0.0
      %2249 = vmatpush1.msra.mxu0 0.0
      %2250 = vmatprep.subr.mxu0 0.0
      %2251 = vmatpush1.msra.mxu0 0.0
      %2252 = vmatprep.subr.mxu0 0.0
      %2253 = vmatpush1.msra.mxu0 0.0
      %2254 = vmatprep.subr.mxu0 0.0
      %2255 = vmatpush1.msra.mxu0 0.0
      %2256 = vmatprep.subr.mxu0 0.0
      %2257 = vmatpush1.msra.mxu0 0.0
      %2258 = vmatprep.subr.mxu0 0.0
      %2259 = vmatpush1.msra.mxu0 0.0
      %2260 = vmatprep.subr.mxu0 0.0
      %2261 = vmatpush1.msra.mxu0 0.0
      %2262 = vmatprep.subr.mxu0 0.0
      %2263 = vmatpush1.msra.mxu0 0.0
      %2264 = vmatprep.subr.mxu0 0.0
      %2265 = vmatpush1.msra.mxu0 0.0
      %2266 = vmatprep.subr.mxu0 0.0
      %2267 = vmatpush1.msra.mxu0 0.0
      %2268 = vmatprep.subr.mxu0 0.0
      %2269 = vmatpush1.msra.mxu0 0.0
      %2270 = vmatprep.subr.mxu0 0.0
      %2271 = vmatpush1.msra.mxu0 0.0
      %2272 = vmatprep.subr.mxu0 0.0
      %2273 = vmatpush1.msra.mxu0 0.0
      %2274 = vmatprep.subr.mxu0 0.0
      %2275 = vmatpush1.msra.mxu0 0.0
      %2276 = vmatprep.subr.mxu0 0.0
      %2277 = vmatpush1.msra.mxu0 0.0
      %2278 = vmatprep.mubr.f32.mxu0 0.0
      %2279 = vmatmul.mubr.f32.gmra.mrb[0].mxu0 %v2212
      %v2280 = vpop.f32.mrb[0].mxu0
      %v2281 = vadd.f32 0.0, %v2280
      %v2282 = vpop.f32.mrb[0].mxu0
      %2283 = vdwg.mxu0
      %2284 = vrot.lane.b32.xlu0 %v423, 64
      %v2285 = vpop.permute.xlu0 %2284
      %v2288 = vsel %vm434, %v2130, 0
      %2290 = vmatprep.subr.mxu0 0.0
      %2291 = vmatpush1.msra.mxu0 %v2285
      %2292 = vmatprep.subr.mxu0 0.0
      %2293 = vmatpush1.msra.mxu0 0.0
      %2294 = vmatprep.subr.mxu0 0.0
      %2295 = vmatpush1.msra.mxu0 0.0
      %2296 = vmatprep.subr.mxu0 0.0
      %2297 = vmatpush1.msra.mxu0 0.0
      %2298 = vmatprep.subr.mxu0 0.0
      %2299 = vmatpush1.msra.mxu0 0.0
      %2300 = vmatprep.subr.mxu0 0.0
      %2301 = vmatpush1.msra.mxu0 0.0
      %2302 = vmatprep.subr.mxu0 0.0
      %2303 = vmatpush1.msra.mxu0 0.0
      %2304 = vmatprep.subr.mxu0 0.0
      %2305 = vmatpush1.msra.mxu0 0.0
      %2306 = vmatprep.subr.mxu0 0.0
      %2307 = vmatpush1.msra.mxu0 0.0
      %2308 = vmatprep.subr.mxu0 0.0
      %2309 = vmatpush1.msra.mxu0 0.0
      %2310 = vmatprep.subr.mxu0 0.0
      %2311 = vmatpush1.msra.mxu0 0.0
      %2312 = vmatprep.subr.mxu0 0.0
      %2313 = vmatpush1.msra.mxu0 0.0
      %2314 = vmatprep.subr.mxu0 0.0
      %2315 = vmatpush1.msra.mxu0 0.0
      %2316 = vmatprep.subr.mxu0 0.0
      %2317 = vmatpush1.msra.mxu0 0.0
      %2318 = vmatprep.subr.mxu0 0.0
      %2319 = vmatpush1.msra.mxu0 0.0
      %2320 = vmatprep.subr.mxu0 0.0
      %2321 = vmatpush1.msra.mxu0 0.0
      %2322 = vmatprep.subr.mxu0 0.0
      %2323 = vmatpush1.msra.mxu0 0.0
      %2324 = vmatprep.subr.mxu0 0.0
      %2325 = vmatpush1.msra.mxu0 0.0
      %2326 = vmatprep.subr.mxu0 0.0
      %2327 = vmatpush1.msra.mxu0 0.0
      %2328 = vmatprep.subr.mxu0 0.0
      %2329 = vmatpush1.msra.mxu0 0.0
      %2330 = vmatprep.subr.mxu0 0.0
      %2331 = vmatpush1.msra.mxu0 0.0
      %2332 = vmatprep.subr.mxu0 0.0
      %2333 = vmatpush1.msra.mxu0 0.0
      %2334 = vmatprep.subr.mxu0 0.0
      %2335 = vmatpush1.msra.mxu0 0.0
      %2336 = vmatprep.subr.mxu0 0.0
      %2337 = vmatpush1.msra.mxu0 0.0
      %2338 = vmatprep.subr.mxu0 0.0
      %2339 = vmatpush1.msra.mxu0 0.0
      %2340 = vmatprep.subr.mxu0 0.0
      %2341 = vmatpush1.msra.mxu0 0.0
      %2342 = vmatprep.subr.mxu0 0.0
      %2343 = vmatpush1.msra.mxu0 0.0
      %2344 = vmatprep.subr.mxu0 0.0
      %2345 = vmatpush1.msra.mxu0 0.0
      %2346 = vmatprep.subr.mxu0 0.0
      %2347 = vmatpush1.msra.mxu0 0.0
      %2348 = vmatprep.subr.mxu0 0.0
      %2349 = vmatpush1.msra.mxu0 0.0
      %2350 = vmatprep.subr.mxu0 0.0
      %2351 = vmatpush1.msra.mxu0 0.0
      %2352 = vmatprep.subr.mxu0 0.0
      %2353 = vmatpush1.msra.mxu0 0.0
      %2354 = vmatprep.mubr.f32.mxu0 0.0
      %2355 = vmatmul.mubr.f32.gmra.mrb[0].mxu0 %v2288
      %v2356 = vpop.f32.mrb[0].mxu0
      %v2357 = vadd.f32 0.0, %v2356
      %v2358 = vpop.f32.mrb[0].mxu0
      %2359 = vdwg.mxu0
      %2360 = vrot.lane.b32.xlu0 %v428, 64
      %v2361 = vpop.permute.xlu0 %2360
      %v2364 = vsel %vm434, %v2131, 0
      %2366 = vmatprep.subr.mxu0 0.0
      %2367 = vmatpush1.msra.mxu0 %v2361
      %2368 = vmatprep.subr.mxu0 0.0
      %2369 = vmatpush1.msra.mxu0 0.0
      %2370 = vmatprep.subr.mxu0 0.0
      %2371 = vmatpush1.msra.mxu0 0.0
      %2372 = vmatprep.subr.mxu0 0.0
      %2373 = vmatpush1.msra.mxu0 0.0
      %2374 = vmatprep.subr.mxu0 0.0
      %2375 = vmatpush1.msra.mxu0 0.0
      %2376 = vmatprep.subr.mxu0 0.0
      %2377 = vmatpush1.msra.mxu0 0.0
      %2378 = vmatprep.subr.mxu0 0.0
      %2379 = vmatpush1.msra.mxu0 0.0
      %2380 = vmatprep.subr.mxu0 0.0
      %2381 = vmatpush1.msra.mxu0 0.0
      %2382 = vmatprep.subr.mxu0 0.0
      %2383 = vmatpush1.msra.mxu0 0.0
      %2384 = vmatprep.subr.mxu0 0.0
      %2385 = vmatpush1.msra.mxu0 0.0
      %2386 = vmatprep.subr.mxu0 0.0
      %2387 = vmatpush1.msra.mxu0 0.0
      %2388 = vmatprep.subr.mxu0 0.0
      %2389 = vmatpush1.msra.mxu0 0.0
      %2390 = vmatprep.subr.mxu0 0.0
      %2391 = vmatpush1.msra.mxu0 0.0
      %2392 = vmatprep.subr.mxu0 0.0
      %2393 = vmatpush1.msra.mxu0 0.0
      %2394 = vmatprep.subr.mxu0 0.0
      %2395 = vmatpush1.msra.mxu0 0.0
      %2396 = vmatprep.subr.mxu0 0.0
      %2397 = vmatpush1.msra.mxu0 0.0
      %2398 = vmatprep.subr.mxu0 0.0
      %2399 = vmatpush1.msra.mxu0 0.0
      %2400 = vmatprep.subr.mxu0 0.0
      %2401 = vmatpush1.msra.mxu0 0.0
      %2402 = vmatprep.subr.mxu0 0.0
      %2403 = vmatpush1.msra.mxu0 0.0
      %2404 = vmatprep.subr.mxu0 0.0
      %2405 = vmatpush1.msra.mxu0 0.0
      %2406 = vmatprep.subr.mxu0 0.0
      %2407 = vmatpush1.msra.mxu0 0.0
      %2408 = vmatprep.subr.mxu0 0.0
      %2409 = vmatpush1.msra.mxu0 0.0
      %2410 = vmatprep.subr.mxu0 0.0
      %2411 = vmatpush1.msra.mxu0 0.0
      %2412 = vmatprep.subr.mxu0 0.0
      %2413 = vmatpush1.msra.mxu0 0.0
      %2414 = vmatprep.subr.mxu0 0.0
      %2415 = vmatpush1.msra.mxu0 0.0
      %2416 = vmatprep.subr.mxu0 0.0
      %2417 = vmatpush1.msra.mxu0 0.0
      %2418 = vmatprep.subr.mxu0 0.0
      %2419 = vmatpush1.msra.mxu0 0.0
      %2420 = vmatprep.subr.mxu0 0.0
      %2421 = vmatpush1.msra.mxu0 0.0
      %2422 = vmatprep.subr.mxu0 0.0
      %2423 = vmatpush1.msra.mxu0 0.0
      %2424 = vmatprep.subr.mxu0 0.0
      %2425 = vmatpush1.msra.mxu0 0.0
      %2426 = vmatprep.subr.mxu0 0.0
      %2427 = vmatpush1.msra.mxu0 0.0
      %2428 = vmatprep.subr.mxu0 0.0
      %2429 = vmatpush1.msra.mxu0 0.0
      %2430 = vmatprep.mubr.f32.mxu0 0.0
      %2431 = vmatmul.mubr.f32.gmra.mrb[0].mxu0 %v2364
      %v2432 = vpop.f32.mrb[0].mxu0
      %v2433 = vadd.f32 0.0, %v2432
      %v2434 = vpop.f32.mrb[0].mxu0
      %2435 = vdwg.mxu0
      %v2436 = vadd.f32 %v1542, %v2205
      %v2437 = vadd.f32 %v1615, %v2281
      %v2438 = vadd.f32 %v1688, %v2357
      %v2439 = vadd.f32 %v1761, %v2433
      %2440 = vrot.lane.b32.xlu0 %v324, 104
      %v2441 = vpop.permute.xlu0 %2440
      %2442 = vrot.lane.b32.xlu0 %v324, 72
      %v2443 = vpop.permute.xlu0 %2442
      %v2444 = vsel %vm434, %v2441, 0
      %v2446 = vsel %vm434, %v2443, 0
      %2448 = vmatprep.subr.mxu0 0.0
      %2449 = vmatpush1.xpose.msra.mxu0 %v2446
      %2450 = vmatprep.subr.mxu0 0.0
      %2451 = vmatpush1.xpose.msra.mxu0 0.0
      %2452 = vmatprep.subr.mxu0 0.0
      %2453 = vmatpush1.xpose.msra.mxu0 0.0
      %2454 = vmatprep.subr.mxu0 0.0
      %2455 = vmatpush1.xpose.msra.mxu0 0.0
      %2456 = vmatprep.subr.mxu0 0.0
      %2457 = vmatpush1.xpose.msra.mxu0 0.0
      %2458 = vmatprep.subr.mxu0 0.0
      %2459 = vmatpush1.xpose.msra.mxu0 0.0
      %2460 = vmatprep.subr.mxu0 0.0
      %2461 = vmatpush1.xpose.msra.mxu0 0.0
      %2462 = vmatprep.subr.mxu0 0.0
      %2463 = vmatpush1.xpose.msra.mxu0 0.0
      %2464 = vmatprep.subr.mxu0 0.0
      %2465 = vmatpush1.xpose.msra.mxu0 0.0
      %2466 = vmatprep.subr.mxu0 0.0
      %2467 = vmatpush1.xpose.msra.mxu0 0.0
      %2468 = vmatprep.subr.mxu0 0.0
      %2469 = vmatpush1.xpose.msra.mxu0 0.0
      %2470 = vmatprep.subr.mxu0 0.0
      %2471 = vmatpush1.xpose.msra.mxu0 0.0
      %2472 = vmatprep.subr.mxu0 0.0
      %2473 = vmatpush1.xpose.msra.mxu0 0.0
      %2474 = vmatprep.subr.mxu0 0.0
      %2475 = vmatpush1.xpose.msra.mxu0 0.0
      %2476 = vmatprep.subr.mxu0 0.0
      %2477 = vmatpush1.xpose.msra.mxu0 0.0
      %2478 = vmatprep.subr.mxu0 0.0
      %2479 = vmatpush1.xpose.msra.mxu0 0.0
      %2480 = vmatprep.subr.mxu0 0.0
      %2481 = vmatpush1.xpose.msra.mxu0 0.0
      %2482 = vmatprep.subr.mxu0 0.0
      %2483 = vmatpush1.xpose.msra.mxu0 0.0
      %2484 = vmatprep.subr.mxu0 0.0
      %2485 = vmatpush1.xpose.msra.mxu0 0.0
      %2486 = vmatprep.subr.mxu0 0.0
      %2487 = vmatpush1.xpose.msra.mxu0 0.0
      %2488 = vmatprep.subr.mxu0 0.0
      %2489 = vmatpush1.xpose.msra.mxu0 0.0
      %2490 = vmatprep.subr.mxu0 0.0
      %2491 = vmatpush1.xpose.msra.mxu0 0.0
      %2492 = vmatprep.subr.mxu0 0.0
      %2493 = vmatpush1.xpose.msra.mxu0 0.0
      %2494 = vmatprep.subr.mxu0 0.0
      %2495 = vmatpush1.xpose.msra.mxu0 0.0
      %2496 = vmatprep.subr.mxu0 0.0
      %2497 = vmatpush1.xpose.msra.mxu0 0.0
      %2498 = vmatprep.subr.mxu0 0.0
      %2499 = vmatpush1.xpose.msra.mxu0 0.0
      %2500 = vmatprep.subr.mxu0 0.0
      %2501 = vmatpush1.xpose.msra.mxu0 0.0
      %2502 = vmatprep.subr.mxu0 0.0
      %2503 = vmatpush1.xpose.msra.mxu0 0.0
      %2504 = vmatprep.subr.mxu0 0.0
      %2505 = vmatpush1.xpose.msra.mxu0 0.0
      %2506 = vmatprep.subr.mxu0 0.0
      %2507 = vmatpush1.xpose.msra.mxu0 0.0
      %2508 = vmatprep.subr.mxu0 0.0
      %2509 = vmatpush1.xpose.msra.mxu0 0.0
      %2510 = vmatprep.subr.mxu0 0.0
      %2511 = vmatpush1.xpose.msra.mxu0 0.0
      %2512 = vmatprep.mubr.f32.mxu0 0.0
      %2513 = vmatmul.mubr.f32.gmra.mrb[0].mxu0 %v2444
      %v2514 = vpop.f32.mrb[0].mxu0
      %v2515 = vadd.f32 0.0, %v2514
      %v2516 = vpop.f32.mrb[0].mxu0
      %2517 = vdwg.mxu0
      %2518 = vrot.lane.b32.xlu0 %v329, 104
      %v2519 = vpop.permute.xlu0 %2518
      %2520 = vrot.lane.b32.xlu0 %v329, 72
      %v2521 = vpop.permute.xlu0 %2520
      %v2522 = vsel %vm434, %v2519, 0
      %v2524 = vsel %vm434, %v2521, 0
      %2526 = vmatprep.subr.mxu0 0.0
      %2527 = vmatpush1.xpose.msra.mxu0 %v2524
      %2528 = vmatprep.subr.mxu0 0.0
      %2529 = vmatpush1.xpose.msra.mxu0 0.0
      %2530 = vmatprep.subr.mxu0 0.0
      %2531 = vmatpush1.xpose.msra.mxu0 0.0
      %2532 = vmatprep.subr.mxu0 0.0
      %2533 = vmatpush1.xpose.msra.mxu0 0.0
      %2534 = vmatprep.subr.mxu0 0.0
      %2535 = vmatpush1.xpose.msra.mxu0 0.0
      %2536 = vmatprep.subr.mxu0 0.0
      %2537 = vmatpush1.xpose.msra.mxu0 0.0
      %2538 = vmatprep.subr.mxu0 0.0
      %2539 = vmatpush1.xpose.msra.mxu0 0.0
      %2540 = vmatprep.subr.mxu0 0.0
      %2541 = vmatpush1.xpose.msra.mxu0 0.0
      %2542 = vmatprep.subr.mxu0 0.0
      %2543 = vmatpush1.xpose.msra.mxu0 0.0
      %2544 = vmatprep.subr.mxu0 0.0
      %2545 = vmatpush1.xpose.msra.mxu0 0.0
      %2546 = vmatprep.subr.mxu0 0.0
      %2547 = vmatpush1.xpose.msra.mxu0 0.0
      %2548 = vmatprep.subr.mxu0 0.0
      %2549 = vmatpush1.xpose.msra.mxu0 0.0
      %2550 = vmatprep.subr.mxu0 0.0
      %2551 = vmatpush1.xpose.msra.mxu0 0.0
      %2552 = vmatprep.subr.mxu0 0.0
      %2553 = vmatpush1.xpose.msra.mxu0 0.0
      %2554 = vmatprep.subr.mxu0 0.0
      %2555 = vmatpush1.xpose.msra.mxu0 0.0
      %2556 = vmatprep.subr.mxu0 0.0
      %2557 = vmatpush1.xpose.msra.mxu0 0.0
      %2558 = vmatprep.subr.mxu0 0.0
      %2559 = vmatpush1.xpose.msra.mxu0 0.0
      %2560 = vmatprep.subr.mxu0 0.0
      %2561 = vmatpush1.xpose.msra.mxu0 0.0
      %2562 = vmatprep.subr.mxu0 0.0
      %2563 = vmatpush1.xpose.msra.mxu0 0.0
      %2564 = vmatprep.subr.mxu0 0.0
      %2565 = vmatpush1.xpose.msra.mxu0 0.0
      %2566 = vmatprep.subr.mxu0 0.0
      %2567 = vmatpush1.xpose.msra.mxu0 0.0
      %2568 = vmatprep.subr.mxu0 0.0
      %2569 = vmatpush1.xpose.msra.mxu0 0.0
      %2570 = vmatprep.subr.mxu0 0.0
      %2571 = vmatpush1.xpose.msra.mxu0 0.0
      %2572 = vmatprep.subr.mxu0 0.0
      %2573 = vmatpush1.xpose.msra.mxu0 0.0
      %2574 = vmatprep.subr.mxu0 0.0
      %2575 = vmatpush1.xpose.msra.mxu0 0.0
      %2576 = vmatprep.subr.mxu0 0.0
      %2577 = vmatpush1.xpose.msra.mxu0 0.0
      %2578 = vmatprep.subr.mxu0 0.0
      %2579 = vmatpush1.xpose.msra.mxu0 0.0
      %2580 = vmatprep.subr.mxu0 0.0
      %2581 = vmatpush1.xpose.msra.mxu0 0.0
      %2582 = vmatprep.subr.mxu0 0.0
      %2583 = vmatpush1.xpose.msra.mxu0 0.0
      %2584 = vmatprep.subr.mxu0 0.0
      %2585 = vmatpush1.xpose.msra.mxu0 0.0
      %2586 = vmatprep.subr.mxu0 0.0
      %2587 = vmatpush1.xpose.msra.mxu0 0.0
      %2588 = vmatprep.subr.mxu0 0.0
      %2589 = vmatpush1.xpose.msra.mxu0 0.0
      %2590 = vmatprep.mubr.f32.mxu0 0.0
      %2591 = vmatmul.mubr.f32.gmra.mrb[0].mxu0 %v2522
      %v2592 = vpop.f32.mrb[0].mxu0
      %v2593 = vadd.f32 0.0, %v2592
      %v2594 = vpop.f32.mrb[0].mxu0
      %2595 = vdwg.mxu0
      %2596 = vrot.lane.b32.xlu0 %v334, 104
      %v2597 = vpop.permute.xlu0 %2596
      %2598 = vrot.lane.b32.xlu0 %v334, 72
      %v2599 = vpop.permute.xlu0 %2598
      %v2600 = vsel %vm434, %v2597, 0
      %v2602 = vsel %vm434, %v2599, 0
      %2604 = vmatprep.subr.mxu0 0.0
      %2605 = vmatpush1.xpose.msra.mxu0 %v2602
      %2606 = vmatprep.subr.mxu0 0.0
      %2607 = vmatpush1.xpose.msra.mxu0 0.0
      %2608 = vmatprep.subr.mxu0 0.0
      %2609 = vmatpush1.xpose.msra.mxu0 0.0
      %2610 = vmatprep.subr.mxu0 0.0
      %2611 = vmatpush1.xpose.msra.mxu0 0.0
      %2612 = vmatprep.subr.mxu0 0.0
      %2613 = vmatpush1.xpose.msra.mxu0 0.0
      %2614 = vmatprep.subr.mxu0 0.0
      %2615 = vmatpush1.xpose.msra.mxu0 0.0
      %2616 = vmatprep.subr.mxu0 0.0
      %2617 = vmatpush1.xpose.msra.mxu0 0.0
      %2618 = vmatprep.subr.mxu0 0.0
      %2619 = vmatpush1.xpose.msra.mxu0 0.0
      %2620 = vmatprep.subr.mxu0 0.0
      %2621 = vmatpush1.xpose.msra.mxu0 0.0
      %2622 = vmatprep.subr.mxu0 0.0
      %2623 = vmatpush1.xpose.msra.mxu0 0.0
      %2624 = vmatprep.subr.mxu0 0.0
      %2625 = vmatpush1.xpose.msra.mxu0 0.0
      %2626 = vmatprep.subr.mxu0 0.0
      %2627 = vmatpush1.xpose.msra.mxu0 0.0
      %2628 = vmatprep.subr.mxu0 0.0
      %2629 = vmatpush1.xpose.msra.mxu0 0.0
      %2630 = vmatprep.subr.mxu0 0.0
      %2631 = vmatpush1.xpose.msra.mxu0 0.0
      %2632 = vmatprep.subr.mxu0 0.0
      %2633 = vmatpush1.xpose.msra.mxu0 0.0
      %2634 = vmatprep.subr.mxu0 0.0
      %2635 = vmatpush1.xpose.msra.mxu0 0.0
      %2636 = vmatprep.subr.mxu0 0.0
      %2637 = vmatpush1.xpose.msra.mxu0 0.0
      %2638 = vmatprep.subr.mxu0 0.0
      %2639 = vmatpush1.xpose.msra.mxu0 0.0
      %2640 = vmatprep.subr.mxu0 0.0
      %2641 = vmatpush1.xpose.msra.mxu0 0.0
      %2642 = vmatprep.subr.mxu0 0.0
      %2643 = vmatpush1.xpose.msra.mxu0 0.0
      %2644 = vmatprep.subr.mxu0 0.0
      %2645 = vmatpush1.xpose.msra.mxu0 0.0
      %2646 = vmatprep.subr.mxu0 0.0
      %2647 = vmatpush1.xpose.msra.mxu0 0.0
      %2648 = vmatprep.subr.mxu0 0.0
      %2649 = vmatpush1.xpose.msra.mxu0 0.0
      %2650 = vmatprep.subr.mxu0 0.0
      %2651 = vmatpush1.xpose.msra.mxu0 0.0
      %2652 = vmatprep.subr.mxu0 0.0
      %2653 = vmatpush1.xpose.msra.mxu0 0.0
      %2654 = vmatprep.subr.mxu0 0.0
      %2655 = vmatpush1.xpose.msra.mxu0 0.0
      %2656 = vmatprep.subr.mxu0 0.0
      %2657 = vmatpush1.xpose.msra.mxu0 0.0
      %2658 = vmatprep.subr.mxu0 0.0
      %2659 = vmatpush1.xpose.msra.mxu0 0.0
      %2660 = vmatprep.subr.mxu0 0.0
      %2661 = vmatpush1.xpose.msra.mxu0 0.0
      %2662 = vmatprep.subr.mxu0 0.0
      %2663 = vmatpush1.xpose.msra.mxu0 0.0
      %2664 = vmatprep.subr.mxu0 0.0
      %2665 = vmatpush1.xpose.msra.mxu0 0.0
      %2666 = vmatprep.subr.mxu0 0.0
      %2667 = vmatpush1.xpose.msra.mxu0 0.0
      %2668 = vmatprep.mubr.f32.mxu0 0.0
      %2669 = vmatmul.mubr.f32.gmra.mrb[0].mxu0 %v2600
      %v2670 = vpop.f32.mrb[0].mxu0
      %v2671 = vadd.f32 0.0, %v2670
      %v2672 = vpop.f32.mrb[0].mxu0
      %2673 = vdwg.mxu0
      %2674 = vrot.lane.b32.xlu0 %v339, 104
      %v2675 = vpop.permute.xlu0 %2674
      %2676 = vrot.lane.b32.xlu0 %v339, 72
      %v2677 = vpop.permute.xlu0 %2676
      %v2678 = vsel %vm434, %v2675, 0
      %v2680 = vsel %vm434, %v2677, 0
      %2682 = vmatprep.subr.mxu0 0.0
      %2683 = vmatpush1.xpose.msra.mxu0 %v2680
      %2684 = vmatprep.subr.mxu0 0.0
      %2685 = vmatpush1.xpose.msra.mxu0 0.0
      %2686 = vmatprep.subr.mxu0 0.0
      %2687 = vmatpush1.xpose.msra.mxu0 0.0
      %2688 = vmatprep.subr.mxu0 0.0
      %2689 = vmatpush1.xpose.msra.mxu0 0.0
      %2690 = vmatprep.subr.mxu0 0.0
      %2691 = vmatpush1.xpose.msra.mxu0 0.0
      %2692 = vmatprep.subr.mxu0 0.0
      %2693 = vmatpush1.xpose.msra.mxu0 0.0
      %2694 = vmatprep.subr.mxu0 0.0
      %2695 = vmatpush1.xpose.msra.mxu0 0.0
      %2696 = vmatprep.subr.mxu0 0.0
      %2697 = vmatpush1.xpose.msra.mxu0 0.0
      %2698 = vmatprep.subr.mxu0 0.0
      %2699 = vmatpush1.xpose.msra.mxu0 0.0
      %2700 = vmatprep.subr.mxu0 0.0
      %2701 = vmatpush1.xpose.msra.mxu0 0.0
      %2702 = vmatprep.subr.mxu0 0.0
      %2703 = vmatpush1.xpose.msra.mxu0 0.0
      %2704 = vmatprep.subr.mxu0 0.0
      %2705 = vmatpush1.xpose.msra.mxu0 0.0
      %2706 = vmatprep.subr.mxu0 0.0
      %2707 = vmatpush1.xpose.msra.mxu0 0.0
      %2708 = vmatprep.subr.mxu0 0.0
      %2709 = vmatpush1.xpose.msra.mxu0 0.0
      %2710 = vmatprep.subr.mxu0 0.0
      %2711 = vmatpush1.xpose.msra.mxu0 0.0
      %2712 = vmatprep.subr.mxu0 0.0
      %2713 = vmatpush1.xpose.msra.mxu0 0.0
      %2714 = vmatprep.subr.mxu0 0.0
      %2715 = vmatpush1.xpose.msra.mxu0 0.0
      %2716 = vmatprep.subr.mxu0 0.0
      %2717 = vmatpush1.xpose.msra.mxu0 0.0
      %2718 = vmatprep.subr.mxu0 0.0
      %2719 = vmatpush1.xpose.msra.mxu0 0.0
      %2720 = vmatprep.subr.mxu0 0.0
      %2721 = vmatpush1.xpose.msra.mxu0 0.0
      %2722 = vmatprep.subr.mxu0 0.0
      %2723 = vmatpush1.xpose.msra.mxu0 0.0
      %2724 = vmatprep.subr.mxu0 0.0
      %2725 = vmatpush1.xpose.msra.mxu0 0.0
      %2726 = vmatprep.subr.mxu0 0.0
      %2727 = vmatpush1.xpose.msra.mxu0 0.0
      %2728 = vmatprep.subr.mxu0 0.0
      %2729 = vmatpush1.xpose.msra.mxu0 0.0
      %2730 = vmatprep.subr.mxu0 0.0
      %2731 = vmatpush1.xpose.msra.mxu0 0.0
      %2732 = vmatprep.subr.mxu0 0.0
      %2733 = vmatpush1.xpose.msra.mxu0 0.0
      %2734 = vmatprep.subr.mxu0 0.0
      %2735 = vmatpush1.xpose.msra.mxu0 0.0
      %2736 = vmatprep.subr.mxu0 0.0
      %2737 = vmatpush1.xpose.msra.mxu0 0.0
      %2738 = vmatprep.subr.mxu0 0.0
      %2739 = vmatpush1.xpose.msra.mxu0 0.0
      %2740 = vmatprep.subr.mxu0 0.0
      %2741 = vmatpush1.xpose.msra.mxu0 0.0
      %2742 = vmatprep.subr.mxu0 0.0
      %2743 = vmatpush1.xpose.msra.mxu0 0.0
      %2744 = vmatprep.subr.mxu0 0.0
      %2745 = vmatpush1.xpose.msra.mxu0 0.0
      %2746 = vmatprep.mubr.f32.mxu0 0.0
      %2747 = vmatmul.mubr.f32.gmra.mrb[0].mxu0 %v2678
      %v2748 = vpop.f32.mrb[0].mxu0
      %v2749 = vadd.f32 0.0, %v2748
      %v2750 = vpop.f32.mrb[0].mxu0
      %2751 = vdwg.mxu0
      %v2752 = vsel %vm434, %v2515, -inf
      %2753 = vmax.xlane.f32.xlu0 %v2752
      %v2754 = vpop.xlane.xlu0 %2753
      %v2755 = vsel %vm434, %v2593, -inf
      %2756 = vmax.xlane.f32.xlu0 %v2755
      %v2757 = vpop.xlane.xlu0 %2756
      %v2758 = vsel %vm434, %v2671, -inf
      %2759 = vmax.xlane.f32.xlu0 %v2758
      %v2760 = vpop.xlane.xlu0 %2759
      %v2761 = vsel %vm434, %v2749, -inf
      %2762 = vmax.xlane.f32.xlu0 %v2761
      %v2763 = vpop.xlane.xlu0 %2762
      %v2764 = vsub.f32 %v2515, %v2754
      %v2765 = vsub.f32 %v2593, %v2757
      %v2766 = vsub.f32 %v2671, %v2760
      %v2767 = vsub.f32 %v2749, %v2763
      %v2768 = vmul.f32 %v2764, 1.442695
      %v2769 = vpow.pop %v2768
      %v2770 = vmul.f32 %v2765, 1.442695
      %v2771 = vpow.pop %v2770
      %v2772 = vmul.f32 %v2766, 1.442695
      %v2773 = vpow.pop %v2772
      %v2774 = vmul.f32 %v2767, 1.442695
      %v2775 = vpow.pop %v2774
      %v2776 = vsel %vm434, %v2769, 0.0
      %2777 = vadd.xlane.f32.xlu0 %v2776
      %v2778 = vpop.xlane.xlu0 %2777
      %v2779 = vsel %vm434, %v2771, 0.0
      %2780 = vadd.xlane.f32.xlu0 %v2779
      %v2781 = vpop.xlane.xlu0 %2780
      %v2782 = vsel %vm434, %v2773, 0.0
      %2783 = vadd.xlane.f32.xlu0 %v2782
      %v2784 = vpop.xlane.xlu0 %2783
      %v2785 = vsel %vm434, %v2775, 0.0
      %2786 = vadd.xlane.f32.xlu0 %v2785
      %v2787 = vpop.xlane.xlu0 %2786
      %v2788 = vrcp.pop %v2778
      %v2789 = vrcp.pop %v2781
      %v2790 = vrcp.pop %v2784
      %v2791 = vrcp.pop %v2787
      %v2792 = vmul.f32 %v2778, %v2788
      %v2793 = vmul.f32 %v2781, %v2789
      %v2794 = vmul.f32 %v2784, %v2790
      %v2795 = vmul.f32 %v2787, %v2791
      %v2796 = vsub.f32 2.0, %v2792
      %v2797 = vsub.f32 2.0, %v2793
      %v2798 = vsub.f32 2.0, %v2794
      %v2799 = vsub.f32 2.0, %v2795
      %v2800 = vmul.f32 %v2788, %v2796
      %v2801 = vmul.f32 %v2789, %v2797
      %v2802 = vmul.f32 %v2790, %v2798
      %v2803 = vmul.f32 %v2791, %v2799
      %v2804 = vmul.f32 %v2769, %v2800
      %v2805 = vmul.f32 %v2771, %v2801
      %v2806 = vmul.f32 %v2773, %v2802
      %v2807 = vmul.f32 %v2775, %v2803
      %2808 = vrot.lane.b32.xlu0 %v413, 32
      %v2809 = vpop.permute.xlu0 %2808
      %v2812 = vsel %vm434, %v2804, 0
      %2814 = vmatprep.subr.mxu0 0.0
      %2815 = vmatpush1.msra.mxu0 %v2809
      %2816 = vmatprep.subr.mxu0 0.0
      %2817 = vmatpush1.msra.mxu0 0.0
      %2818 = vmatprep.subr.mxu0 0.0
      %2819 = vmatpush1.msra.mxu0 0.0
      %2820 = vmatprep.subr.mxu0 0.0
      %2821 = vmatpush1.msra.mxu0 0.0
      %2822 = vmatprep.subr.mxu0 0.0
      %2823 = vmatpush1.msra.mxu0 0.0
      %2824 = vmatprep.subr.mxu0 0.0
      %2825 = vmatpush1.msra.mxu0 0.0
      %2826 = vmatprep.subr.mxu0 0.0
      %2827 = vmatpush1.msra.mxu0 0.0
      %2828 = vmatprep.subr.mxu0 0.0
      %2829 = vmatpush1.msra.mxu0 0.0
      %2830 = vmatprep.subr.mxu0 0.0
      %2831 = vmatpush1.msra.mxu0 0.0
      %2832 = vmatprep.subr.mxu0 0.0
      %2833 = vmatpush1.msra.mxu0 0.0
      %2834 = vmatprep.subr.mxu0 0.0
      %2835 = vmatpush1.msra.mxu0 0.0
      %2836 = vmatprep.subr.mxu0 0.0
      %2837 = vmatpush1.msra.mxu0 0.0
      %2838 = vmatprep.subr.mxu0 0.0
      %2839 = vmatpush1.msra.mxu0 0.0
      %2840 = vmatprep.subr.mxu0 0.0
      %2841 = vmatpush1.msra.mxu0 0.0
      %2842 = vmatprep.subr.mxu0 0.0
      %2843 = vmatpush1.msra.mxu0 0.0
      %2844 = vmatprep.subr.mxu0 0.0
      %2845 = vmatpush1.msra.mxu0 0.0
      %2846 = vmatprep.subr.mxu0 0.0
      %2847 = vmatpush1.msra.mxu0 0.0
      %2848 = vmatprep.subr.mxu0 0.0
      %2849 = vmatpush1.msra.mxu0 0.0
      %2850 = vmatprep.subr.mxu0 0.0
      %2851 = vmatpush1.msra.mxu0 0.0
      %2852 = vmatprep.subr.mxu0 0.0
      %2853 = vmatpush1.msra.mxu0 0.0
      %2854 = vmatprep.subr.mxu0 0.0
      %2855 = vmatpush1.msra.mxu0 0.0
      %2856 = vmatprep.subr.mxu0 0.0
      %2857 = vmatpush1.msra.mxu0 0.0
      %2858 = vmatprep.subr.mxu0 0.0
      %2859 = vmatpush1.msra.mxu0 0.0
      %2860 = vmatprep.subr.mxu0 0.0
      %2861 = vmatpush1.msra.mxu0 0.0
      %2862 = vmatprep.subr.mxu0 0.0
      %2863 = vmatpush1.msra.mxu0 0.0
      %2864 = vmatprep.subr.mxu0 0.0
      %2865 = vmatpush1.msra.mxu0 0.0
      %2866 = vmatprep.subr.mxu0 0.0
      %2867 = vmatpush1.msra.mxu0 0.0
      %2868 = vmatprep.subr.mxu0 0.0
      %2869 = vmatpush1.msra.mxu0 0.0
      %2870 = vmatprep.subr.mxu0 0.0
      %2871 = vmatpush1.msra.mxu0 0.0
      %2872 = vmatprep.subr.mxu0 0.0
      %2873 = vmatpush1.msra.mxu0 0.0
      %2874 = vmatprep.subr.mxu0 0.0
      %2875 = vmatpush1.msra.mxu0 0.0
      %2876 = vmatprep.subr.mxu0 0.0
      %2877 = vmatpush1.msra.mxu0 0.0
      %2878 = vmatprep.mubr.f32.mxu0 0.0
      %2879 = vmatmul.mubr.f32.gmra.mrb[0].mxu0 %v2812
      %v2880 = vpop.f32.mrb[0].mxu0
      %v2881 = vadd.f32 0.0, %v2880
      %v2882 = vpop.f32.mrb[0].mxu0
      %2883 = vdwg.mxu0
      %2884 = vrot.lane.b32.xlu0 %v418, 32
      %v2885 = vpop.permute.xlu0 %2884
      %v2888 = vsel %vm434, %v2805, 0
      %2890 = vmatprep.subr.mxu0 0.0
      %2891 = vmatpush1.msra.mxu0 %v2885
      %2892 = vmatprep.subr.mxu0 0.0
      %2893 = vmatpush1.msra.mxu0 0.0
      %2894 = vmatprep.subr.mxu0 0.0
      %2895 = vmatpush1.msra.mxu0 0.0
      %2896 = vmatprep.subr.mxu0 0.0
      %2897 = vmatpush1.msra.mxu0 0.0
      %2898 = vmatprep.subr.mxu0 0.0
      %2899 = vmatpush1.msra.mxu0 0.0
      %2900 = vmatprep.subr.mxu0 0.0
      %2901 = vmatpush1.msra.mxu0 0.0
      %2902 = vmatprep.subr.mxu0 0.0
      %2903 = vmatpush1.msra.mxu0 0.0
      %2904 = vmatprep.subr.mxu0 0.0
      %2905 = vmatpush1.msra.mxu0 0.0
      %2906 = vmatprep.subr.mxu0 0.0
      %2907 = vmatpush1.msra.mxu0 0.0
      %2908 = vmatprep.subr.mxu0 0.0
      %2909 = vmatpush1.msra.mxu0 0.0
      %2910 = vmatprep.subr.mxu0 0.0
      %2911 = vmatpush1.msra.mxu0 0.0
      %2912 = vmatprep.subr.mxu0 0.0
      %2913 = vmatpush1.msra.mxu0 0.0
      %2914 = vmatprep.subr.mxu0 0.0
      %2915 = vmatpush1.msra.mxu0 0.0
      %2916 = vmatprep.subr.mxu0 0.0
      %2917 = vmatpush1.msra.mxu0 0.0
      %2918 = vmatprep.subr.mxu0 0.0
      %2919 = vmatpush1.msra.mxu0 0.0
      %2920 = vmatprep.subr.mxu0 0.0
      %2921 = vmatpush1.msra.mxu0 0.0
      %2922 = vmatprep.subr.mxu0 0.0
      %2923 = vmatpush1.msra.mxu0 0.0
      %2924 = vmatprep.subr.mxu0 0.0
      %2925 = vmatpush1.msra.mxu0 0.0
      %2926 = vmatprep.subr.mxu0 0.0
      %2927 = vmatpush1.msra.mxu0 0.0
      %2928 = vmatprep.subr.mxu0 0.0
      %2929 = vmatpush1.msra.mxu0 0.0
      %2930 = vmatprep.subr.mxu0 0.0
      %2931 = vmatpush1.msra.mxu0 0.0
      %2932 = vmatprep.subr.mxu0 0.0
      %2933 = vmatpush1.msra.mxu0 0.0
      %2934 = vmatprep.subr.mxu0 0.0
      %2935 = vmatpush1.msra.mxu0 0.0
      %2936 = vmatprep.subr.mxu0 0.0
      %2937 = vmatpush1.msra.mxu0 0.0
      %2938 = vmatprep.subr.mxu0 0.0
      %2939 = vmatpush1.msra.mxu0 0.0
      %2940 = vmatprep.subr.mxu0 0.0
      %2941 = vmatpush1.msra.mxu0 0.0
      %2942 = vmatprep.subr.mxu0 0.0
      %2943 = vmatpush1.msra.mxu0 0.0
      %2944 = vmatprep.subr.mxu0 0.0
      %2945 = vmatpush1.msra.mxu0 0.0
      %2946 = vmatprep.subr.mxu0 0.0
      %2947 = vmatpush1.msra.mxu0 0.0
      %2948 = vmatprep.subr.mxu0 0.0
      %2949 = vmatpush1.msra.mxu0 0.0
      %2950 = vmatprep.subr.mxu0 0.0
      %2951 = vmatpush1.msra.mxu0 0.0
      %2952 = vmatprep.subr.mxu0 0.0
      %2953 = vmatpush1.msra.mxu0 0.0
      %2954 = vmatprep.mubr.f32.mxu0 0.0
      %2955 = vmatmul.mubr.f32.gmra.mrb[0].mxu0 %v2888
      %v2956 = vpop.f32.mrb[0].mxu0
      %v2957 = vadd.f32 0.0, %v2956
      %v2958 = vpop.f32.mrb[0].mxu0
      %2959 = vdwg.mxu0
      %2960 = vrot.lane.b32.xlu0 %v423, 32
      %v2961 = vpop.permute.xlu0 %2960
      %v2964 = vsel %vm434, %v2806, 0
      %2966 = vmatprep.subr.mxu0 0.0
      %2967 = vmatpush1.msra.mxu0 %v2961
      %2968 = vmatprep.subr.mxu0 0.0
      %2969 = vmatpush1.msra.mxu0 0.0
      %2970 = vmatprep.subr.mxu0 0.0
      %2971 = vmatpush1.msra.mxu0 0.0
      %2972 = vmatprep.subr.mxu0 0.0
      %2973 = vmatpush1.msra.mxu0 0.0
      %2974 = vmatprep.subr.mxu0 0.0
      %2975 = vmatpush1.msra.mxu0 0.0
      %2976 = vmatprep.subr.mxu0 0.0
      %2977 = vmatpush1.msra.mxu0 0.0
      %2978 = vmatprep.subr.mxu0 0.0
      %2979 = vmatpush1.msra.mxu0 0.0
      %2980 = vmatprep.subr.mxu0 0.0
      %2981 = vmatpush1.msra.mxu0 0.0
      %2982 = vmatprep.subr.mxu0 0.0
      %2983 = vmatpush1.msra.mxu0 0.0
      %2984 = vmatprep.subr.mxu0 0.0
      %2985 = vmatpush1.msra.mxu0 0.0
      %2986 = vmatprep.subr.mxu0 0.0
      %2987 = vmatpush1.msra.mxu0 0.0
      %2988 = vmatprep.subr.mxu0 0.0
      %2989 = vmatpush1.msra.mxu0 0.0
      %2990 = vmatprep.subr.mxu0 0.0
      %2991 = vmatpush1.msra.mxu0 0.0
      %2992 = vmatprep.subr.mxu0 0.0
      %2993 = vmatpush1.msra.mxu0 0.0
      %2994 = vmatprep.subr.mxu0 0.0
      %2995 = vmatpush1.msra.mxu0 0.0
      %2996 = vmatprep.subr.mxu0 0.0
      %2997 = vmatpush1.msra.mxu0 0.0
      %2998 = vmatprep.subr.mxu0 0.0
      %2999 = vmatpush1.msra.mxu0 0.0
      %3000 = vmatprep.subr.mxu0 0.0
      %3001 = vmatpush1.msra.mxu0 0.0
      %3002 = vmatprep.subr.mxu0 0.0
      %3003 = vmatpush1.msra.mxu0 0.0
      %3004 = vmatprep.subr.mxu0 0.0
      %3005 = vmatpush1.msra.mxu0 0.0
      %3006 = vmatprep.subr.mxu0 0.0
      %3007 = vmatpush1.msra.mxu0 0.0
      %3008 = vmatprep.subr.mxu0 0.0
      %3009 = vmatpush1.msra.mxu0 0.0
      %3010 = vmatprep.subr.mxu0 0.0
      %3011 = vmatpush1.msra.mxu0 0.0
      %3012 = vmatprep.subr.mxu0 0.0
      %3013 = vmatpush1.msra.mxu0 0.0
      %3014 = vmatprep.subr.mxu0 0.0
      %3015 = vmatpush1.msra.mxu0 0.0
      %3016 = vmatprep.subr.mxu0 0.0
      %3017 = vmatpush1.msra.mxu0 0.0
      %3018 = vmatprep.subr.mxu0 0.0
      %3019 = vmatpush1.msra.mxu0 0.0
      %3020 = vmatprep.subr.mxu0 0.0
      %3021 = vmatpush1.msra.mxu0 0.0
      %3022 = vmatprep.subr.mxu0 0.0
      %3023 = vmatpush1.msra.mxu0 0.0
      %3024 = vmatprep.subr.mxu0 0.0
      %3025 = vmatpush1.msra.mxu0 0.0
      %3026 = vmatprep.subr.mxu0 0.0
      %3027 = vmatpush1.msra.mxu0 0.0
      %3028 = vmatprep.subr.mxu0 0.0
      %3029 = vmatpush1.msra.mxu0 0.0
      %3030 = vmatprep.mubr.f32.mxu0 0.0
      %3031 = vmatmul.mubr.f32.gmra.mrb[0].mxu0 %v2964
      %v3032 = vpop.f32.mrb[0].mxu0
      %v3033 = vadd.f32 0.0, %v3032
      %v3034 = vpop.f32.mrb[0].mxu0
      %3035 = vdwg.mxu0
      %3036 = vrot.lane.b32.xlu0 %v428, 32
      %v3037 = vpop.permute.xlu0 %3036
      %v3040 = vsel %vm434, %v2807, 0
      %3042 = vmatprep.subr.mxu0 0.0
      %3043 = vmatpush1.msra.mxu0 %v3037
      %3044 = vmatprep.subr.mxu0 0.0
      %3045 = vmatpush1.msra.mxu0 0.0
      %3046 = vmatprep.subr.mxu0 0.0
      %3047 = vmatpush1.msra.mxu0 0.0
      %3048 = vmatprep.subr.mxu0 0.0
      %3049 = vmatpush1.msra.mxu0 0.0
      %3050 = vmatprep.subr.mxu0 0.0
      %3051 = vmatpush1.msra.mxu0 0.0
      %3052 = vmatprep.subr.mxu0 0.0
      %3053 = vmatpush1.msra.mxu0 0.0
      %3054 = vmatprep.subr.mxu0 0.0
      %3055 = vmatpush1.msra.mxu0 0.0
      %3056 = vmatprep.subr.mxu0 0.0
      %3057 = vmatpush1.msra.mxu0 0.0
      %3058 = vmatprep.subr.mxu0 0.0
      %3059 = vmatpush1.msra.mxu0 0.0
      %3060 = vmatprep.subr.mxu0 0.0
      %3061 = vmatpush1.msra.mxu0 0.0
      %3062 = vmatprep.subr.mxu0 0.0
      %3063 = vmatpush1.msra.mxu0 0.0
      %3064 = vmatprep.subr.mxu0 0.0
      %3065 = vmatpush1.msra.mxu0 0.0
      %3066 = vmatprep.subr.mxu0 0.0
      %3067 = vmatpush1.msra.mxu0 0.0
      %3068 = vmatprep.subr.mxu0 0.0
      %3069 = vmatpush1.msra.mxu0 0.0
      %3070 = vmatprep.subr.mxu0 0.0
      %3071 = vmatpush1.msra.mxu0 0.0
      %3072 = vmatprep.subr.mxu0 0.0
      %3073 = vmatpush1.msra.mxu0 0.0
      %3074 = vmatprep.subr.mxu0 0.0
      %3075 = vmatpush1.msra.mxu0 0.0
      %3076 = vmatprep.subr.mxu0 0.0
      %3077 = vmatpush1.msra.mxu0 0.0
      %3078 = vmatprep.subr.mxu0 0.0
      %3079 = vmatpush1.msra.mxu0 0.0
      %3080 = vmatprep.subr.mxu0 0.0
      %3081 = vmatpush1.msra.mxu0 0.0
      %3082 = vmatprep.subr.mxu0 0.0
      %3083 = vmatpush1.msra.mxu0 0.0
      %3084 = vmatprep.subr.mxu0 0.0
      %3085 = vmatpush1.msra.mxu0 0.0
      %3086 = vmatprep.subr.mxu0 0.0
      %3087 = vmatpush1.msra.mxu0 0.0
      %3088 = vmatprep.subr.mxu0 0.0
      %3089 = vmatpush1.msra.mxu0 0.0
      %3090 = vmatprep.subr.mxu0 0.0
      %3091 = vmatpush1.msra.mxu0 0.0
      %3092 = vmatprep.subr.mxu0 0.0
      %3093 = vmatpush1.msra.mxu0 0.0
      %3094 = vmatprep.subr.mxu0 0.0
      %3095 = vmatpush1.msra.mxu0 0.0
      %3096 = vmatprep.subr.mxu0 0.0
      %3097 = vmatpush1.msra.mxu0 0.0
      %3098 = vmatprep.subr.mxu0 0.0
      %3099 = vmatpush1.msra.mxu0 0.0
      %3100 = vmatprep.subr.mxu0 0.0
      %3101 = vmatpush1.msra.mxu0 0.0
      %3102 = vmatprep.subr.mxu0 0.0
      %3103 = vmatpush1.msra.mxu0 0.0
      %3104 = vmatprep.subr.mxu0 0.0
      %3105 = vmatpush1.msra.mxu0 0.0
      %3106 = vmatprep.mubr.f32.mxu0 0.0
      %3107 = vmatmul.mubr.f32.gmra.mrb[0].mxu0 %v3040
      %v3108 = vpop.f32.mrb[0].mxu0
      %v3109 = vadd.f32 0.0, %v3108
      %v3110 = vpop.f32.mrb[0].mxu0
      %3111 = vdwg.mxu0
      %v3112 = vadd.f32 %v2436, %v2881
      %v3113 = vadd.f32 %v2437, %v2957
      %v3114 = vadd.f32 %v2438, %v3033
      %v3115 = vadd.f32 %v2439, %v3109
      %v3116 = vld [vmem:[%s4] sm:$0x1]
      %v3118 = vlaneseq
      %v3119 = vshrl.u32 %v3118, 7
      %v3120 = vsub.s32 0, %v3119
      %v3121 = vrot.slane %v3116, %v3120
      %v3123 = vadd.f32 %v3112, %v3121
      %v3124 = vadd.f32 %v3113, %v3121
      %v3125 = vadd.f32 %v3114, %v3121
      %v3126 = vadd.f32 %v3115, %v3121
      %vm3127 = vcmask 261120
      %3128 = vst.msk [vmem:[%s226] sm:$0xff] %vm3127, %v3123
      %3129 = vst.msk [vmem:[%s226 + $0x8] sm:$0xff] %vm3127, %v3124
      %3130 = vst.msk [vmem:[%s226 + $0x10] sm:$0xff] %vm3127, %v3125
      %3131 = vst.msk [vmem:[%s226 + $0x18] sm:$0xff] %vm3127, %v3126
      %s3132 = smul.u32 4, %s16
      %p3133 = scmp.lt.s32.totalorder %s3132, 7
      %s3134 = scalar_select %p3133, %s3132, 7
      %s3135 = smul.addr %s3134, 8
      %s3136 = scalar_lea.vmem %s5, %s3135
      // Predicated region
      $region41: #{tpu_custom_call.1} parent=39 // pred_check
        %p3137 = pneg %p144
      $region42: #{tpu_custom_call.1} parent=39 // pred_check_branch
        %3139 = sbr.rel (%p3137) target = $region44
      $region43: #{tpu_custom_call.1} parent=39 // pred_region
        %s3140 = smul.u32 4, %s16
      $region44: #{tpu_custom_call.1} parent=39 // pred_fallthru
        _
    $region40: #{tpu_custom_call.1} parent=5 // pred_fallthru
      _
    %p3141 = scmp.le.s32.totalorder 2, %s11
    // Predicated region
    $region45: #{tpu_custom_call.1} parent=5 // pred_check
      %p3142 = pneg %p3141
    $region46: #{tpu_custom_call.1} parent=5 // pred_check_branch
      %3144 = sbr.rel (%p3142) target = $region48
    $region47: #{tpu_custom_call.1} parent=5 // pred_region
      %s3145 = ssub.s32 %s11, 2
      // Predicated region
      $region49: #{tpu_custom_call.1} parent=47 // pred_check
        %p3146 = pneg %p150
      $region50: #{tpu_custom_call.1} parent=47 // pred_check_branch
        %3148 = sbr.rel (%p3146) target = $region52
      $region51: #{tpu_custom_call.1} parent=47 // pred_region
        %s3149 = smul.u32 4, %s17
        %p3150 = scmp.lt.s32.totalorder %s3149, 7
        %s3151 = scalar_select %p3150, %s3149, 7
        %s3152 = smul.addr %s3151, 8
        %s3153 = scalar_lea.vmem %s5, %s3152
      $region52: #{tpu_custom_call.1} parent=47 // pred_fallthru
        _
    $region48: #{tpu_custom_call.1} parent=5 // pred_fallthru
      _
  $region6: #{tpu_custom_call.1} parent=0 // loop_footer
    %s15 = sadd.s32 1, %s11
  $region7: #{tpu_custom_call.1} parent=0 // loop_footer_branch
    %10 = sbr.rel target = $region3
  $region8: #{tpu_custom_call.1} parent=0 // loop_exit
    _

</llo_original>
